<compile_context>
chip_gen: v5e
topology: v5e:2x2
jax: 0.10.0
libtpu: 0.0.40
codegen_flags: <defaults>
</compile_context>

<pallas_src>
import functools

import jax
import jax.numpy as jnp
from jax import lax
from jax.experimental import pallas as pl
from jax.experimental.pallas import tpu as pltpu


def _soft_proposal_kernel(feat_ref, dist_ref, out_ref,
                          e_scr, m_scr, done_scr, *, max_iter, err_th):
    B, Kp, P = feat_ref.shape
    dist = dist_ref[...]                                   # (P, P) Gaussian prior

    # ---- Phase 1: E[b] = D[b]^T (column-normalized pairwise distances) -----
    # B is tiny (=2) so the Python unroll is fine; switch to lax.fori_loop over
    # b (refs support dynamic first-axis indexing) once B grows.
    for b in range(B):
        f = feat_ref[b]                                    # (Kp, P), channels-major
        # gram[i,j] = <f_i, f_j>: one MXU pass, contraction = Kp.
        gram = lax.dot_general(f, f, (((0,), (0,)), ((), ())),
                               preferred_element_type=jnp.float32)
        sq_row = jnp.sum(f * f, axis=0, keepdims=True)     # (1, P): ||f_j||^2
        # d2[i,j] = ||f_i||^2 + ||f_j||^2 - 2<f_i,f_j>, built without any
        # (P,1) column operand: symmetrize with one (P,P) XLU transpose.
        half = sq_row - gram                               # (P, P)
        d2 = jnp.maximum(half + half.T, 0.0)               # clamp Gram cancellation
        # NOTE: Gram-form distances lose precision for near-identical pixels
        # vs torch's direct ||x - y||; acceptable at f32 feature scales here.
        e_scr[b] = jnp.sqrt(d2) * dist                     # D_ written straight to scratch
        s_col = jnp.sum(e_scr[b], axis=0, keepdims=True)   # (1, P) column sums (XLU)
        # Exact reciprocal (approx could shift the err_th break decision);
        # guard the degenerate all-zero column (torch would 0/0 -> NaN there).
        inv = jnp.where(s_col > 0.0, 1.0 / s_col, jnp.zeros_like(s_col))
        e_scr[b] = e_scr[b] * inv                          # E = D^T, normalized in place

    # ---- Phase 2: power iteration with torch's global-mean early break -----
    m_scr[...] = jnp.full(m_scr.shape, 1.0 / float(P), dtype=jnp.float32)
    done_scr[0] = jnp.int32(0)
    inv_bp = 1.0 / float(B * P)

    def iter_body(i, carry):
        @pl.when(done_scr[0] == 0)                         # converged -> skip all work
        def _():
            total = jnp.zeros((), dtype=jnp.float32)
            for b in range(B):
                m_old = m_scr[b]                           # (1, P) row form of M
                # row form of D @ M:  m_new = m_old @ D^T
                m_new = jnp.dot(m_old, e_scr[b],
                                preferred_element_type=jnp.float32)
                m_scr[b] = m_new
                total = total + jnp.sum(jnp.abs(m_new - m_old))
            # torch: break right after the M update when mean|M - last_M| < err_th.
            done_scr[0] = (total * inv_bp < err_th).astype(jnp.int32)
        return carry

    lax.fori_loop(0, max_iter, iter_body, 0)

    # ---- out = M.view(B, 1, N, N) * feature  (broadcast over channels) -----
    for b in range(B):
        out_ref[b] = feat_ref[b] * m_scr[b]                # (Kp, P) * (1, P)


def make_dist(N):
    """SoftProposal.init_dist: Gaussian over pairwise grid distances."""
    ep2 = (0.15 * N) ** 2
    idx = jnp.arange(N)
    xx, yy = jnp.meshgrid(idx, idx, indexing="ij")
    grid = jnp.stack((xx, yy), axis=0).reshape(2, -1)          # (2, P)
    d = grid[:, :, None] - grid[:, None, :]                    # (2, P, P)
    return jnp.exp(-jnp.sum(d * d, axis=0).astype(jnp.float32) / (2.0 * ep2))


def _vmem_limit_bytes():
    """85% of this generation's physical VMEM (fallback: v7x's 64 MiB)."""
    cap = 64 * 2**20
    try:
        cap = int(pltpu.get_tpu_info().vmem_capacity_bytes)
    except Exception:
        pass
    return int(0.85 * cap)


@functools.partial(jax.jit, static_argnames=("max_iter", "err_th"))
def soft_proposal(feature, dist, *, max_iter, err_th):
    B, K, N, _ = feature.shape
    P = N * N
    feat = feature.reshape(B, K, P).astype(jnp.float32)
    dist = dist.astype(jnp.float32)

    # Pad channels to a multiple of 8 (sublane tile); zero rows are inert in the
    # Gram matmul / squared norms and get sliced off the output.
    Kp = max(8, -(-K // 8) * 8)
    if Kp != K:
        feat = jnp.pad(feat, ((0, 0), (0, Kp - K), (0, 0)))

    kernel = functools.partial(_soft_proposal_kernel,
                               max_iter=max_iter, err_th=err_th)

    # Resident footprint (single-buffered, f32):
    #   e_scr B*P^2 + dist P^2 + feat/out 2*B*Kp*P + m_scr B*P, plus a few
    #   (P,P) compiler temporaries for the phase-1 build (~2 MiB at B=2,P=256).
    # The scoped-VMEM cap is taken from the chip, not a magic constant, so the
    # kernel keeps using physical VMEM as P grows on v5e/v6e/v7x alike.
    out = pl.pallas_call(
        kernel,
        out_shape=jax.ShapeDtypeStruct((B, Kp, P), jnp.float32),
        # No grid / BlockSpecs: single invocation, whole operands land in VMEM
        # exactly once (no pointless double-buffering for a 1-step "pipeline").
        scratch_shapes=[
            pltpu.VMEM((B, P, P), jnp.float32),   # E = D^T per batch
            pltpu.VMEM((B, 1, P), jnp.float32),   # current M (row form)
            pltpu.SMEM((1,), jnp.int32),          # converged flag
        ],
        compiler_params=pltpu.CompilerParams(
            vmem_limit_bytes=_vmem_limit_bytes(),
        ),
    )(feat, dist)
    return out[:, :K].reshape(B, K, N, N)


if __name__ == "__main__":
    B, K, N = 2, 4, 16          # feature: B * K * N * N
    max_iter, err_th = 20, 1e-4
    key = jax.random.PRNGKey(0)
    feature = jax.random.normal(key, (B, K, N, N), dtype=jnp.float32)
    dist = make_dist(N)         # deterministic "parameter" from __init__
    out = soft_proposal(feature, dist, max_iter=max_iter, err_th=err_th)
    out = jax.block_until_ready(out)
    assert out.shape == (B, K, N, N)
    assert bool(jnp.all(jnp.isfinite(out)))
    print("KERNEL_OK")
</pallas_src>

<mosaic_0001>
module attributes {stable_mosaic.version = 11 : i64} {
  func.func @_soft_proposal_kernel(%arg0: memref<2x8x256xf32, #tpu.memory_space<vmem>>, %arg1: memref<256x256xf32, #tpu.memory_space<vmem>>, %arg2: memref<2x8x256xf32, #tpu.memory_space<vmem>>, %arg3: memref<2x256x256xf32, #tpu.memory_space<vmem>>, %arg4: memref<2x1x256xf32, #tpu.memory_space<vmem>>, %arg5: memref<1xi32, #tpu.memory_space<smem>>) attributes {dimension_semantics = [], scalar_prefetch = 0 : i64, scratch_operands = 3 : i64, tpu.core_type = #tpu.core_type<tc>} {
    %c0 = arith.constant 0 : index
    %c0_0 = arith.constant 0 : index
    %0 = vector.load %arg1[%c0, %c0_0] : memref<256x256xf32, #tpu.memory_space<vmem>>, vector<256x256xf32>
    %c0_1 = arith.constant 0 : index
    %c0_2 = arith.constant 0 : index
    %c0_3 = arith.constant 0 : index
    %1 = vector.load %arg0[%c0_1, %c0_2, %c0_3] : memref<2x8x256xf32, #tpu.memory_space<vmem>>, vector<1x8x256xf32>
    %2 = vector.shape_cast %1 : vector<1x8x256xf32> to vector<8x256xf32>
    %cst = arith.constant dense<0.000000e+00> : vector<256x256xf32>
    %3 = tpu.matmul %2, %2, %cst {dimension_numbers = #tpu.dot_dimension_numbers<[0], [0], [1], [1], [0, 1, 1, 1], [], []>} : vector<8x256xf32>, vector<8x256xf32>, vector<256x256xf32> -> vector<256x256xf32>
    %4 = arith.mulf %2, %2 : vector<8x256xf32>
    %cst_4 = arith.constant dense<0.000000e+00> : vector<256xf32>
    %5 = vector.multi_reduction <add>, %4, %cst_4 [0] : vector<8x256xf32> to vector<256xf32>
    %6 = vector.shape_cast %5 : vector<256xf32> to vector<1x256xf32>
    %7 = vector.broadcast %6 : vector<1x256xf32> to vector<256x256xf32>
    %8 = arith.subf %7, %3 : vector<256x256xf32>
    %9 = tpu.transpose %8, [1, 0] : vector<256x256xf32> -> vector<256x256xf32>
    %10 = arith.addf %8, %9 : vector<256x256xf32>
    %cst_5 = arith.constant 0.000000e+00 : f32
    %11 = vector.broadcast %cst_5 : f32 to vector<256x256xf32>
    %12 = arith.maximumf %10, %11 : vector<256x256xf32>
    %13 = math.sqrt %12 : vector<256x256xf32>
    %14 = arith.mulf %13, %0 : vector<256x256xf32>
    %c0_6 = arith.constant 0 : index
    %c0_7 = arith.constant 0 : index
    %c0_8 = arith.constant 0 : index
    %15 = vector.load %arg3[%c0_6, %c0_7, %c0_8] : memref<2x256x256xf32, #tpu.memory_space<vmem>>, vector<1x256x256xf32>
    %16 = vector.shape_cast %15 : vector<1x256x256xf32> to vector<256x256xf32>
    %17 = vector.shape_cast %14 : vector<256x256xf32> to vector<1x256x256xf32>
    tpu.vector_store %arg3[%c0_6, %c0_7, %c0_8], %17 {strides = array<i32>} : memref<2x256x256xf32, #tpu.memory_space<vmem>>, vector<1x256x256xf32>,
    %c0_9 = arith.constant 0 : index
    %c0_10 = arith.constant 0 : index
    %c0_11 = arith.constant 0 : index
    %18 = vector.load %arg3[%c0_9, %c0_10, %c0_11] : memref<2x256x256xf32, #tpu.memory_space<vmem>>, vector<1x256x256xf32>
    %19 = vector.shape_cast %18 : vector<1x256x256xf32> to vector<256x256xf32>
    %cst_12 = arith.constant dense<0.000000e+00> : vector<256xf32>
    %20 = vector.multi_reduction <add>, %19, %cst_12 [0] : vector<256x256xf32> to vector<256xf32>
    %21 = vector.shape_cast %20 : vector<256xf32> to vector<1x256xf32>
    %cst_13 = arith.constant 0.000000e+00 : f32
    %22 = vector.broadcast %cst_13 : f32 to vector<1x256xf32>
    %23 = arith.cmpf ogt, %21, %22 : vector<1x256xf32>
    %cst_14 = arith.constant 1.000000e+00 : f32
    %24 = vector.broadcast %cst_14 : f32 to vector<1x256xf32>
    %25 = arith.divf %24, %21 : vector<1x256xf32>
    %cst_15 = arith.constant 0.000000e+00 : f32
    %26 = vector.broadcast %cst_15 : f32 to vector<1x256xf32>
    %27 = arith.select %23, %25, %26 : vector<1x256xi1>, vector<1x256xf32>
    %c0_16 = arith.constant 0 : index
    %c0_17 = arith.constant 0 : index
    %c0_18 = arith.constant 0 : index
    %28 = vector.load %arg3[%c0_16, %c0_17, %c0_18] : memref<2x256x256xf32, #tpu.memory_space<vmem>>, vector<1x256x256xf32>
    %29 = vector.shape_cast %28 : vector<1x256x256xf32> to vector<256x256xf32>
    %30 = vector.broadcast %27 : vector<1x256xf32> to vector<256x256xf32>
    %31 = arith.mulf %29, %30 : vector<256x256xf32>
    %c0_19 = arith.constant 0 : index
    %c0_20 = arith.constant 0 : index
    %c0_21 = arith.constant 0 : index
    %32 = vector.load %arg3[%c0_19, %c0_20, %c0_21] : memref<2x256x256xf32, #tpu.memory_space<vmem>>, vector<1x256x256xf32>
    %33 = vector.shape_cast %32 : vector<1x256x256xf32> to vector<256x256xf32>
    %34 = vector.shape_cast %31 : vector<256x256xf32> to vector<1x256x256xf32>
    tpu.vector_store %arg3[%c0_19, %c0_20, %c0_21], %34 {strides = array<i32>} : memref<2x256x256xf32, #tpu.memory_space<vmem>>, vector<1x256x256xf32>,
    %c1 = arith.constant 1 : index
    %c0_22 = arith.constant 0 : index
    %c0_23 = arith.constant 0 : index
    %35 = vector.load %arg0[%c1, %c0_22, %c0_23] : memref<2x8x256xf32, #tpu.memory_space<vmem>>, vector<1x8x256xf32>
    %36 = vector.shape_cast %35 : vector<1x8x256xf32> to vector<8x256xf32>
    %cst_24 = arith.constant dense<0.000000e+00> : vector<256x256xf32>
    %37 = tpu.matmul %36, %36, %cst_24 {dimension_numbers = #tpu.dot_dimension_numbers<[0], [0], [1], [1], [0, 1, 1, 1], [], []>} : vector<8x256xf32>, vector<8x256xf32>, vector<256x256xf32> -> vector<256x256xf32>
    %38 = arith.mulf %36, %36 : vector<8x256xf32>
    %cst_25 = arith.constant dense<0.000000e+00> : vector<256xf32>
    %39 = vector.multi_reduction <add>, %38, %cst_25 [0] : vector<8x256xf32> to vector<256xf32>
    %40 = vector.shape_cast %39 : vector<256xf32> to vector<1x256xf32>
    %41 = vector.broadcast %40 : vector<1x256xf32> to vector<256x256xf32>
    %42 = arith.subf %41, %37 : vector<256x256xf32>
    %43 = tpu.transpose %42, [1, 0] : vector<256x256xf32> -> vector<256x256xf32>
    %44 = arith.addf %42, %43 : vector<256x256xf32>
    %cst_26 = arith.constant 0.000000e+00 : f32
    %45 = vector.broadcast %cst_26 : f32 to vector<256x256xf32>
    %46 = arith.maximumf %44, %45 : vector<256x256xf32>
    %47 = math.sqrt %46 : vector<256x256xf32>
    %48 = arith.mulf %47, %0 : vector<256x256xf32>
    %c1_27 = arith.constant 1 : index
    %c0_28 = arith.constant 0 : index
    %c0_29 = arith.constant 0 : index
    %49 = vector.load %arg3[%c1_27, %c0_28, %c0_29] : memref<2x256x256xf32, #tpu.memory_space<vmem>>, vector<1x256x256xf32>
    %50 = vector.shape_cast %49 : vector<1x256x256xf32> to vector<256x256xf32>
    %51 = vector.shape_cast %48 : vector<256x256xf32> to vector<1x256x256xf32>
    tpu.vector_store %arg3[%c1_27, %c0_28, %c0_29], %51 {strides = array<i32>} : memref<2x256x256xf32, #tpu.memory_space<vmem>>, vector<1x256x256xf32>,
    %c1_30 = arith.constant 1 : index
    %c0_31 = arith.constant 0 : index
    %c0_32 = arith.constant 0 : index
    %52 = vector.load %arg3[%c1_30, %c0_31, %c0_32] : memref<2x256x256xf32, #tpu.memory_space<vmem>>, vector<1x256x256xf32>
    %53 = vector.shape_cast %52 : vector<1x256x256xf32> to vector<256x256xf32>
    %cst_33 = arith.constant dense<0.000000e+00> : vector<256xf32>
    %54 = vector.multi_reduction <add>, %53, %cst_33 [0] : vector<256x256xf32> to vector<256xf32>
    %55 = vector.shape_cast %54 : vector<256xf32> to vector<1x256xf32>
    %cst_34 = arith.constant 0.000000e+00 : f32
    %56 = vector.broadcast %cst_34 : f32 to vector<1x256xf32>
    %57 = arith.cmpf ogt, %55, %56 : vector<1x256xf32>
    %cst_35 = arith.constant 1.000000e+00 : f32
    %58 = vector.broadcast %cst_35 : f32 to vector<1x256xf32>
    %59 = arith.divf %58, %55 : vector<1x256xf32>
    %cst_36 = arith.constant 0.000000e+00 : f32
    %60 = vector.broadcast %cst_36 : f32 to vector<1x256xf32>
    %61 = arith.select %57, %59, %60 : vector<1x256xi1>, vector<1x256xf32>
    %c1_37 = arith.constant 1 : index
    %c0_38 = arith.constant 0 : index
    %c0_39 = arith.constant 0 : index
    %62 = vector.load %arg3[%c1_37, %c0_38, %c0_39] : memref<2x256x256xf32, #tpu.memory_space<vmem>>, vector<1x256x256xf32>
    %63 = vector.shape_cast %62 : vector<1x256x256xf32> to vector<256x256xf32>
    %64 = vector.broadcast %61 : vector<1x256xf32> to vector<256x256xf32>
    %65 = arith.mulf %63, %64 : vector<256x256xf32>
    %c1_40 = arith.constant 1 : index
    %c0_41 = arith.constant 0 : index
    %c0_42 = arith.constant 0 : index
    %66 = vector.load %arg3[%c1_40, %c0_41, %c0_42] : memref<2x256x256xf32, #tpu.memory_space<vmem>>, vector<1x256x256xf32>
    %67 = vector.shape_cast %66 : vector<1x256x256xf32> to vector<256x256xf32>
    %68 = vector.shape_cast %65 : vector<256x256xf32> to vector<1x256x256xf32>
    tpu.vector_store %arg3[%c1_40, %c0_41, %c0_42], %68 {strides = array<i32>} : memref<2x256x256xf32, #tpu.memory_space<vmem>>, vector<1x256x256xf32>,
    %cst_43 = arith.constant 3.906250e-03 : f32
    %69 = vector.broadcast %cst_43 : f32 to vector<2x1x256xf32>
    %c0_44 = arith.constant 0 : index
    %c0_45 = arith.constant 0 : index
    %c0_46 = arith.constant 0 : index
    %70 = vector.load %arg4[%c0_44, %c0_45, %c0_46] : memref<2x1x256xf32, #tpu.memory_space<vmem>>, vector<2x1x256xf32>
    tpu.vector_store %arg4[%c0_44, %c0_45, %c0_46], %69 {strides = array<i32>} : memref<2x1x256xf32, #tpu.memory_space<vmem>>, vector<2x1x256xf32>,
    %c0_i32 = arith.constant 0 : i32
    %c0_47 = arith.constant 0 : index
    %71 = memref.load %arg5[%c0_47] : memref<1xi32, #tpu.memory_space<smem>>
    memref.store %c0_i32, %arg5[%c0_47] : memref<1xi32, #tpu.memory_space<smem>>
    %c0_i32_48 = arith.constant 0 : i32
    %c20_i32 = arith.constant 20 : i32
    %72 = arith.addi %c0_i32_48, %c20_i32 : i32
    %c1_i32 = arith.constant 1 : i32
    scf.for %arg6 = %c0_i32_48 to %72 step %c1_i32  : i32 {
      %c0_67 = arith.constant 0 : index
      %91 = memref.load %arg5[%c0_67] : memref<1xi32, #tpu.memory_space<smem>>
      %c0_i32_68 = arith.constant 0 : i32
      %92 = arith.cmpi eq, %91, %c0_i32_68 : i32
      %93 = arith.extui %92 : i1 to i32
      %c0_i32_69 = arith.constant 0 : i32
      %94 = arith.cmpi ne, %93, %c0_i32_69 : i32
      scf.if %94 {
        %c0_70 = arith.constant 0 : index
        %c0_71 = arith.constant 0 : index
        %c0_72 = arith.constant 0 : index
        %95 = vector.load %arg4[%c0_70, %c0_71, %c0_72] : memref<2x1x256xf32, #tpu.memory_space<vmem>>, vector<1x1x256xf32>
        %96 = vector.shape_cast %95 : vector<1x1x256xf32> to vector<1x256xf32>
        %c0_73 = arith.constant 0 : index
        %c0_74 = arith.constant 0 : index
        %c0_75 = arith.constant 0 : index
        %97 = vector.load %arg3[%c0_73, %c0_74, %c0_75] : memref<2x256x256xf32, #tpu.memory_space<vmem>>, vector<1x256x256xf32>
        %98 = vector.shape_cast %97 : vector<1x256x256xf32> to vector<256x256xf32>
        %cst_76 = arith.constant dense<0.000000e+00> : vector<1x256xf32>
        %99 = tpu.matmul %96, %98, %cst_76 {dimension_numbers = #tpu.dot_dimension_numbers<[1], [0], [0], [1], [0, 0, 1, 1], [], []>} : vector<1x256xf32>, vector<256x256xf32>, vector<1x256xf32> -> vector<1x256xf32>
        %c0_77 = arith.constant 0 : index
        %c0_78 = arith.constant 0 : index
        %c0_79 = arith.constant 0 : index
        %100 = vector.load %arg4[%c0_77, %c0_78, %c0_79] : memref<2x1x256xf32, #tpu.memory_space<vmem>>, vector<1x1x256xf32>
        %101 = vector.shape_cast %100 : vector<1x1x256xf32> to vector<1x256xf32>
        %102 = vector.shape_cast %99 : vector<1x256xf32> to vector<1x1x256xf32>
        tpu.vector_store %arg4[%c0_77, %c0_78, %c0_79], %102 {strides = array<i32>} : memref<2x1x256xf32, #tpu.memory_space<vmem>>, vector<1x1x256xf32>,
        %103 = arith.subf %99, %96 : vector<1x256xf32>
        %104 = math.absf %103 : vector<1x256xf32>
        %105 = vector.shape_cast %104 : vector<1x256xf32> to vector<1x1x256xf32>
        %cst_80 = arith.constant dense<0.000000e+00> : vector<1xf32>
        %106 = vector.multi_reduction <add>, %105, %cst_80 [1, 2] : vector<1x1x256xf32> to vector<1xf32>
        %107 = vector.shape_cast %106 : vector<1xf32> to vector<1x1x1xf32>
        %108 = vector.extract %107[0, 0, 0] : f32 from vector<1x1x1xf32>
        %cst_81 = arith.constant 0.000000e+00 : f32
        %109 = arith.addf %cst_81, %108 : f32
        %c1_82 = arith.constant 1 : index
        %c0_83 = arith.constant 0 : index
        %c0_84 = arith.constant 0 : index
        %110 = vector.load %arg4[%c1_82, %c0_83, %c0_84] : memref<2x1x256xf32, #tpu.memory_space<vmem>>, vector<1x1x256xf32>
        %111 = vector.shape_cast %110 : vector<1x1x256xf32> to vector<1x256xf32>
        %c1_85 = arith.constant 1 : index
        %c0_86 = arith.constant 0 : index
        %c0_87 = arith.constant 0 : index
        %112 = vector.load %arg3[%c1_85, %c0_86, %c0_87] : memref<2x256x256xf32, #tpu.memory_space<vmem>>, vector<1x256x256xf32>
        %113 = vector.shape_cast %112 : vector<1x256x256xf32> to vector<256x256xf32>
        %cst_88 = arith.constant dense<0.000000e+00> : vector<1x256xf32>
        %114 = tpu.matmul %111, %113, %cst_88 {dimension_numbers = #tpu.dot_dimension_numbers<[1], [0], [0], [1], [0, 0, 1, 1], [], []>} : vector<1x256xf32>, vector<256x256xf32>, vector<1x256xf32> -> vector<1x256xf32>
        %c1_89 = arith.constant 1 : index
        %c0_90 = arith.constant 0 : index
        %c0_91 = arith.constant 0 : index
        %115 = vector.load %arg4[%c1_89, %c0_90, %c0_91] : memref<2x1x256xf32, #tpu.memory_space<vmem>>, vector<1x1x256xf32>
        %116 = vector.shape_cast %115 : vector<1x1x256xf32> to vector<1x256xf32>
        %117 = vector.shape_cast %114 : vector<1x256xf32> to vector<1x1x256xf32>
        tpu.vector_store %arg4[%c1_89, %c0_90, %c0_91], %117 {strides = array<i32>} : memref<2x1x256xf32, #tpu.memory_space<vmem>>, vector<1x1x256xf32>,
        %118 = arith.subf %114, %111 : vector<1x256xf32>
        %119 = math.absf %118 : vector<1x256xf32>
        %120 = vector.shape_cast %119 : vector<1x256xf32> to vector<1x1x256xf32>
        %cst_92 = arith.constant dense<0.000000e+00> : vector<1xf32>
        %121 = vector.multi_reduction <add>, %120, %cst_92 [1, 2] : vector<1x1x256xf32> to vector<1xf32>
        %122 = vector.shape_cast %121 : vector<1xf32> to vector<1x1x1xf32>
        %123 = vector.extract %122[0, 0, 0] : f32 from vector<1x1x1xf32>
        %124 = arith.addf %109, %123 : f32
        %cst_93 = arith.constant 0.001953125 : f32
        %125 = arith.mulf %124, %cst_93 : f32
        %cst_94 = arith.constant 9.99999974E-5 : f32
        %126 = arith.cmpf olt, %125, %cst_94 : f32
        %127 = arith.extui %126 : i1 to i32
        %c0_95 = arith.constant 0 : index
        %128 = memref.load %arg5[%c0_95] : memref<1xi32, #tpu.memory_space<smem>>
        memref.store %127, %arg5[%c0_95] : memref<1xi32, #tpu.memory_space<smem>>
      } else {
      }
    }
    %c0_49 = arith.constant 0 : index
    %c0_50 = arith.constant 0 : index
    %c0_51 = arith.constant 0 : index
    %73 = vector.load %arg0[%c0_49, %c0_50, %c0_51] : memref<2x8x256xf32, #tpu.memory_space<vmem>>, vector<1x8x256xf32>
    %74 = vector.shape_cast %73 : vector<1x8x256xf32> to vector<8x256xf32>
    %c0_52 = arith.constant 0 : index
    %c0_53 = arith.constant 0 : index
    %c0_54 = arith.constant 0 : index
    %75 = vector.load %arg4[%c0_52, %c0_53, %c0_54] : memref<2x1x256xf32, #tpu.memory_space<vmem>>, vector<1x1x256xf32>
    %76 = vector.shape_cast %75 : vector<1x1x256xf32> to vector<1x256xf32>
    %77 = vector.broadcast %76 : vector<1x256xf32> to vector<8x256xf32>
    %78 = arith.mulf %74, %77 : vector<8x256xf32>
    %c0_55 = arith.constant 0 : index
    %c0_56 = arith.constant 0 : index
    %c0_57 = arith.constant 0 : index
    %79 = vector.load %arg2[%c0_55, %c0_56, %c0_57] : memref<2x8x256xf32, #tpu.memory_space<vmem>>, vector<1x8x256xf32>
    %80 = vector.shape_cast %79 : vector<1x8x256xf32> to vector<8x256xf32>
    %81 = vector.shape_cast %78 : vector<8x256xf32> to vector<1x8x256xf32>
    tpu.vector_store %arg2[%c0_55, %c0_56, %c0_57], %81 {strides = array<i32>} : memref<2x8x256xf32, #tpu.memory_space<vmem>>, vector<1x8x256xf32>,
    %c1_58 = arith.constant 1 : index
    %c0_59 = arith.constant 0 : index
    %c0_60 = arith.constant 0 : index
    %82 = vector.load %arg0[%c1_58, %c0_59, %c0_60] : memref<2x8x256xf32, #tpu.memory_space<vmem>>, vector<1x8x256xf32>
    %83 = vector.shape_cast %82 : vector<1x8x256xf32> to vector<8x256xf32>
    %c1_61 = arith.constant 1 : index
    %c0_62 = arith.constant 0 : index
    %c0_63 = arith.constant 0 : index
    %84 = vector.load %arg4[%c1_61, %c0_62, %c0_63] : memref<2x1x256xf32, #tpu.memory_space<vmem>>, vector<1x1x256xf32>
    %85 = vector.shape_cast %84 : vector<1x1x256xf32> to vector<1x256xf32>
    %86 = vector.broadcast %85 : vector<1x256xf32> to vector<8x256xf32>
    %87 = arith.mulf %83, %86 : vector<8x256xf32>
    %c1_64 = arith.constant 1 : index
    %c0_65 = arith.constant 0 : index
    %c0_66 = arith.constant 0 : index
    %88 = vector.load %arg2[%c1_64, %c0_65, %c0_66] : memref<2x8x256xf32, #tpu.memory_space<vmem>>, vector<1x8x256xf32>
    %89 = vector.shape_cast %88 : vector<1x8x256xf32> to vector<8x256xf32>
    %90 = vector.shape_cast %87 : vector<8x256xf32> to vector<1x8x256xf32>
    tpu.vector_store %arg2[%c1_64, %c0_65, %c0_66], %90 {strides = array<i32>} : memref<2x8x256xf32, #tpu.memory_space<vmem>>, vector<1x8x256xf32>,
    return
  }
}

</mosaic_0001>

<llo_original>
// kernel: soft_proposal.1
$region0: #{soft_proposal.1}
  #allocation0 [shape = 'u32[]', space=smem, size = 0x4, offset = 0x4, fixed_abs, tag = 'smem constant byte address 0x4 - core index']
  #allocation1 [shape = 'u32[72,128]{1,0:T(1,128)}', space=vmem, size = 0x9000, scoped, tag = 'internal scratch']
  #allocation2 [shape = 'f32[2,256,256]{2,1,0:T(8,128)}', space=vmem, size = 0x80000, scoped, tag = 'scratch operand']
  #allocation3 [shape = 'f32[2,1,256]{2,1,0:T(1,128)}', space=vmem, size = 0x800, scoped, tag = 'scratch operand']
  #allocation4 [shape = 's32[1]{0:T(128)}', space=smem, size = 0x200, scoped, tag = 'scratch operand']
  %s0 = inlined_call_operand.vmem [shape: f32[2,8,256], index: 0, kind: input, shape index: {}]
  %s1 = inlined_call_operand.hbm [shape: f32[256,256], index: 1, kind: input, shape index: {}]
  %s2 = inlined_call_operand.vmem [shape: f32[2,8,256], index: 2, kind: output, shape index: {}]
  %s3 = sld [smem:[#allocation0]]
  $region33: #{soft_proposal.1} parent=0
    _
  %s5 = ssub.s32 1, %s3
  %s6 = scalar_select 0, %s5, %s3
  $region1: #{soft_proposal.1} parent=0
    #allocation5 [shape = 'u8[262144]{0}', space=vmem, size = 0x40000, scoped, tag = 'input window, operand 1, single buffered']
    #allocation6 [shape = 's32[1]{0}', space=sflag, size = 0x4, scoped, tag = 'scoped memory for soft_proposal.1']
    %7 = vsyncpa [#allocation6], 0
    // Predicated region
    $region2: #{soft_proposal.1} parent=1 // pred_check
      _
    $region3: #{soft_proposal.1} parent=1 // pred_check_branch
      %9 = sbr.rel (0) target = $region5
    $region4: #{soft_proposal.1} parent=1 // pred_region
      _
    $region5: #{soft_proposal.1} parent=1 // pred_fallthru
      _
    // Predicated region
    $region6: #{soft_proposal.1} parent=1 // pred_check
      _
    $region7: #{soft_proposal.1} parent=1 // pred_check_branch
      %11 = sbr.rel (0) target = $region9
    $region8: #{soft_proposal.1} parent=1 // pred_region
      %13 = vsyncadd [#allocation6], 0
      %s14 = sshll.u32 %s1, 4
      %s15 = int_to_ptr.hbm [resolvable:$true] %s14
      %s16 = sshll.u32 [#allocation5], 4
      %s17 = int_to_ptr.vmem [resolvable:$true] %s16
      %22 = dma.hbm_to_vmem [thread:$0]  %s15, 8192, %s17, [#allocation6], 256, 256, 16
    $region9: #{soft_proposal.1} parent=1 // pred_fallthru
      _
    // Predicated region
    $region10: #{soft_proposal.1} parent=1 // pred_check
      _
    $region11: #{soft_proposal.1} parent=1 // pred_check_branch
      %24 = sbr.rel (0) target = $region13
    $region12: #{soft_proposal.1} parent=1 // pred_region
      %26 = dma.done [#allocation6], 8192
    $region13: #{soft_proposal.1} parent=1 // pred_fallthru
      _
    %v27 = vld [vmem:[#allocation5] sm:$0xff]
    %v28 = vld [vmem:[#allocation5 + $0x8] sm:$0xff]
    %v29 = vld [vmem:[#allocation5 + $0x10] sm:$0xff]
    %v30 = vld [vmem:[#allocation5 + $0x18] sm:$0xff]
    %v31 = vld [vmem:[#allocation5 + $0x20] sm:$0xff]
    %v32 = vld [vmem:[#allocation5 + $0x28] sm:$0xff]
    %v33 = vld [vmem:[#allocation5 + $0x30] sm:$0xff]
    %v34 = vld [vmem:[#allocation5 + $0x38] sm:$0xff]
    %v35 = vld [vmem:[#allocation5 + $0x40] sm:$0xff]
    %v36 = vld [vmem:[#allocation5 + $0x48] sm:$0xff]
    %v37 = vld [vmem:[#allocation5 + $0x50] sm:$0xff]
    %v38 = vld [vmem:[#allocation5 + $0x58] sm:$0xff]
    %v39 = vld [vmem:[#allocation5 + $0x60] sm:$0xff]
    %v40 = vld [vmem:[#allocation5 + $0x68] sm:$0xff]
    %v41 = vld [vmem:[#allocation5 + $0x70] sm:$0xff]
    %v42 = vld [vmem:[#allocation5 + $0x78] sm:$0xff]
    %v43 = vld [vmem:[#allocation5 + $0x80] sm:$0xff]
    %v44 = vld [vmem:[#allocation5 + $0x88] sm:$0xff]
    %v45 = vld [vmem:[#allocation5 + $0x90] sm:$0xff]
    %v46 = vld [vmem:[#allocation5 + $0x98] sm:$0xff]
    %v47 = vld [vmem:[#allocation5 + $0xa0] sm:$0xff]
    %v48 = vld [vmem:[#allocation5 + $0xa8] sm:$0xff]
    %v49 = vld [vmem:[#allocation5 + $0xb0] sm:$0xff]
    %v50 = vld [vmem:[#allocation5 + $0xb8] sm:$0xff]
    %v51 = vld [vmem:[#allocation5 + $0xc0] sm:$0xff]
    %v52 = vld [vmem:[#allocation5 + $0xc8] sm:$0xff]
    %v53 = vld [vmem:[#allocation5 + $0xd0] sm:$0xff]
    %v54 = vld [vmem:[#allocation5 + $0xd8] sm:$0xff]
    %v55 = vld [vmem:[#allocation5 + $0xe0] sm:$0xff]
    %v56 = vld [vmem:[#allocation5 + $0xe8] sm:$0xff]
    %v57 = vld [vmem:[#allocation5 + $0xf0] sm:$0xff]
    %v58 = vld [vmem:[#allocation5 + $0xf8] sm:$0xff]
    %v59 = vld [vmem:[#allocation5 + $0x100] sm:$0xff]
    %v60 = vld [vmem:[#allocation5 + $0x108] sm:$0xff]
    %v61 = vld [vmem:[#allocation5 + $0x110] sm:$0xff]
    %v62 = vld [vmem:[#allocation5 + $0x118] sm:$0xff]
    %v63 = vld [vmem:[#allocation5 + $0x120] sm:$0xff]
    %v64 = vld [vmem:[#allocation5 + $0x128] sm:$0xff]
    %v65 = vld [vmem:[#allocation5 + $0x130] sm:$0xff]
    %v66 = vld [vmem:[#allocation5 + $0x138] sm:$0xff]
    %v67 = vld [vmem:[#allocation5 + $0x140] sm:$0xff]
    %v68 = vld [vmem:[#allocation5 + $0x148] sm:$0xff]
    %v69 = vld [vmem:[#allocation5 + $0x150] sm:$0xff]
    %v70 = vld [vmem:[#allocation5 + $0x158] sm:$0xff]
    %v71 = vld [vmem:[#allocation5 + $0x160] sm:$0xff]
    %v72 = vld [vmem:[#allocation5 + $0x168] sm:$0xff]
    %v73 = vld [vmem:[#allocation5 + $0x170] sm:$0xff]
    %v74 = vld [vmem:[#allocation5 + $0x178] sm:$0xff]
    %v75 = vld [vmem:[#allocation5 + $0x180] sm:$0xff]
    %v76 = vld [vmem:[#allocation5 + $0x188] sm:$0xff]
    %v77 = vld [vmem:[#allocation5 + $0x190] sm:$0xff]
    %v78 = vld [vmem:[#allocation5 + $0x198] sm:$0xff]
    %v79 = vld [vmem:[#allocation5 + $0x1a0] sm:$0xff]
    %v80 = vld [vmem:[#allocation5 + $0x1a8] sm:$0xff]
    %v81 = vld [vmem:[#allocation5 + $0x1b0] sm:$0xff]
    %v82 = vld [vmem:[#allocation5 + $0x1b8] sm:$0xff]
    %v83 = vld [vmem:[#allocation5 + $0x1c0] sm:$0xff]
    %v84 = vld [vmem:[#allocation5 + $0x1c8] sm:$0xff]
    %v85 = vld [vmem:[#allocation5 + $0x1d0] sm:$0xff]
    %v86 = vld [vmem:[#allocation5 + $0x1d8] sm:$0xff]
    %v87 = vld [vmem:[#allocation5 + $0x1e0] sm:$0xff]
    %v88 = vld [vmem:[#allocation5 + $0x1e8] sm:$0xff]
    %v89 = vld [vmem:[#allocation5 + $0x1f0] sm:$0xff]
    %v90 = vld [vmem:[#allocation5 + $0x1f8] sm:$0xff]
    %v91 = vld [vmem:[%s0] sm:$0xff]
    %v92 = vld [vmem:[%s0 + $0x8] sm:$0xff]
    %93 = vxpose.xlu0.b32.start [1/16] %v91, 128
    %94 = vxpose.xlu0.b32.cont [2/16] 0.0, 128
    %95 = vxpose.xlu0.b32.cont [3/16] 0.0, 128
    %96 = vxpose.xlu0.b32.cont [4/16] 0.0, 128
    %97 = vxpose.xlu0.b32.cont [5/16] 0.0, 128
    %98 = vxpose.xlu0.b32.cont [6/16] 0.0, 128
    %99 = vxpose.xlu0.b32.cont [7/16] 0.0, 128
    %100 = vxpose.xlu0.b32.cont [8/16] 0.0, 128
    %101 = vxpose.xlu0.b32.cont [9/16] 0.0, 128
    %102 = vxpose.xlu0.b32.cont [10/16] 0.0, 128
    %103 = vxpose.xlu0.b32.cont [11/16] 0.0, 128
    %104 = vxpose.xlu0.b32.cont [12/16] 0.0, 128
    %105 = vxpose.xlu0.b32.cont [13/16] 0.0, 128
    %106 = vxpose.xlu0.b32.cont [14/16] 0.0, 128
    %107 = vxpose.xlu0.b32.cont [15/16] 0.0, 128
    %108 = vxpose.xlu0.b32.end [16/16] 0.0, 128
    %v109 = vpop.trf.xlu0
    %v110 = vpop.trf.xlu0
    %v111 = vpop.trf.xlu0
    %v112 = vpop.trf.xlu0
    %v113 = vpop.trf.xlu0
    %v114 = vpop.trf.xlu0
    %v115 = vpop.trf.xlu0
    %v116 = vpop.trf.xlu0
    %v117 = vpop.trf.xlu0
    %v118 = vpop.trf.xlu0
    %v119 = vpop.trf.xlu0
    %v120 = vpop.trf.xlu0
    %v121 = vpop.trf.xlu0
    %v122 = vpop.trf.xlu0
    %v123 = vpop.trf.xlu0
    %v124 = vpop.trf.xlu0
    %125 = vxpose.xlu0.b32.start [1/16] %v92, 128
    %126 = vxpose.xlu0.b32.cont [2/16] 0.0, 128
    %127 = vxpose.xlu0.b32.cont [3/16] 0.0, 128
    %128 = vxpose.xlu0.b32.cont [4/16] 0.0, 128
    %129 = vxpose.xlu0.b32.cont [5/16] 0.0, 128
    %130 = vxpose.xlu0.b32.cont [6/16] 0.0, 128
    %131 = vxpose.xlu0.b32.cont [7/16] 0.0, 128
    %132 = vxpose.xlu0.b32.cont [8/16] 0.0, 128
    %133 = vxpose.xlu0.b32.cont [9/16] 0.0, 128
    %134 = vxpose.xlu0.b32.cont [10/16] 0.0, 128
    %135 = vxpose.xlu0.b32.cont [11/16] 0.0, 128
    %136 = vxpose.xlu0.b32.cont [12/16] 0.0, 128
    %137 = vxpose.xlu0.b32.cont [13/16] 0.0, 128
    %138 = vxpose.xlu0.b32.cont [14/16] 0.0, 128
    %139 = vxpose.xlu0.b32.cont [15/16] 0.0, 128
    %140 = vxpose.xlu0.b32.end [16/16] 0.0, 128
    %v141 = vpop.trf.xlu0
    %v142 = vpop.trf.xlu0
    %v143 = vpop.trf.xlu0
    %v144 = vpop.trf.xlu0
    %v145 = vpop.trf.xlu0
    %v146 = vpop.trf.xlu0
    %v147 = vpop.trf.xlu0
    %v148 = vpop.trf.xlu0
    %v149 = vpop.trf.xlu0
    %v150 = vpop.trf.xlu0
    %v151 = vpop.trf.xlu0
    %v152 = vpop.trf.xlu0
    %v153 = vpop.trf.xlu0
    %v154 = vpop.trf.xlu0
    %v155 = vpop.trf.xlu0
    %v156 = vpop.trf.xlu0
    %vm157 = vcmask 64512
    %v159 = vsel %vm157, %v109, 0
    %v162 = vsel %vm157, %v110, 0
    %v165 = vsel %vm157, %v111, 0
    %v168 = vsel %vm157, %v112, 0
    %v171 = vsel %vm157, %v113, 0
    %v174 = vsel %vm157, %v114, 0
    %v177 = vsel %vm157, %v115, 0
    %v180 = vsel %vm157, %v116, 0
    %v183 = vsel %vm157, %v117, 0
    %v186 = vsel %vm157, %v118, 0
    %v189 = vsel %vm157, %v119, 0
    %v192 = vsel %vm157, %v120, 0
    %v195 = vsel %vm157, %v121, 0
    %v198 = vsel %vm157, %v122, 0
    %v201 = vsel %vm157, %v123, 0
    %v204 = vsel %vm157, %v124, 0
    %v207 = vsel %vm157, %v141, 0
    %v210 = vsel %vm157, %v142, 0
    %v213 = vsel %vm157, %v143, 0
    %v216 = vsel %vm157, %v144, 0
    %v219 = vsel %vm157, %v145, 0
    %v222 = vsel %vm157, %v146, 0
    %v225 = vsel %vm157, %v147, 0
    %v228 = vsel %vm157, %v148, 0
    %v231 = vsel %vm157, %v149, 0
    %v234 = vsel %vm157, %v150, 0
    %v237 = vsel %vm157, %v151, 0
    %v240 = vsel %vm157, %v152, 0
    %v243 = vsel %vm157, %v153, 0
    %v246 = vsel %vm157, %v154, 0
    %v249 = vsel %vm157, %v155, 0
    %v252 = vsel %vm157, %v156, 0
    %254 = vmatpush.msra.mxu0 0.0
    %255 = vmatpush.msra.mxu0 0.0
    %256 = vmatpush.msra.mxu0 0.0
    %257 = vmatpush.msra.mxu0 0.0
    %258 = vmatpush.msra.mxu0 0.0
    %259 = vmatpush.msra.mxu0 0.0
    %260 = vmatpush.msra.mxu0 0.0
    %261 = vmatpush.msra.mxu0 0.0
    %262 = vmatpush.msra.mxu0 0.0
    %263 = vmatpush.msra.mxu0 0.0
    %264 = vmatpush.msra.mxu0 0.0
    %265 = vmatpush.msra.mxu0 0.0
    %266 = vmatpush.msra.mxu0 0.0
    %267 = vmatpush.msra.mxu0 0.0
    %268 = vmatpush.msra.mxu0 0.0
    %269 = vmatpush.msra.mxu0 %v91
    %270 = vmatmul.f32.gmra.mxu0 %v159
    %v271 = vpop.f32.mrf.mxu0
    %v272 = vadd.f32 0.0, %v271
    %273 = vmatmul.f32.gmra.mxu0 %v162
    %v274 = vpop.f32.mrf.mxu0
    %v275 = vadd.f32 0.0, %v274
    %276 = vmatmul.f32.gmra.mxu0 %v165
    %v277 = vpop.f32.mrf.mxu0
    %v278 = vadd.f32 0.0, %v277
    %279 = vmatmul.f32.gmra.mxu0 %v168
    %v280 = vpop.f32.mrf.mxu0
    %v281 = vadd.f32 0.0, %v280
    %282 = vmatmul.f32.gmra.mxu0 %v171
    %v283 = vpop.f32.mrf.mxu0
    %v284 = vadd.f32 0.0, %v283
    %285 = vmatmul.f32.gmra.mxu0 %v174
    %v286 = vpop.f32.mrf.mxu0
    %v287 = vadd.f32 0.0, %v286
    %288 = vmatmul.f32.gmra.mxu0 %v177
    %v289 = vpop.f32.mrf.mxu0
    %v290 = vadd.f32 0.0, %v289
    %291 = vmatmul.f32.gmra.mxu0 %v180
    %v292 = vpop.f32.mrf.mxu0
    %v293 = vadd.f32 0.0, %v292
    %294 = vmatmul.f32.gmra.mxu0 %v183
    %v295 = vpop.f32.mrf.mxu0
    %v296 = vadd.f32 0.0, %v295
    %297 = vmatmul.f32.gmra.mxu0 %v186
    %v298 = vpop.f32.mrf.mxu0
    %v299 = vadd.f32 0.0, %v298
    %300 = vmatmul.f32.gmra.mxu0 %v189
    %v301 = vpop.f32.mrf.mxu0
    %v302 = vadd.f32 0.0, %v301
    %303 = vmatmul.f32.gmra.mxu0 %v192
    %v304 = vpop.f32.mrf.mxu0
    %v305 = vadd.f32 0.0, %v304
    %306 = vmatmul.f32.gmra.mxu0 %v195
    %v307 = vpop.f32.mrf.mxu0
    %v308 = vadd.f32 0.0, %v307
    %309 = vmatmul.f32.gmra.mxu0 %v198
    %v310 = vpop.f32.mrf.mxu0
    %v311 = vadd.f32 0.0, %v310
    %312 = vmatmul.f32.gmra.mxu0 %v201
    %v313 = vpop.f32.mrf.mxu0
    %v314 = vadd.f32 0.0, %v313
    %315 = vmatmul.f32.gmra.mxu0 %v204
    %v316 = vpop.f32.mrf.mxu0
    %v317 = vadd.f32 0.0, %v316
    %318 = vmatmul.f32.gmra.mxu0 %v207
    %v319 = vpop.f32.mrf.mxu0
    %v320 = vadd.f32 0.0, %v319
    %321 = vmatmul.f32.gmra.mxu0 %v210
    %v322 = vpop.f32.mrf.mxu0
    %v323 = vadd.f32 0.0, %v322
    %324 = vmatmul.f32.gmra.mxu0 %v213
    %v325 = vpop.f32.mrf.mxu0
    %v326 = vadd.f32 0.0, %v325
    %327 = vmatmul.f32.gmra.mxu0 %v216
    %v328 = vpop.f32.mrf.mxu0
    %v329 = vadd.f32 0.0, %v328
    %330 = vmatmul.f32.gmra.mxu0 %v219
    %v331 = vpop.f32.mrf.mxu0
    %v332 = vadd.f32 0.0, %v331
    %333 = vmatmul.f32.gmra.mxu0 %v222
    %v334 = vpop.f32.mrf.mxu0
    %v335 = vadd.f32 0.0, %v334
    %336 = vmatmul.f32.gmra.mxu0 %v225
    %v337 = vpop.f32.mrf.mxu0
    %v338 = vadd.f32 0.0, %v337
    %339 = vmatmul.f32.gmra.mxu0 %v228
    %v340 = vpop.f32.mrf.mxu0
    %v341 = vadd.f32 0.0, %v340
    %342 = vmatmul.f32.gmra.mxu0 %v231
    %v343 = vpop.f32.mrf.mxu0
    %v344 = vadd.f32 0.0, %v343
    %345 = vmatmul.f32.gmra.mxu0 %v234
    %v346 = vpop.f32.mrf.mxu0
    %v347 = vadd.f32 0.0, %v346
    %348 = vmatmul.f32.gmra.mxu0 %v237
    %v349 = vpop.f32.mrf.mxu0
    %v350 = vadd.f32 0.0, %v349
    %351 = vmatmul.f32.gmra.mxu0 %v240
    %v352 = vpop.f32.mrf.mxu0
    %v353 = vadd.f32 0.0, %v352
    %354 = vmatmul.f32.gmra.mxu0 %v243
    %v355 = vpop.f32.mrf.mxu0
    %v356 = vadd.f32 0.0, %v355
    %357 = vmatmul.f32.gmra.mxu0 %v246
    %v358 = vpop.f32.mrf.mxu0
    %v359 = vadd.f32 0.0, %v358
    %360 = vmatmul.f32.gmra.mxu0 %v249
    %v361 = vpop.f32.mrf.mxu0
    %v362 = vadd.f32 0.0, %v361
    %363 = vmatmul.f32.gmra.mxu0 %v252
    %v364 = vpop.f32.mrf.mxu0
    %v365 = vadd.f32 0.0, %v364
    %366 = vdwg.mxu0
    %367 = vmatpush.msra.mxu0 0.0
    %368 = vmatpush.msra.mxu0 0.0
    %369 = vmatpush.msra.mxu0 0.0
    %370 = vmatpush.msra.mxu0 0.0
    %371 = vmatpush.msra.mxu0 0.0
    %372 = vmatpush.msra.mxu0 0.0
    %373 = vmatpush.msra.mxu0 0.0
    %374 = vmatpush.msra.mxu0 0.0
    %375 = vmatpush.msra.mxu0 0.0
    %376 = vmatpush.msra.mxu0 0.0
    %377 = vmatpush.msra.mxu0 0.0
    %378 = vmatpush.msra.mxu0 0.0
    %379 = vmatpush.msra.mxu0 0.0
    %380 = vmatpush.msra.mxu0 0.0
    %381 = vmatpush.msra.mxu0 0.0
    %382 = vmatpush.msra.mxu0 %v92
    %383 = vmatmul.f32.gmra.mxu0 %v159
    %v384 = vpop.f32.mrf.mxu0
    %v385 = vadd.f32 0.0, %v384
    %386 = vmatmul.f32.gmra.mxu0 %v162
    %v387 = vpop.f32.mrf.mxu0
    %v388 = vadd.f32 0.0, %v387
    %389 = vmatmul.f32.gmra.mxu0 %v165
    %v390 = vpop.f32.mrf.mxu0
    %v391 = vadd.f32 0.0, %v390
    %392 = vmatmul.f32.gmra.mxu0 %v168
    %v393 = vpop.f32.mrf.mxu0
    %v394 = vadd.f32 0.0, %v393
    %395 = vmatmul.f32.gmra.mxu0 %v171
    %v396 = vpop.f32.mrf.mxu0
    %v397 = vadd.f32 0.0, %v396
    %398 = vmatmul.f32.gmra.mxu0 %v174
    %v399 = vpop.f32.mrf.mxu0
    %v400 = vadd.f32 0.0, %v399
    %401 = vmatmul.f32.gmra.mxu0 %v177
    %v402 = vpop.f32.mrf.mxu0
    %v403 = vadd.f32 0.0, %v402
    %404 = vmatmul.f32.gmra.mxu0 %v180
    %v405 = vpop.f32.mrf.mxu0
    %v406 = vadd.f32 0.0, %v405
    %407 = vmatmul.f32.gmra.mxu0 %v183
    %v408 = vpop.f32.mrf.mxu0
    %v409 = vadd.f32 0.0, %v408
    %410 = vmatmul.f32.gmra.mxu0 %v186
    %v411 = vpop.f32.mrf.mxu0
    %v412 = vadd.f32 0.0, %v411
    %413 = vmatmul.f32.gmra.mxu0 %v189
    %v414 = vpop.f32.mrf.mxu0
    %v415 = vadd.f32 0.0, %v414
    %416 = vmatmul.f32.gmra.mxu0 %v192
    %v417 = vpop.f32.mrf.mxu0
    %v418 = vadd.f32 0.0, %v417
    %419 = vmatmul.f32.gmra.mxu0 %v195
    %v420 = vpop.f32.mrf.mxu0
    %v421 = vadd.f32 0.0, %v420
    %422 = vmatmul.f32.gmra.mxu0 %v198
    %v423 = vpop.f32.mrf.mxu0
    %v424 = vadd.f32 0.0, %v423
    %425 = vmatmul.f32.gmra.mxu0 %v201
    %v426 = vpop.f32.mrf.mxu0
    %v427 = vadd.f32 0.0, %v426
    %428 = vmatmul.f32.gmra.mxu0 %v204
    %v429 = vpop.f32.mrf.mxu0
    %v430 = vadd.f32 0.0, %v429
    %431 = vmatmul.f32.gmra.mxu0 %v207
    %v432 = vpop.f32.mrf.mxu0
    %v433 = vadd.f32 0.0, %v432
    %434 = vmatmul.f32.gmra.mxu0 %v210
    %v435 = vpop.f32.mrf.mxu0
    %v436 = vadd.f32 0.0, %v435
    %437 = vmatmul.f32.gmra.mxu0 %v213
    %v438 = vpop.f32.mrf.mxu0
    %v439 = vadd.f32 0.0, %v438
    %440 = vmatmul.f32.gmra.mxu0 %v216
    %v441 = vpop.f32.mrf.mxu0
    %v442 = vadd.f32 0.0, %v441
    %443 = vmatmul.f32.gmra.mxu0 %v219
    %v444 = vpop.f32.mrf.mxu0
    %v445 = vadd.f32 0.0, %v444
    %446 = vmatmul.f32.gmra.mxu0 %v222
    %v447 = vpop.f32.mrf.mxu0
    %v448 = vadd.f32 0.0, %v447
    %449 = vmatmul.f32.gmra.mxu0 %v225
    %v450 = vpop.f32.mrf.mxu0
    %v451 = vadd.f32 0.0, %v450
    %452 = vmatmul.f32.gmra.mxu0 %v228
    %v453 = vpop.f32.mrf.mxu0
    %v454 = vadd.f32 0.0, %v453
    %455 = vmatmul.f32.gmra.mxu0 %v231
    %v456 = vpop.f32.mrf.mxu0
    %v457 = vadd.f32 0.0, %v456
    %458 = vmatmul.f32.gmra.mxu0 %v234
    %v459 = vpop.f32.mrf.mxu0
    %v460 = vadd.f32 0.0, %v459
    %461 = vmatmul.f32.gmra.mxu0 %v237
    %v462 = vpop.f32.mrf.mxu0
    %v463 = vadd.f32 0.0, %v462
    %464 = vmatmul.f32.gmra.mxu0 %v240
    %v465 = vpop.f32.mrf.mxu0
    %v466 = vadd.f32 0.0, %v465
    %467 = vmatmul.f32.gmra.mxu0 %v243
    %v468 = vpop.f32.mrf.mxu0
    %v469 = vadd.f32 0.0, %v468
    %470 = vmatmul.f32.gmra.mxu0 %v246
    %v471 = vpop.f32.mrf.mxu0
    %v472 = vadd.f32 0.0, %v471
    %473 = vmatmul.f32.gmra.mxu0 %v249
    %v474 = vpop.f32.mrf.mxu0
    %v475 = vadd.f32 0.0, %v474
    %476 = vmatmul.f32.gmra.mxu0 %v252
    %v477 = vpop.f32.mrf.mxu0
    %v478 = vadd.f32 0.0, %v477
    %479 = vdwg.mxu0
    %v480 = vmul.f32 %v91, %v91
    %v481 = vmul.f32 %v92, %v92
    %v482 = vrot.slane %v480, 4
    %v483 = vadd.f32 %v480, %v482
    %v484 = vrot.slane %v483, 2
    %v485 = vadd.f32 %v483, %v484
    %v486 = vrot.slane %v485, 1
    %v487 = vadd.f32 %v485, %v486
    %v488 = vrot.slane %v481, 4
    %v489 = vadd.f32 %v481, %v488
    %v490 = vrot.slane %v489, 2
    %v491 = vadd.f32 %v489, %v490
    %v492 = vrot.slane %v491, 1
    %v493 = vadd.f32 %v491, %v492
    %v494 = vsub.f32 %v487, %v272
    %v495 = vsub.f32 %v493, %v385
    %v496 = vsub.f32 %v487, %v275
    %v497 = vsub.f32 %v493, %v388
    %v498 = vsub.f32 %v487, %v278
    %v499 = vsub.f32 %v493, %v391
    %v500 = vsub.f32 %v487, %v281
    %v501 = vsub.f32 %v493, %v394
    %v502 = vsub.f32 %v487, %v284
    %v503 = vsub.f32 %v493, %v397
    %v504 = vsub.f32 %v487, %v287
    %v505 = vsub.f32 %v493, %v400
    %v506 = vsub.f32 %v487, %v290
    %v507 = vsub.f32 %v493, %v403
    %v508 = vsub.f32 %v487, %v293
    %v509 = vsub.f32 %v493, %v406
    %v510 = vsub.f32 %v487, %v296
    %v511 = vsub.f32 %v493, %v409
    %v512 = vsub.f32 %v487, %v299
    %v513 = vsub.f32 %v493, %v412
    %v514 = vsub.f32 %v487, %v302
    %v515 = vsub.f32 %v493, %v415
    %v516 = vsub.f32 %v487, %v305
    %v517 = vsub.f32 %v493, %v418
    %v518 = vsub.f32 %v487, %v308
    %v519 = vsub.f32 %v493, %v421
    %v520 = vsub.f32 %v487, %v311
    %v521 = vsub.f32 %v493, %v424
    %v522 = vsub.f32 %v487, %v314
    %v523 = vsub.f32 %v493, %v427
    %v524 = vsub.f32 %v487, %v317
    %v525 = vsub.f32 %v493, %v430
    %v526 = vsub.f32 %v487, %v320
    %v527 = vsub.f32 %v493, %v433
    %v528 = vsub.f32 %v487, %v323
    %v529 = vsub.f32 %v493, %v436
    %v530 = vsub.f32 %v487, %v326
    %v531 = vsub.f32 %v493, %v439
    %v532 = vsub.f32 %v487, %v329
    %v533 = vsub.f32 %v493, %v442
    %v534 = vsub.f32 %v487, %v332
    %v535 = vsub.f32 %v493, %v445
    %v536 = vsub.f32 %v487, %v335
    %v537 = vsub.f32 %v493, %v448
    %v538 = vsub.f32 %v487, %v338
    %v539 = vsub.f32 %v493, %v451
    %v540 = vsub.f32 %v487, %v341
    %v541 = vsub.f32 %v493, %v454
    %v542 = vsub.f32 %v487, %v344
    %v543 = vsub.f32 %v493, %v457
    %v544 = vsub.f32 %v487, %v347
    %v545 = vsub.f32 %v493, %v460
    %v546 = vsub.f32 %v487, %v350
    %v547 = vsub.f32 %v493, %v463
    %v548 = vsub.f32 %v487, %v353
    %v549 = vsub.f32 %v493, %v466
    %v550 = vsub.f32 %v487, %v356
    %v551 = vsub.f32 %v493, %v469
    %v552 = vsub.f32 %v487, %v359
    %v553 = vsub.f32 %v493, %v472
    %v554 = vsub.f32 %v487, %v362
    %v555 = vsub.f32 %v493, %v475
    %v556 = vsub.f32 %v487, %v365
    %v557 = vsub.f32 %v493, %v478
    %558 = vxpose.xlu0.b32.start [1/16] %v494, 128
    %559 = vxpose.xlu0.b32.cont [2/16] %v496, 128
    %560 = vxpose.xlu0.b32.cont [3/16] %v498, 128
    %561 = vxpose.xlu0.b32.cont [4/16] %v500, 128
    %562 = vxpose.xlu0.b32.cont [5/16] %v502, 128
    %563 = vxpose.xlu0.b32.cont [6/16] %v504, 128
    %564 = vxpose.xlu0.b32.cont [7/16] %v506, 128
    %565 = vxpose.xlu0.b32.cont [8/16] %v508, 128
    %566 = vxpose.xlu0.b32.cont [9/16] %v510, 128
    %567 = vxpose.xlu0.b32.cont [10/16] %v512, 128
    %568 = vxpose.xlu0.b32.cont [11/16] %v514, 128
    %569 = vxpose.xlu0.b32.cont [12/16] %v516, 128
    %570 = vxpose.xlu0.b32.cont [13/16] %v518, 128
    %571 = vxpose.xlu0.b32.cont [14/16] %v520, 128
    %572 = vxpose.xlu0.b32.cont [15/16] %v522, 128
    %573 = vxpose.xlu0.b32.end [16/16] %v524, 128
    %v574 = vpop.trf.xlu0
    %v575 = vpop.trf.xlu0
    %v576 = vpop.trf.xlu0
    %v577 = vpop.trf.xlu0
    %v578 = vpop.trf.xlu0
    %v579 = vpop.trf.xlu0
    %v580 = vpop.trf.xlu0
    %v581 = vpop.trf.xlu0
    %v582 = vpop.trf.xlu0
    %v583 = vpop.trf.xlu0
    %v584 = vpop.trf.xlu0
    %v585 = vpop.trf.xlu0
    %v586 = vpop.trf.xlu0
    %v587 = vpop.trf.xlu0
    %v588 = vpop.trf.xlu0
    %v589 = vpop.trf.xlu0
    %590 = vxpose.xlu0.b32.start [1/16] %v495, 128
    %591 = vxpose.xlu0.b32.cont [2/16] %v497, 128
    %592 = vxpose.xlu0.b32.cont [3/16] %v499, 128
    %593 = vxpose.xlu0.b32.cont [4/16] %v501, 128
    %594 = vxpose.xlu0.b32.cont [5/16] %v503, 128
    %595 = vxpose.xlu0.b32.cont [6/16] %v505, 128
    %596 = vxpose.xlu0.b32.cont [7/16] %v507, 128
    %597 = vxpose.xlu0.b32.cont [8/16] %v509, 128
    %598 = vxpose.xlu0.b32.cont [9/16] %v511, 128
    %599 = vxpose.xlu0.b32.cont [10/16] %v513, 128
    %600 = vxpose.xlu0.b32.cont [11/16] %v515, 128
    %601 = vxpose.xlu0.b32.cont [12/16] %v517, 128
    %602 = vxpose.xlu0.b32.cont [13/16] %v519, 128
    %603 = vxpose.xlu0.b32.cont [14/16] %v521, 128
    %604 = vxpose.xlu0.b32.cont [15/16] %v523, 128
    %605 = vxpose.xlu0.b32.end [16/16] %v525, 128
    %v606 = vpop.trf.xlu0
    %v607 = vpop.trf.xlu0
    %v608 = vpop.trf.xlu0
    %v609 = vpop.trf.xlu0
    %v610 = vpop.trf.xlu0
    %v611 = vpop.trf.xlu0
    %v612 = vpop.trf.xlu0
    %v613 = vpop.trf.xlu0
    %v614 = vpop.trf.xlu0
    %v615 = vpop.trf.xlu0
    %v616 = vpop.trf.xlu0
    %v617 = vpop.trf.xlu0
    %v618 = vpop.trf.xlu0
    %v619 = vpop.trf.xlu0
    %v620 = vpop.trf.xlu0
    %v621 = vpop.trf.xlu0
    %622 = vxpose.xlu0.b32.start [1/16] %v526, 128
    %623 = vxpose.xlu0.b32.cont [2/16] %v528, 128
    %624 = vxpose.xlu0.b32.cont [3/16] %v530, 128
    %625 = vxpose.xlu0.b32.cont [4/16] %v532, 128
    %626 = vxpose.xlu0.b32.cont [5/16] %v534, 128
    %627 = vxpose.xlu0.b32.cont [6/16] %v536, 128
    %628 = vxpose.xlu0.b32.cont [7/16] %v538, 128
    %629 = vxpose.xlu0.b32.cont [8/16] %v540, 128
    %630 = vxpose.xlu0.b32.cont [9/16] %v542, 128
    %631 = vxpose.xlu0.b32.cont [10/16] %v544, 128
    %632 = vxpose.xlu0.b32.cont [11/16] %v546, 128
    %633 = vxpose.xlu0.b32.cont [12/16] %v548, 128
    %634 = vxpose.xlu0.b32.cont [13/16] %v550, 128
    %635 = vxpose.xlu0.b32.cont [14/16] %v552, 128
    %636 = vxpose.xlu0.b32.cont [15/16] %v554, 128
    %637 = vxpose.xlu0.b32.end [16/16] %v556, 128
    %v638 = vpop.trf.xlu0
    %v639 = vpop.trf.xlu0
    %v640 = vpop.trf.xlu0
    %v641 = vpop.trf.xlu0
    %v642 = vpop.trf.xlu0
    %v643 = vpop.trf.xlu0
    %v644 = vpop.trf.xlu0
    %v645 = vpop.trf.xlu0
    %v646 = vpop.trf.xlu0
    %v647 = vpop.trf.xlu0
    %v648 = vpop.trf.xlu0
    %v649 = vpop.trf.xlu0
    %v650 = vpop.trf.xlu0
    %v651 = vpop.trf.xlu0
    %v652 = vpop.trf.xlu0
    %v653 = vpop.trf.xlu0
    %654 = vxpose.xlu0.b32.start [1/16] %v527, 128
    %655 = vxpose.xlu0.b32.cont [2/16] %v529, 128
    %656 = vxpose.xlu0.b32.cont [3/16] %v531, 128
    %657 = vxpose.xlu0.b32.cont [4/16] %v533, 128
    %658 = vxpose.xlu0.b32.cont [5/16] %v535, 128
    %659 = vxpose.xlu0.b32.cont [6/16] %v537, 128
    %660 = vxpose.xlu0.b32.cont [7/16] %v539, 128
    %661 = vxpose.xlu0.b32.cont [8/16] %v541, 128
    %662 = vxpose.xlu0.b32.cont [9/16] %v543, 128
    %663 = vxpose.xlu0.b32.cont [10/16] %v545, 128
    %664 = vxpose.xlu0.b32.cont [11/16] %v547, 128
    %665 = vxpose.xlu0.b32.cont [12/16] %v549, 128
    %666 = vxpose.xlu0.b32.cont [13/16] %v551, 128
    %667 = vxpose.xlu0.b32.cont [14/16] %v553, 128
    %668 = vxpose.xlu0.b32.cont [15/16] %v555, 128
    %669 = vxpose.xlu0.b32.end [16/16] %v557, 128
    %v670 = vpop.trf.xlu0
    %v671 = vpop.trf.xlu0
    %v672 = vpop.trf.xlu0
    %v673 = vpop.trf.xlu0
    %v674 = vpop.trf.xlu0
    %v675 = vpop.trf.xlu0
    %v676 = vpop.trf.xlu0
    %v677 = vpop.trf.xlu0
    %v678 = vpop.trf.xlu0
    %v679 = vpop.trf.xlu0
    %v680 = vpop.trf.xlu0
    %v681 = vpop.trf.xlu0
    %v682 = vpop.trf.xlu0
    %v683 = vpop.trf.xlu0
    %v684 = vpop.trf.xlu0
    %v685 = vpop.trf.xlu0
    %v686 = vadd.f32 %v494, %v574
    %v687 = vadd.f32 %v495, %v638
    %v688 = vadd.f32 %v496, %v575
    %v689 = vadd.f32 %v497, %v639
    %v690 = vadd.f32 %v498, %v576
    %v691 = vadd.f32 %v499, %v640
    %v692 = vadd.f32 %v500, %v577
    %v693 = vadd.f32 %v501, %v641
    %v694 = vadd.f32 %v502, %v578
    %v695 = vadd.f32 %v503, %v642
    %v696 = vadd.f32 %v504, %v579
    %v697 = vadd.f32 %v505, %v643
    %v698 = vadd.f32 %v506, %v580
    %v699 = vadd.f32 %v507, %v644
    %v700 = vadd.f32 %v508, %v581
    %v701 = vadd.f32 %v509, %v645
    %v702 = vadd.f32 %v510, %v582
    %v703 = vadd.f32 %v511, %v646
    %v704 = vadd.f32 %v512, %v583
    %v705 = vadd.f32 %v513, %v647
    %v706 = vadd.f32 %v514, %v584
    %v707 = vadd.f32 %v515, %v648
    %v708 = vadd.f32 %v516, %v585
    %v709 = vadd.f32 %v517, %v649
    %v710 = vadd.f32 %v518, %v586
    %v711 = vadd.f32 %v519, %v650
    %v712 = vadd.f32 %v520, %v587
    %v713 = vadd.f32 %v521, %v651
    %v714 = vadd.f32 %v522, %v588
    %v715 = vadd.f32 %v523, %v652
    %v716 = vadd.f32 %v524, %v589
    %v717 = vadd.f32 %v525, %v653
    %v718 = vadd.f32 %v526, %v606
    %v719 = vadd.f32 %v527, %v670
    %v720 = vadd.f32 %v528, %v607
    %v721 = vadd.f32 %v529, %v671
    %v722 = vadd.f32 %v530, %v608
    %v723 = vadd.f32 %v531, %v672
    %v724 = vadd.f32 %v532, %v609
    %v725 = vadd.f32 %v533, %v673
    %v726 = vadd.f32 %v534, %v610
    %v727 = vadd.f32 %v535, %v674
    %v728 = vadd.f32 %v536, %v611
    %v729 = vadd.f32 %v537, %v675
    %v730 = vadd.f32 %v538, %v612
    %v731 = vadd.f32 %v539, %v676
    %v732 = vadd.f32 %v540, %v613
    %v733 = vadd.f32 %v541, %v677
    %v734 = vadd.f32 %v542, %v614
    %v735 = vadd.f32 %v543, %v678
    %v736 = vadd.f32 %v544, %v615
    %v737 = vadd.f32 %v545, %v679
    %v738 = vadd.f32 %v546, %v616
    %v739 = vadd.f32 %v547, %v680
    %v740 = vadd.f32 %v548, %v617
    %v741 = vadd.f32 %v549, %v681
    %v742 = vadd.f32 %v550, %v618
    %v743 = vadd.f32 %v551, %v682
    %v744 = vadd.f32 %v552, %v619
    %v745 = vadd.f32 %v553, %v683
    %v746 = vadd.f32 %v554, %v620
    %v747 = vadd.f32 %v555, %v684
    %v748 = vadd.f32 %v556, %v621
    %v749 = vadd.f32 %v557, %v685
    %v750 = vmax.f32 %v686, 0.0
    %v751 = vmax.f32 %v687, 0.0
    %v752 = vmax.f32 %v688, 0.0
    %v753 = vmax.f32 %v689, 0.0
    %v754 = vmax.f32 %v690, 0.0
    %v755 = vmax.f32 %v691, 0.0
    %v756 = vmax.f32 %v692, 0.0
    %v757 = vmax.f32 %v693, 0.0
    %v758 = vmax.f32 %v694, 0.0
    %v759 = vmax.f32 %v695, 0.0
    %v760 = vmax.f32 %v696, 0.0
    %v761 = vmax.f32 %v697, 0.0
    %v762 = vmax.f32 %v698, 0.0
    %v763 = vmax.f32 %v699, 0.0
    %v764 = vmax.f32 %v700, 0.0
    %v765 = vmax.f32 %v701, 0.0
    %v766 = vmax.f32 %v702, 0.0
    %v767 = vmax.f32 %v703, 0.0
    %v768 = vmax.f32 %v704, 0.0
    %v769 = vmax.f32 %v705, 0.0
    %v770 = vmax.f32 %v706, 0.0
    %v771 = vmax.f32 %v707, 0.0
    %v772 = vmax.f32 %v708, 0.0
    %v773 = vmax.f32 %v709, 0.0
    %v774 = vmax.f32 %v710, 0.0
    %v775 = vmax.f32 %v711, 0.0
    %v776 = vmax.f32 %v712, 0.0
    %v777 = vmax.f32 %v713, 0.0
    %v778 = vmax.f32 %v714, 0.0
    %v779 = vmax.f32 %v715, 0.0
    %v780 = vmax.f32 %v716, 0.0
    %v781 = vmax.f32 %v717, 0.0
    %v782 = vmax.f32 %v718, 0.0
    %v783 = vmax.f32 %v719, 0.0
    %v784 = vmax.f32 %v720, 0.0
    %v785 = vmax.f32 %v721, 0.0
    %v786 = vmax.f32 %v722, 0.0
    %v787 = vmax.f32 %v723, 0.0
    %v788 = vmax.f32 %v724, 0.0
    %v789 = vmax.f32 %v725, 0.0
    %v790 = vmax.f32 %v726, 0.0
    %v791 = vmax.f32 %v727, 0.0
    %v792 = vmax.f32 %v728, 0.0
    %v793 = vmax.f32 %v729, 0.0
    %v794 = vmax.f32 %v730, 0.0
    %v795 = vmax.f32 %v731, 0.0
    %v796 = vmax.f32 %v732, 0.0
    %v797 = vmax.f32 %v733, 0.0
    %v798 = vmax.f32 %v734, 0.0
    %v799 = vmax.f32 %v735, 0.0
    %v800 = vmax.f32 %v736, 0.0
    %v801 = vmax.f32 %v737, 0.0
    %v802 = vmax.f32 %v738, 0.0
    %v803 = vmax.f32 %v739, 0.0
    %v804 = vmax.f32 %v740, 0.0
    %v805 = vmax.f32 %v741, 0.0
    %v806 = vmax.f32 %v742, 0.0
    %v807 = vmax.f32 %v743, 0.0
    %v808 = vmax.f32 %v744, 0.0
    %v809 = vmax.f32 %v745, 0.0
    %v810 = vmax.f32 %v746, 0.0
    %v811 = vmax.f32 %v747, 0.0
    %v812 = vmax.f32 %v748, 0.0
    %v813 = vmax.f32 %v749, 0.0
    %v814 = vrsqrt.pop %v750
    %v815 = vmul.f32 %v814, %v750
    %v816 = vmul.f32 %v815, %v814
    %v817 = vmul.f32 0.5, %v816
    %v818 = vsub.f32 1.5, %v817
    %v819 = vmul.f32 %v814, %v818
    %v820 = vmul.f32 %v750, %v819
    %vm821 = vcmp.eq.f32.partialorder %v750, inf
    %v822 = vsel %vm821, %v750, %v820
    %vm823 = vcmp.eq.f32.partialorder %v750, 0.0
    %v824 = vand.u32 %v750, 2147483648
    %v825 = vsel %vm823, %v824, %v822
    %v826 = vrsqrt.pop %v751
    %v827 = vmul.f32 %v826, %v751
    %v828 = vmul.f32 %v827, %v826
    %v829 = vmul.f32 0.5, %v828
    %v830 = vsub.f32 1.5, %v829
    %v831 = vmul.f32 %v826, %v830
    %v832 = vmul.f32 %v751, %v831
    %vm833 = vcmp.eq.f32.partialorder %v751, inf
    %v834 = vsel %vm833, %v751, %v832
    %vm835 = vcmp.eq.f32.partialorder %v751, 0.0
    %v836 = vand.u32 %v751, 2147483648
    %v837 = vsel %vm835, %v836, %v834
    %v838 = vrsqrt.pop %v752
    %v839 = vmul.f32 %v838, %v752
    %v840 = vmul.f32 %v839, %v838
    %v841 = vmul.f32 0.5, %v840
    %v842 = vsub.f32 1.5, %v841
    %v843 = vmul.f32 %v838, %v842
    %v844 = vmul.f32 %v752, %v843
    %vm845 = vcmp.eq.f32.partialorder %v752, inf
    %v846 = vsel %vm845, %v752, %v844
    %vm847 = vcmp.eq.f32.partialorder %v752, 0.0
    %v848 = vand.u32 %v752, 2147483648
    %v849 = vsel %vm847, %v848, %v846
    %v850 = vrsqrt.pop %v753
    %v851 = vmul.f32 %v850, %v753
    %v852 = vmul.f32 %v851, %v850
    %v853 = vmul.f32 0.5, %v852
    %v854 = vsub.f32 1.5, %v853
    %v855 = vmul.f32 %v850, %v854
    %v856 = vmul.f32 %v753, %v855
    %vm857 = vcmp.eq.f32.partialorder %v753, inf
    %v858 = vsel %vm857, %v753, %v856
    %vm859 = vcmp.eq.f32.partialorder %v753, 0.0
    %v860 = vand.u32 %v753, 2147483648
    %v861 = vsel %vm859, %v860, %v858
    %v862 = vrsqrt.pop %v754
    %v863 = vmul.f32 %v862, %v754
    %v864 = vmul.f32 %v863, %v862
    %v865 = vmul.f32 0.5, %v864
    %v866 = vsub.f32 1.5, %v865
    %v867 = vmul.f32 %v862, %v866
    %v868 = vmul.f32 %v754, %v867
    %vm869 = vcmp.eq.f32.partialorder %v754, inf
    %v870 = vsel %vm869, %v754, %v868
    %vm871 = vcmp.eq.f32.partialorder %v754, 0.0
    %v872 = vand.u32 %v754, 2147483648
    %v873 = vsel %vm871, %v872, %v870
    %v874 = vrsqrt.pop %v755
    %v875 = vmul.f32 %v874, %v755
    %v876 = vmul.f32 %v875, %v874
    %v877 = vmul.f32 0.5, %v876
    %v878 = vsub.f32 1.5, %v877
    %v879 = vmul.f32 %v874, %v878
    %v880 = vmul.f32 %v755, %v879
    %vm881 = vcmp.eq.f32.partialorder %v755, inf
    %v882 = vsel %vm881, %v755, %v880
    %vm883 = vcmp.eq.f32.partialorder %v755, 0.0
    %v884 = vand.u32 %v755, 2147483648
    %v885 = vsel %vm883, %v884, %v882
    %v886 = vrsqrt.pop %v756
    %v887 = vmul.f32 %v886, %v756
    %v888 = vmul.f32 %v887, %v886
    %v889 = vmul.f32 0.5, %v888
    %v890 = vsub.f32 1.5, %v889
    %v891 = vmul.f32 %v886, %v890
    %v892 = vmul.f32 %v756, %v891
    %vm893 = vcmp.eq.f32.partialorder %v756, inf
    %v894 = vsel %vm893, %v756, %v892
    %vm895 = vcmp.eq.f32.partialorder %v756, 0.0
    %v896 = vand.u32 %v756, 2147483648
    %v897 = vsel %vm895, %v896, %v894
    %v898 = vrsqrt.pop %v757
    %v899 = vmul.f32 %v898, %v757
    %v900 = vmul.f32 %v899, %v898
    %v901 = vmul.f32 0.5, %v900
    %v902 = vsub.f32 1.5, %v901
    %v903 = vmul.f32 %v898, %v902
    %v904 = vmul.f32 %v757, %v903
    %vm905 = vcmp.eq.f32.partialorder %v757, inf
    %v906 = vsel %vm905, %v757, %v904
    %vm907 = vcmp.eq.f32.partialorder %v757, 0.0
    %v908 = vand.u32 %v757, 2147483648
    %v909 = vsel %vm907, %v908, %v906
    %v910 = vrsqrt.pop %v758
    %v911 = vmul.f32 %v910, %v758
    %v912 = vmul.f32 %v911, %v910
    %v913 = vmul.f32 0.5, %v912
    %v914 = vsub.f32 1.5, %v913
    %v915 = vmul.f32 %v910, %v914
    %v916 = vmul.f32 %v758, %v915
    %vm917 = vcmp.eq.f32.partialorder %v758, inf
    %v918 = vsel %vm917, %v758, %v916
    %vm919 = vcmp.eq.f32.partialorder %v758, 0.0
    %v920 = vand.u32 %v758, 2147483648
    %v921 = vsel %vm919, %v920, %v918
    %v922 = vrsqrt.pop %v759
    %v923 = vmul.f32 %v922, %v759
    %v924 = vmul.f32 %v923, %v922
    %v925 = vmul.f32 0.5, %v924
    %v926 = vsub.f32 1.5, %v925
    %v927 = vmul.f32 %v922, %v926
    %v928 = vmul.f32 %v759, %v927
    %vm929 = vcmp.eq.f32.partialorder %v759, inf
    %v930 = vsel %vm929, %v759, %v928
    %vm931 = vcmp.eq.f32.partialorder %v759, 0.0
    %v932 = vand.u32 %v759, 2147483648
    %v933 = vsel %vm931, %v932, %v930
    %v934 = vrsqrt.pop %v760
    %v935 = vmul.f32 %v934, %v760
    %v936 = vmul.f32 %v935, %v934
    %v937 = vmul.f32 0.5, %v936
    %v938 = vsub.f32 1.5, %v937
    %v939 = vmul.f32 %v934, %v938
    %v940 = vmul.f32 %v760, %v939
    %vm941 = vcmp.eq.f32.partialorder %v760, inf
    %v942 = vsel %vm941, %v760, %v940
    %vm943 = vcmp.eq.f32.partialorder %v760, 0.0
    %v944 = vand.u32 %v760, 2147483648
    %v945 = vsel %vm943, %v944, %v942
    %v946 = vrsqrt.pop %v761
    %v947 = vmul.f32 %v946, %v761
    %v948 = vmul.f32 %v947, %v946
    %v949 = vmul.f32 0.5, %v948
    %v950 = vsub.f32 1.5, %v949
    %v951 = vmul.f32 %v946, %v950
    %v952 = vmul.f32 %v761, %v951
    %vm953 = vcmp.eq.f32.partialorder %v761, inf
    %v954 = vsel %vm953, %v761, %v952
    %vm955 = vcmp.eq.f32.partialorder %v761, 0.0
    %v956 = vand.u32 %v761, 2147483648
    %v957 = vsel %vm955, %v956, %v954
    %v958 = vrsqrt.pop %v762
    %v959 = vmul.f32 %v958, %v762
    %v960 = vmul.f32 %v959, %v958
    %v961 = vmul.f32 0.5, %v960
    %v962 = vsub.f32 1.5, %v961
    %v963 = vmul.f32 %v958, %v962
    %v964 = vmul.f32 %v762, %v963
    %vm965 = vcmp.eq.f32.partialorder %v762, inf
    %v966 = vsel %vm965, %v762, %v964
    %vm967 = vcmp.eq.f32.partialorder %v762, 0.0
    %v968 = vand.u32 %v762, 2147483648
    %v969 = vsel %vm967, %v968, %v966
    %v970 = vrsqrt.pop %v763
    %v971 = vmul.f32 %v970, %v763
    %v972 = vmul.f32 %v971, %v970
    %v973 = vmul.f32 0.5, %v972
    %v974 = vsub.f32 1.5, %v973
    %v975 = vmul.f32 %v970, %v974
    %v976 = vmul.f32 %v763, %v975
    %vm977 = vcmp.eq.f32.partialorder %v763, inf
    %v978 = vsel %vm977, %v763, %v976
    %vm979 = vcmp.eq.f32.partialorder %v763, 0.0
    %v980 = vand.u32 %v763, 2147483648
    %v981 = vsel %vm979, %v980, %v978
    %v982 = vrsqrt.pop %v764
    %v983 = vmul.f32 %v982, %v764
    %v984 = vmul.f32 %v983, %v982
    %v985 = vmul.f32 0.5, %v984
    %v986 = vsub.f32 1.5, %v985
    %v987 = vmul.f32 %v982, %v986
    %v988 = vmul.f32 %v764, %v987
    %vm989 = vcmp.eq.f32.partialorder %v764, inf
    %v990 = vsel %vm989, %v764, %v988
    %vm991 = vcmp.eq.f32.partialorder %v764, 0.0
    %v992 = vand.u32 %v764, 2147483648
    %v993 = vsel %vm991, %v992, %v990
    %v994 = vrsqrt.pop %v765
    %v995 = vmul.f32 %v994, %v765
    %v996 = vmul.f32 %v995, %v994
    %v997 = vmul.f32 0.5, %v996
    %v998 = vsub.f32 1.5, %v997
    %v999 = vmul.f32 %v994, %v998
    %v1000 = vmul.f32 %v765, %v999
    %vm1001 = vcmp.eq.f32.partialorder %v765, inf
    %v1002 = vsel %vm1001, %v765, %v1000
    %vm1003 = vcmp.eq.f32.partialorder %v765, 0.0
    %v1004 = vand.u32 %v765, 2147483648
    %v1005 = vsel %vm1003, %v1004, %v1002
    %v1006 = vrsqrt.pop %v766
    %v1007 = vmul.f32 %v1006, %v766
    %v1008 = vmul.f32 %v1007, %v1006
    %v1009 = vmul.f32 0.5, %v1008
    %v1010 = vsub.f32 1.5, %v1009
    %v1011 = vmul.f32 %v1006, %v1010
    %v1012 = vmul.f32 %v766, %v1011
    %vm1013 = vcmp.eq.f32.partialorder %v766, inf
    %v1014 = vsel %vm1013, %v766, %v1012
    %vm1015 = vcmp.eq.f32.partialorder %v766, 0.0
    %v1016 = vand.u32 %v766, 2147483648
    %v1017 = vsel %vm1015, %v1016, %v1014
    %v1018 = vrsqrt.pop %v767
    %v1019 = vmul.f32 %v1018, %v767
    %v1020 = vmul.f32 %v1019, %v1018
    %v1021 = vmul.f32 0.5, %v1020
    %v1022 = vsub.f32 1.5, %v1021
    %v1023 = vmul.f32 %v1018, %v1022
    %v1024 = vmul.f32 %v767, %v1023
    %vm1025 = vcmp.eq.f32.partialorder %v767, inf
    %v1026 = vsel %vm1025, %v767, %v1024
    %vm1027 = vcmp.eq.f32.partialorder %v767, 0.0
    %v1028 = vand.u32 %v767, 2147483648
    %v1029 = vsel %vm1027, %v1028, %v1026
    %v1030 = vrsqrt.pop %v768
    %v1031 = vmul.f32 %v1030, %v768
    %v1032 = vmul.f32 %v1031, %v1030
    %v1033 = vmul.f32 0.5, %v1032
    %v1034 = vsub.f32 1.5, %v1033
    %v1035 = vmul.f32 %v1030, %v1034
    %v1036 = vmul.f32 %v768, %v1035
    %vm1037 = vcmp.eq.f32.partialorder %v768, inf
    %v1038 = vsel %vm1037, %v768, %v1036
    %vm1039 = vcmp.eq.f32.partialorder %v768, 0.0
    %v1040 = vand.u32 %v768, 2147483648
    %v1041 = vsel %vm1039, %v1040, %v1038
    %v1042 = vrsqrt.pop %v769
    %v1043 = vmul.f32 %v1042, %v769
    %v1044 = vmul.f32 %v1043, %v1042
    %v1045 = vmul.f32 0.5, %v1044
    %v1046 = vsub.f32 1.5, %v1045
    %v1047 = vmul.f32 %v1042, %v1046
    %v1048 = vmul.f32 %v769, %v1047
    %vm1049 = vcmp.eq.f32.partialorder %v769, inf
    %v1050 = vsel %vm1049, %v769, %v1048
    %vm1051 = vcmp.eq.f32.partialorder %v769, 0.0
    %v1052 = vand.u32 %v769, 2147483648
    %v1053 = vsel %vm1051, %v1052, %v1050
    %v1054 = vrsqrt.pop %v770
    %v1055 = vmul.f32 %v1054, %v770
    %v1056 = vmul.f32 %v1055, %v1054
    %v1057 = vmul.f32 0.5, %v1056
    %v1058 = vsub.f32 1.5, %v1057
    %v1059 = vmul.f32 %v1054, %v1058
    %v1060 = vmul.f32 %v770, %v1059
    %vm1061 = vcmp.eq.f32.partialorder %v770, inf
    %v1062 = vsel %vm1061, %v770, %v1060
    %vm1063 = vcmp.eq.f32.partialorder %v770, 0.0
    %v1064 = vand.u32 %v770, 2147483648
    %v1065 = vsel %vm1063, %v1064, %v1062
    %v1066 = vrsqrt.pop %v771
    %v1067 = vmul.f32 %v1066, %v771
    %v1068 = vmul.f32 %v1067, %v1066
    %v1069 = vmul.f32 0.5, %v1068
    %v1070 = vsub.f32 1.5, %v1069
    %v1071 = vmul.f32 %v1066, %v1070
    %v1072 = vmul.f32 %v771, %v1071
    %vm1073 = vcmp.eq.f32.partialorder %v771, inf
    %v1074 = vsel %vm1073, %v771, %v1072
    %vm1075 = vcmp.eq.f32.partialorder %v771, 0.0
    %v1076 = vand.u32 %v771, 2147483648
    %v1077 = vsel %vm1075, %v1076, %v1074
    %v1078 = vrsqrt.pop %v772
    %v1079 = vmul.f32 %v1078, %v772
    %v1080 = vmul.f32 %v1079, %v1078
    %v1081 = vmul.f32 0.5, %v1080
    %v1082 = vsub.f32 1.5, %v1081
    %v1083 = vmul.f32 %v1078, %v1082
    %v1084 = vmul.f32 %v772, %v1083
    %vm1085 = vcmp.eq.f32.partialorder %v772, inf
    %v1086 = vsel %vm1085, %v772, %v1084
    %vm1087 = vcmp.eq.f32.partialorder %v772, 0.0
    %v1088 = vand.u32 %v772, 2147483648
    %v1089 = vsel %vm1087, %v1088, %v1086
    %v1090 = vrsqrt.pop %v773
    %v1091 = vmul.f32 %v1090, %v773
    %v1092 = vmul.f32 %v1091, %v1090
    %v1093 = vmul.f32 0.5, %v1092
    %v1094 = vsub.f32 1.5, %v1093
    %v1095 = vmul.f32 %v1090, %v1094
    %v1096 = vmul.f32 %v773, %v1095
    %vm1097 = vcmp.eq.f32.partialorder %v773, inf
    %v1098 = vsel %vm1097, %v773, %v1096
    %vm1099 = vcmp.eq.f32.partialorder %v773, 0.0
    %v1100 = vand.u32 %v773, 2147483648
    %v1101 = vsel %vm1099, %v1100, %v1098
    %v1102 = vrsqrt.pop %v774
    %v1103 = vmul.f32 %v1102, %v774
    %v1104 = vmul.f32 %v1103, %v1102
    %v1105 = vmul.f32 0.5, %v1104
    %v1106 = vsub.f32 1.5, %v1105
    %v1107 = vmul.f32 %v1102, %v1106
    %v1108 = vmul.f32 %v774, %v1107
    %vm1109 = vcmp.eq.f32.partialorder %v774, inf
    %v1110 = vsel %vm1109, %v774, %v1108
    %vm1111 = vcmp.eq.f32.partialorder %v774, 0.0
    %v1112 = vand.u32 %v774, 2147483648
    %v1113 = vsel %vm1111, %v1112, %v1110
    %v1114 = vrsqrt.pop %v775
    %v1115 = vmul.f32 %v1114, %v775
    %v1116 = vmul.f32 %v1115, %v1114
    %v1117 = vmul.f32 0.5, %v1116
    %v1118 = vsub.f32 1.5, %v1117
    %v1119 = vmul.f32 %v1114, %v1118
    %v1120 = vmul.f32 %v775, %v1119
    %vm1121 = vcmp.eq.f32.partialorder %v775, inf
    %v1122 = vsel %vm1121, %v775, %v1120
    %vm1123 = vcmp.eq.f32.partialorder %v775, 0.0
    %v1124 = vand.u32 %v775, 2147483648
    %v1125 = vsel %vm1123, %v1124, %v1122
    %v1126 = vrsqrt.pop %v776
    %v1127 = vmul.f32 %v1126, %v776
    %v1128 = vmul.f32 %v1127, %v1126
    %v1129 = vmul.f32 0.5, %v1128
    %v1130 = vsub.f32 1.5, %v1129
    %v1131 = vmul.f32 %v1126, %v1130
    %v1132 = vmul.f32 %v776, %v1131
    %vm1133 = vcmp.eq.f32.partialorder %v776, inf
    %v1134 = vsel %vm1133, %v776, %v1132
    %vm1135 = vcmp.eq.f32.partialorder %v776, 0.0
    %v1136 = vand.u32 %v776, 2147483648
    %v1137 = vsel %vm1135, %v1136, %v1134
    %v1138 = vrsqrt.pop %v777
    %v1139 = vmul.f32 %v1138, %v777
    %v1140 = vmul.f32 %v1139, %v1138
    %v1141 = vmul.f32 0.5, %v1140
    %v1142 = vsub.f32 1.5, %v1141
    %v1143 = vmul.f32 %v1138, %v1142
    %v1144 = vmul.f32 %v777, %v1143
    %vm1145 = vcmp.eq.f32.partialorder %v777, inf
    %v1146 = vsel %vm1145, %v777, %v1144
    %vm1147 = vcmp.eq.f32.partialorder %v777, 0.0
    %v1148 = vand.u32 %v777, 2147483648
    %v1149 = vsel %vm1147, %v1148, %v1146
    %v1150 = vrsqrt.pop %v778
    %v1151 = vmul.f32 %v1150, %v778
    %v1152 = vmul.f32 %v1151, %v1150
    %v1153 = vmul.f32 0.5, %v1152
    %v1154 = vsub.f32 1.5, %v1153
    %v1155 = vmul.f32 %v1150, %v1154
    %v1156 = vmul.f32 %v778, %v1155
    %vm1157 = vcmp.eq.f32.partialorder %v778, inf
    %v1158 = vsel %vm1157, %v778, %v1156
    %vm1159 = vcmp.eq.f32.partialorder %v778, 0.0
    %v1160 = vand.u32 %v778, 2147483648
    %v1161 = vsel %vm1159, %v1160, %v1158
    %v1162 = vrsqrt.pop %v779
    %v1163 = vmul.f32 %v1162, %v779
    %v1164 = vmul.f32 %v1163, %v1162
    %v1165 = vmul.f32 0.5, %v1164
    %v1166 = vsub.f32 1.5, %v1165
    %v1167 = vmul.f32 %v1162, %v1166
    %v1168 = vmul.f32 %v779, %v1167
    %vm1169 = vcmp.eq.f32.partialorder %v779, inf
    %v1170 = vsel %vm1169, %v779, %v1168
    %vm1171 = vcmp.eq.f32.partialorder %v779, 0.0
    %v1172 = vand.u32 %v779, 2147483648
    %v1173 = vsel %vm1171, %v1172, %v1170
    %v1174 = vrsqrt.pop %v780
    %v1175 = vmul.f32 %v1174, %v780
    %v1176 = vmul.f32 %v1175, %v1174
    %v1177 = vmul.f32 0.5, %v1176
    %v1178 = vsub.f32 1.5, %v1177
    %v1179 = vmul.f32 %v1174, %v1178
    %v1180 = vmul.f32 %v780, %v1179
    %vm1181 = vcmp.eq.f32.partialorder %v780, inf
    %v1182 = vsel %vm1181, %v780, %v1180
    %vm1183 = vcmp.eq.f32.partialorder %v780, 0.0
    %v1184 = vand.u32 %v780, 2147483648
    %v1185 = vsel %vm1183, %v1184, %v1182
    %v1186 = vrsqrt.pop %v781
    %v1187 = vmul.f32 %v1186, %v781
    %v1188 = vmul.f32 %v1187, %v1186
    %v1189 = vmul.f32 0.5, %v1188
    %v1190 = vsub.f32 1.5, %v1189
    %v1191 = vmul.f32 %v1186, %v1190
    %v1192 = vmul.f32 %v781, %v1191
    %vm1193 = vcmp.eq.f32.partialorder %v781, inf
    %v1194 = vsel %vm1193, %v781, %v1192
    %vm1195 = vcmp.eq.f32.partialorder %v781, 0.0
    %v1196 = vand.u32 %v781, 2147483648
    %v1197 = vsel %vm1195, %v1196, %v1194
    %v1198 = vrsqrt.pop %v782
    %v1199 = vmul.f32 %v1198, %v782
    %v1200 = vmul.f32 %v1199, %v1198
    %v1201 = vmul.f32 0.5, %v1200
    %v1202 = vsub.f32 1.5, %v1201
    %v1203 = vmul.f32 %v1198, %v1202
    %v1204 = vmul.f32 %v782, %v1203
    %vm1205 = vcmp.eq.f32.partialorder %v782, inf
    %v1206 = vsel %vm1205, %v782, %v1204
    %vm1207 = vcmp.eq.f32.partialorder %v782, 0.0
    %v1208 = vand.u32 %v782, 2147483648
    %v1209 = vsel %vm1207, %v1208, %v1206
    %v1210 = vrsqrt.pop %v783
    %v1211 = vmul.f32 %v1210, %v783
    %v1212 = vmul.f32 %v1211, %v1210
    %v1213 = vmul.f32 0.5, %v1212
    %v1214 = vsub.f32 1.5, %v1213
    %v1215 = vmul.f32 %v1210, %v1214
    %v1216 = vmul.f32 %v783, %v1215
    %vm1217 = vcmp.eq.f32.partialorder %v783, inf
    %v1218 = vsel %vm1217, %v783, %v1216
    %vm1219 = vcmp.eq.f32.partialorder %v783, 0.0
    %v1220 = vand.u32 %v783, 2147483648
    %v1221 = vsel %vm1219, %v1220, %v1218
    %v1222 = vrsqrt.pop %v784
    %v1223 = vmul.f32 %v1222, %v784
    %v1224 = vmul.f32 %v1223, %v1222
    %v1225 = vmul.f32 0.5, %v1224
    %v1226 = vsub.f32 1.5, %v1225
    %v1227 = vmul.f32 %v1222, %v1226
    %v1228 = vmul.f32 %v784, %v1227
    %vm1229 = vcmp.eq.f32.partialorder %v784, inf
    %v1230 = vsel %vm1229, %v784, %v1228
    %vm1231 = vcmp.eq.f32.partialorder %v784, 0.0
    %v1232 = vand.u32 %v784, 2147483648
    %v1233 = vsel %vm1231, %v1232, %v1230
    %v1234 = vrsqrt.pop %v785
    %v1235 = vmul.f32 %v1234, %v785
    %v1236 = vmul.f32 %v1235, %v1234
    %v1237 = vmul.f32 0.5, %v1236
    %v1238 = vsub.f32 1.5, %v1237
    %v1239 = vmul.f32 %v1234, %v1238
    %v1240 = vmul.f32 %v785, %v1239
    %vm1241 = vcmp.eq.f32.partialorder %v785, inf
    %v1242 = vsel %vm1241, %v785, %v1240
    %vm1243 = vcmp.eq.f32.partialorder %v785, 0.0
    %v1244 = vand.u32 %v785, 2147483648
    %v1245 = vsel %vm1243, %v1244, %v1242
    %v1246 = vrsqrt.pop %v786
    %v1247 = vmul.f32 %v1246, %v786
    %v1248 = vmul.f32 %v1247, %v1246
    %v1249 = vmul.f32 0.5, %v1248
    %v1250 = vsub.f32 1.5, %v1249
    %v1251 = vmul.f32 %v1246, %v1250
    %v1252 = vmul.f32 %v786, %v1251
    %vm1253 = vcmp.eq.f32.partialorder %v786, inf
    %v1254 = vsel %vm1253, %v786, %v1252
    %vm1255 = vcmp.eq.f32.partialorder %v786, 0.0
    %v1256 = vand.u32 %v786, 2147483648
    %v1257 = vsel %vm1255, %v1256, %v1254
    %v1258 = vrsqrt.pop %v787
    %v1259 = vmul.f32 %v1258, %v787
    %v1260 = vmul.f32 %v1259, %v1258
    %v1261 = vmul.f32 0.5, %v1260
    %v1262 = vsub.f32 1.5, %v1261
    %v1263 = vmul.f32 %v1258, %v1262
    %v1264 = vmul.f32 %v787, %v1263
    %vm1265 = vcmp.eq.f32.partialorder %v787, inf
    %v1266 = vsel %vm1265, %v787, %v1264
    %vm1267 = vcmp.eq.f32.partialorder %v787, 0.0
    %v1268 = vand.u32 %v787, 2147483648
    %v1269 = vsel %vm1267, %v1268, %v1266
    %v1270 = vrsqrt.pop %v788
    %v1271 = vmul.f32 %v1270, %v788
    %v1272 = vmul.f32 %v1271, %v1270
    %v1273 = vmul.f32 0.5, %v1272
    %v1274 = vsub.f32 1.5, %v1273
    %v1275 = vmul.f32 %v1270, %v1274
    %v1276 = vmul.f32 %v788, %v1275
    %vm1277 = vcmp.eq.f32.partialorder %v788, inf
    %v1278 = vsel %vm1277, %v788, %v1276
    %vm1279 = vcmp.eq.f32.partialorder %v788, 0.0
    %v1280 = vand.u32 %v788, 2147483648
    %v1281 = vsel %vm1279, %v1280, %v1278
    %v1282 = vrsqrt.pop %v789
    %v1283 = vmul.f32 %v1282, %v789
    %v1284 = vmul.f32 %v1283, %v1282
    %v1285 = vmul.f32 0.5, %v1284
    %v1286 = vsub.f32 1.5, %v1285
    %v1287 = vmul.f32 %v1282, %v1286
    %v1288 = vmul.f32 %v789, %v1287
    %vm1289 = vcmp.eq.f32.partialorder %v789, inf
    %v1290 = vsel %vm1289, %v789, %v1288
    %vm1291 = vcmp.eq.f32.partialorder %v789, 0.0
    %v1292 = vand.u32 %v789, 2147483648
    %v1293 = vsel %vm1291, %v1292, %v1290
    %v1294 = vrsqrt.pop %v790
    %v1295 = vmul.f32 %v1294, %v790
    %v1296 = vmul.f32 %v1295, %v1294
    %v1297 = vmul.f32 0.5, %v1296
    %v1298 = vsub.f32 1.5, %v1297
    %v1299 = vmul.f32 %v1294, %v1298
    %v1300 = vmul.f32 %v790, %v1299
    %vm1301 = vcmp.eq.f32.partialorder %v790, inf
    %v1302 = vsel %vm1301, %v790, %v1300
    %vm1303 = vcmp.eq.f32.partialorder %v790, 0.0
    %v1304 = vand.u32 %v790, 2147483648
    %v1305 = vsel %vm1303, %v1304, %v1302
    %v1306 = vrsqrt.pop %v791
    %v1307 = vmul.f32 %v1306, %v791
    %v1308 = vmul.f32 %v1307, %v1306
    %v1309 = vmul.f32 0.5, %v1308
    %v1310 = vsub.f32 1.5, %v1309
    %v1311 = vmul.f32 %v1306, %v1310
    %v1312 = vmul.f32 %v791, %v1311
    %vm1313 = vcmp.eq.f32.partialorder %v791, inf
    %v1314 = vsel %vm1313, %v791, %v1312
    %vm1315 = vcmp.eq.f32.partialorder %v791, 0.0
    %v1316 = vand.u32 %v791, 2147483648
    %v1317 = vsel %vm1315, %v1316, %v1314
    %v1318 = vrsqrt.pop %v792
    %v1319 = vmul.f32 %v1318, %v792
    %v1320 = vmul.f32 %v1319, %v1318
    %v1321 = vmul.f32 0.5, %v1320
    %v1322 = vsub.f32 1.5, %v1321
    %v1323 = vmul.f32 %v1318, %v1322
    %v1324 = vmul.f32 %v792, %v1323
    %vm1325 = vcmp.eq.f32.partialorder %v792, inf
    %v1326 = vsel %vm1325, %v792, %v1324
    %vm1327 = vcmp.eq.f32.partialorder %v792, 0.0
    %v1328 = vand.u32 %v792, 2147483648
    %v1329 = vsel %vm1327, %v1328, %v1326
    %v1330 = vrsqrt.pop %v793
    %v1331 = vmul.f32 %v1330, %v793
    %v1332 = vmul.f32 %v1331, %v1330
    %v1333 = vmul.f32 0.5, %v1332
    %v1334 = vsub.f32 1.5, %v1333
    %v1335 = vmul.f32 %v1330, %v1334
    %v1336 = vmul.f32 %v793, %v1335
    %vm1337 = vcmp.eq.f32.partialorder %v793, inf
    %v1338 = vsel %vm1337, %v793, %v1336
    %vm1339 = vcmp.eq.f32.partialorder %v793, 0.0
    %v1340 = vand.u32 %v793, 2147483648
    %v1341 = vsel %vm1339, %v1340, %v1338
    %v1342 = vrsqrt.pop %v794
    %v1343 = vmul.f32 %v1342, %v794
    %v1344 = vmul.f32 %v1343, %v1342
    %v1345 = vmul.f32 0.5, %v1344
    %v1346 = vsub.f32 1.5, %v1345
    %v1347 = vmul.f32 %v1342, %v1346
    %v1348 = vmul.f32 %v794, %v1347
    %vm1349 = vcmp.eq.f32.partialorder %v794, inf
    %v1350 = vsel %vm1349, %v794, %v1348
    %vm1351 = vcmp.eq.f32.partialorder %v794, 0.0
    %v1352 = vand.u32 %v794, 2147483648
    %v1353 = vsel %vm1351, %v1352, %v1350
    %v1354 = vrsqrt.pop %v795
    %v1355 = vmul.f32 %v1354, %v795
    %v1356 = vmul.f32 %v1355, %v1354
    %v1357 = vmul.f32 0.5, %v1356
    %v1358 = vsub.f32 1.5, %v1357
    %v1359 = vmul.f32 %v1354, %v1358
    %v1360 = vmul.f32 %v795, %v1359
    %vm1361 = vcmp.eq.f32.partialorder %v795, inf
    %v1362 = vsel %vm1361, %v795, %v1360
    %vm1363 = vcmp.eq.f32.partialorder %v795, 0.0
    %v1364 = vand.u32 %v795, 2147483648
    %v1365 = vsel %vm1363, %v1364, %v1362
    %v1366 = vrsqrt.pop %v796
    %v1367 = vmul.f32 %v1366, %v796
    %v1368 = vmul.f32 %v1367, %v1366
    %v1369 = vmul.f32 0.5, %v1368
    %v1370 = vsub.f32 1.5, %v1369
    %v1371 = vmul.f32 %v1366, %v1370
    %v1372 = vmul.f32 %v796, %v1371
    %vm1373 = vcmp.eq.f32.partialorder %v796, inf
    %v1374 = vsel %vm1373, %v796, %v1372
    %vm1375 = vcmp.eq.f32.partialorder %v796, 0.0
    %v1376 = vand.u32 %v796, 2147483648
    %v1377 = vsel %vm1375, %v1376, %v1374
    %v1378 = vrsqrt.pop %v797
    %v1379 = vmul.f32 %v1378, %v797
    %v1380 = vmul.f32 %v1379, %v1378
    %v1381 = vmul.f32 0.5, %v1380
    %v1382 = vsub.f32 1.5, %v1381
    %v1383 = vmul.f32 %v1378, %v1382
    %v1384 = vmul.f32 %v797, %v1383
    %vm1385 = vcmp.eq.f32.partialorder %v797, inf
    %v1386 = vsel %vm1385, %v797, %v1384
    %vm1387 = vcmp.eq.f32.partialorder %v797, 0.0
    %v1388 = vand.u32 %v797, 2147483648
    %v1389 = vsel %vm1387, %v1388, %v1386
    %v1390 = vrsqrt.pop %v798
    %v1391 = vmul.f32 %v1390, %v798
    %v1392 = vmul.f32 %v1391, %v1390
    %v1393 = vmul.f32 0.5, %v1392
    %v1394 = vsub.f32 1.5, %v1393
    %v1395 = vmul.f32 %v1390, %v1394
    %v1396 = vmul.f32 %v798, %v1395
    %vm1397 = vcmp.eq.f32.partialorder %v798, inf
    %v1398 = vsel %vm1397, %v798, %v1396
    %vm1399 = vcmp.eq.f32.partialorder %v798, 0.0
    %v1400 = vand.u32 %v798, 2147483648
    %v1401 = vsel %vm1399, %v1400, %v1398
    %v1402 = vrsqrt.pop %v799
    %v1403 = vmul.f32 %v1402, %v799
    %v1404 = vmul.f32 %v1403, %v1402
    %v1405 = vmul.f32 0.5, %v1404
    %v1406 = vsub.f32 1.5, %v1405
    %v1407 = vmul.f32 %v1402, %v1406
    %v1408 = vmul.f32 %v799, %v1407
    %vm1409 = vcmp.eq.f32.partialorder %v799, inf
    %v1410 = vsel %vm1409, %v799, %v1408
    %vm1411 = vcmp.eq.f32.partialorder %v799, 0.0
    %v1412 = vand.u32 %v799, 2147483648
    %v1413 = vsel %vm1411, %v1412, %v1410
    %v1414 = vrsqrt.pop %v800
    %v1415 = vmul.f32 %v1414, %v800
    %v1416 = vmul.f32 %v1415, %v1414
    %v1417 = vmul.f32 0.5, %v1416
    %v1418 = vsub.f32 1.5, %v1417
    %v1419 = vmul.f32 %v1414, %v1418
    %v1420 = vmul.f32 %v800, %v1419
    %vm1421 = vcmp.eq.f32.partialorder %v800, inf
    %v1422 = vsel %vm1421, %v800, %v1420
    %vm1423 = vcmp.eq.f32.partialorder %v800, 0.0
    %v1424 = vand.u32 %v800, 2147483648
    %v1425 = vsel %vm1423, %v1424, %v1422
    %v1426 = vrsqrt.pop %v801
    %v1427 = vmul.f32 %v1426, %v801
    %v1428 = vmul.f32 %v1427, %v1426
    %v1429 = vmul.f32 0.5, %v1428
    %v1430 = vsub.f32 1.5, %v1429
    %v1431 = vmul.f32 %v1426, %v1430
    %v1432 = vmul.f32 %v801, %v1431
    %vm1433 = vcmp.eq.f32.partialorder %v801, inf
    %v1434 = vsel %vm1433, %v801, %v1432
    %vm1435 = vcmp.eq.f32.partialorder %v801, 0.0
    %v1436 = vand.u32 %v801, 2147483648
    %v1437 = vsel %vm1435, %v1436, %v1434
    %v1438 = vrsqrt.pop %v802
    %v1439 = vmul.f32 %v1438, %v802
    %v1440 = vmul.f32 %v1439, %v1438
    %v1441 = vmul.f32 0.5, %v1440
    %v1442 = vsub.f32 1.5, %v1441
    %v1443 = vmul.f32 %v1438, %v1442
    %v1444 = vmul.f32 %v802, %v1443
    %vm1445 = vcmp.eq.f32.partialorder %v802, inf
    %v1446 = vsel %vm1445, %v802, %v1444
    %vm1447 = vcmp.eq.f32.partialorder %v802, 0.0
    %v1448 = vand.u32 %v802, 2147483648
    %v1449 = vsel %vm1447, %v1448, %v1446
    %v1450 = vrsqrt.pop %v803
    %v1451 = vmul.f32 %v1450, %v803
    %v1452 = vmul.f32 %v1451, %v1450
    %v1453 = vmul.f32 0.5, %v1452
    %v1454 = vsub.f32 1.5, %v1453
    %v1455 = vmul.f32 %v1450, %v1454
    %v1456 = vmul.f32 %v803, %v1455
    %vm1457 = vcmp.eq.f32.partialorder %v803, inf
    %v1458 = vsel %vm1457, %v803, %v1456
    %vm1459 = vcmp.eq.f32.partialorder %v803, 0.0
    %v1460 = vand.u32 %v803, 2147483648
    %v1461 = vsel %vm1459, %v1460, %v1458
    %v1462 = vrsqrt.pop %v804
    %v1463 = vmul.f32 %v1462, %v804
    %v1464 = vmul.f32 %v1463, %v1462
    %v1465 = vmul.f32 0.5, %v1464
    %v1466 = vsub.f32 1.5, %v1465
    %v1467 = vmul.f32 %v1462, %v1466
    %v1468 = vmul.f32 %v804, %v1467
    %vm1469 = vcmp.eq.f32.partialorder %v804, inf
    %v1470 = vsel %vm1469, %v804, %v1468
    %vm1471 = vcmp.eq.f32.partialorder %v804, 0.0
    %v1472 = vand.u32 %v804, 2147483648
    %v1473 = vsel %vm1471, %v1472, %v1470
    %v1474 = vrsqrt.pop %v805
    %v1475 = vmul.f32 %v1474, %v805
    %v1476 = vmul.f32 %v1475, %v1474
    %v1477 = vmul.f32 0.5, %v1476
    %v1478 = vsub.f32 1.5, %v1477
    %v1479 = vmul.f32 %v1474, %v1478
    %v1480 = vmul.f32 %v805, %v1479
    %vm1481 = vcmp.eq.f32.partialorder %v805, inf
    %v1482 = vsel %vm1481, %v805, %v1480
    %vm1483 = vcmp.eq.f32.partialorder %v805, 0.0
    %v1484 = vand.u32 %v805, 2147483648
    %v1485 = vsel %vm1483, %v1484, %v1482
    %v1486 = vrsqrt.pop %v806
    %v1487 = vmul.f32 %v1486, %v806
    %v1488 = vmul.f32 %v1487, %v1486
    %v1489 = vmul.f32 0.5, %v1488
    %v1490 = vsub.f32 1.5, %v1489
    %v1491 = vmul.f32 %v1486, %v1490
    %v1492 = vmul.f32 %v806, %v1491
    %vm1493 = vcmp.eq.f32.partialorder %v806, inf
    %v1494 = vsel %vm1493, %v806, %v1492
    %vm1495 = vcmp.eq.f32.partialorder %v806, 0.0
    %v1496 = vand.u32 %v806, 2147483648
    %v1497 = vsel %vm1495, %v1496, %v1494
    %v1498 = vrsqrt.pop %v807
    %v1499 = vmul.f32 %v1498, %v807
    %v1500 = vmul.f32 %v1499, %v1498
    %v1501 = vmul.f32 0.5, %v1500
    %v1502 = vsub.f32 1.5, %v1501
    %v1503 = vmul.f32 %v1498, %v1502
    %v1504 = vmul.f32 %v807, %v1503
    %vm1505 = vcmp.eq.f32.partialorder %v807, inf
    %v1506 = vsel %vm1505, %v807, %v1504
    %vm1507 = vcmp.eq.f32.partialorder %v807, 0.0
    %v1508 = vand.u32 %v807, 2147483648
    %v1509 = vsel %vm1507, %v1508, %v1506
    %v1510 = vrsqrt.pop %v808
    %v1511 = vmul.f32 %v1510, %v808
    %v1512 = vmul.f32 %v1511, %v1510
    %v1513 = vmul.f32 0.5, %v1512
    %v1514 = vsub.f32 1.5, %v1513
    %v1515 = vmul.f32 %v1510, %v1514
    %v1516 = vmul.f32 %v808, %v1515
    %vm1517 = vcmp.eq.f32.partialorder %v808, inf
    %v1518 = vsel %vm1517, %v808, %v1516
    %vm1519 = vcmp.eq.f32.partialorder %v808, 0.0
    %v1520 = vand.u32 %v808, 2147483648
    %v1521 = vsel %vm1519, %v1520, %v1518
    %v1522 = vrsqrt.pop %v809
    %v1523 = vmul.f32 %v1522, %v809
    %v1524 = vmul.f32 %v1523, %v1522
    %v1525 = vmul.f32 0.5, %v1524
    %v1526 = vsub.f32 1.5, %v1525
    %v1527 = vmul.f32 %v1522, %v1526
    %v1528 = vmul.f32 %v809, %v1527
    %vm1529 = vcmp.eq.f32.partialorder %v809, inf
    %v1530 = vsel %vm1529, %v809, %v1528
    %vm1531 = vcmp.eq.f32.partialorder %v809, 0.0
    %v1532 = vand.u32 %v809, 2147483648
    %v1533 = vsel %vm1531, %v1532, %v1530
    %v1534 = vrsqrt.pop %v810
    %v1535 = vmul.f32 %v1534, %v810
    %v1536 = vmul.f32 %v1535, %v1534
    %v1537 = vmul.f32 0.5, %v1536
    %v1538 = vsub.f32 1.5, %v1537
    %v1539 = vmul.f32 %v1534, %v1538
    %v1540 = vmul.f32 %v810, %v1539
    %vm1541 = vcmp.eq.f32.partialorder %v810, inf
    %v1542 = vsel %vm1541, %v810, %v1540
    %vm1543 = vcmp.eq.f32.partialorder %v810, 0.0
    %v1544 = vand.u32 %v810, 2147483648
    %v1545 = vsel %vm1543, %v1544, %v1542
    %v1546 = vrsqrt.pop %v811
    %v1547 = vmul.f32 %v1546, %v811
    %v1548 = vmul.f32 %v1547, %v1546
    %v1549 = vmul.f32 0.5, %v1548
    %v1550 = vsub.f32 1.5, %v1549
    %v1551 = vmul.f32 %v1546, %v1550
    %v1552 = vmul.f32 %v811, %v1551
    %vm1553 = vcmp.eq.f32.partialorder %v811, inf
    %v1554 = vsel %vm1553, %v811, %v1552
    %vm1555 = vcmp.eq.f32.partialorder %v811, 0.0
    %v1556 = vand.u32 %v811, 2147483648
    %v1557 = vsel %vm1555, %v1556, %v1554
    %v1558 = vrsqrt.pop %v812
    %v1559 = vmul.f32 %v1558, %v812
    %v1560 = vmul.f32 %v1559, %v1558
    %v1561 = vmul.f32 0.5, %v1560
    %v1562 = vsub.f32 1.5, %v1561
    %v1563 = vmul.f32 %v1558, %v1562
    %v1564 = vmul.f32 %v812, %v1563
    %vm1565 = vcmp.eq.f32.partialorder %v812, inf
    %v1566 = vsel %vm1565, %v812, %v1564
    %vm1567 = vcmp.eq.f32.partialorder %v812, 0.0
    %v1568 = vand.u32 %v812, 2147483648
    %v1569 = vsel %vm1567, %v1568, %v1566
    %v1570 = vrsqrt.pop %v813
    %v1571 = vmul.f32 %v1570, %v813
    %v1572 = vmul.f32 %v1571, %v1570
    %v1573 = vmul.f32 0.5, %v1572
    %v1574 = vsub.f32 1.5, %v1573
    %v1575 = vmul.f32 %v1570, %v1574
    %v1576 = vmul.f32 %v813, %v1575
    %vm1577 = vcmp.eq.f32.partialorder %v813, inf
    %v1578 = vsel %vm1577, %v813, %v1576
    %vm1579 = vcmp.eq.f32.partialorder %v813, 0.0
    %v1580 = vand.u32 %v813, 2147483648
    %v1581 = vsel %vm1579, %v1580, %v1578
    %v1582 = vmul.f32 %v825, %v27
    %v1583 = vmul.f32 %v837, %v28
    %v1584 = vmul.f32 %v849, %v29
    %v1585 = vmul.f32 %v861, %v30
    %v1586 = vmul.f32 %v873, %v31
    %v1587 = vmul.f32 %v885, %v32
    %v1588 = vmul.f32 %v897, %v33
    %v1589 = vmul.f32 %v909, %v34
    %v1590 = vmul.f32 %v921, %v35
    %v1591 = vmul.f32 %v933, %v36
    %v1592 = vmul.f32 %v945, %v37
    %v1593 = vmul.f32 %v957, %v38
    %v1594 = vmul.f32 %v969, %v39
    %v1595 = vmul.f32 %v981, %v40
    %v1596 = vmul.f32 %v993, %v41
    %v1597 = vmul.f32 %v1005, %v42
    %v1598 = vmul.f32 %v1017, %v43
    %v1599 = vmul.f32 %v1029, %v44
    %v1600 = vmul.f32 %v1041, %v45
    %v1601 = vmul.f32 %v1053, %v46
    %v1602 = vmul.f32 %v1065, %v47
    %v1603 = vmul.f32 %v1077, %v48
    %v1604 = vmul.f32 %v1089, %v49
    %v1605 = vmul.f32 %v1101, %v50
    %v1606 = vmul.f32 %v1113, %v51
    %v1607 = vmul.f32 %v1125, %v52
    %v1608 = vmul.f32 %v1137, %v53
    %v1609 = vmul.f32 %v1149, %v54
    %v1610 = vmul.f32 %v1161, %v55
    %v1611 = vmul.f32 %v1173, %v56
    %v1612 = vmul.f32 %v1185, %v57
    %v1613 = vmul.f32 %v1197, %v58
    %v1614 = vmul.f32 %v1209, %v59
    %v1615 = vmul.f32 %v1221, %v60
    %v1616 = vmul.f32 %v1233, %v61
    %v1617 = vmul.f32 %v1245, %v62
    %v1618 = vmul.f32 %v1257, %v63
    %v1619 = vmul.f32 %v1269, %v64
    %v1620 = vmul.f32 %v1281, %v65
    %v1621 = vmul.f32 %v1293, %v66
    %v1622 = vmul.f32 %v1305, %v67
    %v1623 = vmul.f32 %v1317, %v68
    %v1624 = vmul.f32 %v1329, %v69
    %v1625 = vmul.f32 %v1341, %v70
    %v1626 = vmul.f32 %v1353, %v71
    %v1627 = vmul.f32 %v1365, %v72
    %v1628 = vmul.f32 %v1377, %v73
    %v1629 = vmul.f32 %v1389, %v74
    %v1630 = vmul.f32 %v1401, %v75
    %v1631 = vmul.f32 %v1413, %v76
    %v1632 = vmul.f32 %v1425, %v77
    %v1633 = vmul.f32 %v1437, %v78
    %v1634 = vmul.f32 %v1449, %v79
    %v1635 = vmul.f32 %v1461, %v80
    %v1636 = vmul.f32 %v1473, %v81
    %v1637 = vmul.f32 %v1485, %v82
    %v1638 = vmul.f32 %v1497, %v83
    %v1639 = vmul.f32 %v1509, %v84
    %v1640 = vmul.f32 %v1521, %v85
    %v1641 = vmul.f32 %v1533, %v86
    %v1642 = vmul.f32 %v1545, %v87
    %v1643 = vmul.f32 %v1557, %v88
    %v1644 = vmul.f32 %v1569, %v89
    %v1645 = vmul.f32 %v1581, %v90
    %1646 = vst [vmem:[#allocation2] sm:$0xff] %v1582
    %1647 = vst [vmem:[#allocation2 + $0x8] sm:$0xff] %v1583
    %1648 = vst [vmem:[#allocation2 + $0x10] sm:$0xff] %v1584
    %1649 = vst [vmem:[#allocation2 + $0x18] sm:$0xff] %v1585
    %1650 = vst [vmem:[#allocation2 + $0x20] sm:$0xff] %v1586
    %1651 = vst [vmem:[#allocation2 + $0x28] sm:$0xff] %v1587
    %1652 = vst [vmem:[#allocation2 + $0x30] sm:$0xff] %v1588
    %1653 = vst [vmem:[#allocation2 + $0x38] sm:$0xff] %v1589
    %1654 = vst [vmem:[#allocation2 + $0x40] sm:$0xff] %v1590
    %1655 = vst [vmem:[#allocation2 + $0x48] sm:$0xff] %v1591
    %1656 = vst [vmem:[#allocation2 + $0x50] sm:$0xff] %v1592
    %1657 = vst [vmem:[#allocation2 + $0x58] sm:$0xff] %v1593
    %1658 = vst [vmem:[#allocation2 + $0x60] sm:$0xff] %v1594
    %1659 = vst [vmem:[#allocation2 + $0x68] sm:$0xff] %v1595
    %1660 = vst [vmem:[#allocation2 + $0x70] sm:$0xff] %v1596
    %1661 = vst [vmem:[#allocation2 + $0x78] sm:$0xff] %v1597
    %1662 = vst [vmem:[#allocation2 + $0x80] sm:$0xff] %v1598
    %1663 = vst [vmem:[#allocation2 + $0x88] sm:$0xff] %v1599
    %1664 = vst [vmem:[#allocation2 + $0x90] sm:$0xff] %v1600
    %1665 = vst [vmem:[#allocation2 + $0x98] sm:$0xff] %v1601
    %1666 = vst [vmem:[#allocation2 + $0xa0] sm:$0xff] %v1602
    %1667 = vst [vmem:[#allocation2 + $0xa8] sm:$0xff] %v1603
    %1668 = vst [vmem:[#allocation2 + $0xb0] sm:$0xff] %v1604
    %1669 = vst [vmem:[#allocation2 + $0xb8] sm:$0xff] %v1605
    %1670 = vst [vmem:[#allocation2 + $0xc0] sm:$0xff] %v1606
    %1671 = vst [vmem:[#allocation2 + $0xc8] sm:$0xff] %v1607
    %1672 = vst [vmem:[#allocation2 + $0xd0] sm:$0xff] %v1608
    %1673 = vst [vmem:[#allocation2 + $0xd8] sm:$0xff] %v1609
    %1674 = vst [vmem:[#allocation2 + $0xe0] sm:$0xff] %v1610
    %1675 = vst [vmem:[#allocation2 + $0xe8] sm:$0xff] %v1611
    %1676 = vst [vmem:[#allocation2 + $0xf0] sm:$0xff] %v1612
    %1677 = vst [vmem:[#allocation2 + $0xf8] sm:$0xff] %v1613
    %1678 = vst [vmem:[#allocation2 + $0x100] sm:$0xff] %v1614
    %1679 = vst [vmem:[#allocation2 + $0x108] sm:$0xff] %v1615
    %1680 = vst [vmem:[#allocation2 + $0x110] sm:$0xff] %v1616
    %1681 = vst [vmem:[#allocation2 + $0x118] sm:$0xff] %v1617
    %1682 = vst [vmem:[#allocation2 + $0x120] sm:$0xff] %v1618
    %1683 = vst [vmem:[#allocation2 + $0x128] sm:$0xff] %v1619
    %1684 = vst [vmem:[#allocation2 + $0x130] sm:$0xff] %v1620
    %1685 = vst [vmem:[#allocation2 + $0x138] sm:$0xff] %v1621
    %1686 = vst [vmem:[#allocation2 + $0x140] sm:$0xff] %v1622
    %1687 = vst [vmem:[#allocation2 + $0x148] sm:$0xff] %v1623
    %1688 = vst [vmem:[#allocation2 + $0x150] sm:$0xff] %v1624
    %1689 = vst [vmem:[#allocation2 + $0x158] sm:$0xff] %v1625
    %1690 = vst [vmem:[#allocation2 + $0x160] sm:$0xff] %v1626
    %1691 = vst [vmem:[#allocation2 + $0x168] sm:$0xff] %v1627
    %1692 = vst [vmem:[#allocation2 + $0x170] sm:$0xff] %v1628
    %1693 = vst [vmem:[#allocation2 + $0x178] sm:$0xff] %v1629
    %1694 = vst [vmem:[#allocation2 + $0x180] sm:$0xff] %v1630
    %1695 = vst [vmem:[#allocation2 + $0x188] sm:$0xff] %v1631
    %1696 = vst [vmem:[#allocation2 + $0x190] sm:$0xff] %v1632
    %1697 = vst [vmem:[#allocation2 + $0x198] sm:$0xff] %v1633
    %1698 = vst [vmem:[#allocation2 + $0x1a0] sm:$0xff] %v1634
    %1699 = vst [vmem:[#allocation2 + $0x1a8] sm:$0xff] %v1635
    %1700 = vst [vmem:[#allocation2 + $0x1b0] sm:$0xff] %v1636
    %1701 = vst [vmem:[#allocation2 + $0x1b8] sm:$0xff] %v1637
    %1702 = vst [vmem:[#allocation2 + $0x1c0] sm:$0xff] %v1638
    %1703 = vst [vmem:[#allocation2 + $0x1c8] sm:$0xff] %v1639
    %1704 = vst [vmem:[#allocation2 + $0x1d0] sm:$0xff] %v1640
    %1705 = vst [vmem:[#allocation2 + $0x1d8] sm:$0xff] %v1641
    %1706 = vst [vmem:[#allocation2 + $0x1e0] sm:$0xff] %v1642
    %1707 = vst [vmem:[#allocation2 + $0x1e8] sm:$0xff] %v1643
    %1708 = vst [vmem:[#allocation2 + $0x1f0] sm:$0xff] %v1644
    %1709 = vst [vmem:[#allocation2 + $0x1f8] sm:$0xff] %v1645
    %v1710 = vld [vmem:[#allocation2] sm:$0xff]
    %v1711 = vld [vmem:[#allocation2 + $0x8] sm:$0xff]
    %v1712 = vld [vmem:[#allocation2 + $0x10] sm:$0xff]
    %v1713 = vld [vmem:[#allocation2 + $0x18] sm:$0xff]
    %v1714 = vld [vmem:[#allocation2 + $0x20] sm:$0xff]
    %v1715 = vld [vmem:[#allocation2 + $0x28] sm:$0xff]
    %v1716 = vld [vmem:[#allocation2 + $0x30] sm:$0xff]
    %v1717 = vld [vmem:[#allocation2 + $0x38] sm:$0xff]
    %v1718 = vld [vmem:[#allocation2 + $0x40] sm:$0xff]
    %v1719 = vld [vmem:[#allocation2 + $0x48] sm:$0xff]
    %v1720 = vld [vmem:[#allocation2 + $0x50] sm:$0xff]
    %v1721 = vld [vmem:[#allocation2 + $0x58] sm:$0xff]
    %v1722 = vld [vmem:[#allocation2 + $0x60] sm:$0xff]
    %v1723 = vld [vmem:[#allocation2 + $0x68] sm:$0xff]
    %v1724 = vld [vmem:[#allocation2 + $0x70] sm:$0xff]
    %v1725 = vld [vmem:[#allocation2 + $0x78] sm:$0xff]
    %v1726 = vld [vmem:[#allocation2 + $0x80] sm:$0xff]
    %v1727 = vld [vmem:[#allocation2 + $0x88] sm:$0xff]
    %v1728 = vld [vmem:[#allocation2 + $0x90] sm:$0xff]
    %v1729 = vld [vmem:[#allocation2 + $0x98] sm:$0xff]
    %v1730 = vld [vmem:[#allocation2 + $0xa0] sm:$0xff]
    %v1731 = vld [vmem:[#allocation2 + $0xa8] sm:$0xff]
    %v1732 = vld [vmem:[#allocation2 + $0xb0] sm:$0xff]
    %v1733 = vld [vmem:[#allocation2 + $0xb8] sm:$0xff]
    %v1734 = vld [vmem:[#allocation2 + $0xc0] sm:$0xff]
    %v1735 = vld [vmem:[#allocation2 + $0xc8] sm:$0xff]
    %v1736 = vld [vmem:[#allocation2 + $0xd0] sm:$0xff]
    %v1737 = vld [vmem:[#allocation2 + $0xd8] sm:$0xff]
    %v1738 = vld [vmem:[#allocation2 + $0xe0] sm:$0xff]
    %v1739 = vld [vmem:[#allocation2 + $0xe8] sm:$0xff]
    %v1740 = vld [vmem:[#allocation2 + $0xf0] sm:$0xff]
    %v1741 = vld [vmem:[#allocation2 + $0xf8] sm:$0xff]
    %v1742 = vld [vmem:[#allocation2 + $0x100] sm:$0xff]
    %v1743 = vld [vmem:[#allocation2 + $0x108] sm:$0xff]
    %v1744 = vld [vmem:[#allocation2 + $0x110] sm:$0xff]
    %v1745 = vld [vmem:[#allocation2 + $0x118] sm:$0xff]
    %v1746 = vld [vmem:[#allocation2 + $0x120] sm:$0xff]
    %v1747 = vld [vmem:[#allocation2 + $0x128] sm:$0xff]
    %v1748 = vld [vmem:[#allocation2 + $0x130] sm:$0xff]
    %v1749 = vld [vmem:[#allocation2 + $0x138] sm:$0xff]
    %v1750 = vld [vmem:[#allocation2 + $0x140] sm:$0xff]
    %v1751 = vld [vmem:[#allocation2 + $0x148] sm:$0xff]
    %v1752 = vld [vmem:[#allocation2 + $0x150] sm:$0xff]
    %v1753 = vld [vmem:[#allocation2 + $0x158] sm:$0xff]
    %v1754 = vld [vmem:[#allocation2 + $0x160] sm:$0xff]
    %v1755 = vld [vmem:[#allocation2 + $0x168] sm:$0xff]
    %v1756 = vld [vmem:[#allocation2 + $0x170] sm:$0xff]
    %v1757 = vld [vmem:[#allocation2 + $0x178] sm:$0xff]
    %v1758 = vld [vmem:[#allocation2 + $0x180] sm:$0xff]
    %v1759 = vld [vmem:[#allocation2 + $0x188] sm:$0xff]
    %v1760 = vld [vmem:[#allocation2 + $0x190] sm:$0xff]
    %v1761 = vld [vmem:[#allocation2 + $0x198] sm:$0xff]
    %v1762 = vld [vmem:[#allocation2 + $0x1a0] sm:$0xff]
    %v1763 = vld [vmem:[#allocation2 + $0x1a8] sm:$0xff]
    %v1764 = vld [vmem:[#allocation2 + $0x1b0] sm:$0xff]
    %v1765 = vld [vmem:[#allocation2 + $0x1b8] sm:$0xff]
    %v1766 = vld [vmem:[#allocation2 + $0x1c0] sm:$0xff]
    %v1767 = vld [vmem:[#allocation2 + $0x1c8] sm:$0xff]
    %v1768 = vld [vmem:[#allocation2 + $0x1d0] sm:$0xff]
    %v1769 = vld [vmem:[#allocation2 + $0x1d8] sm:$0xff]
    %v1770 = vld [vmem:[#allocation2 + $0x1e0] sm:$0xff]
    %v1771 = vld [vmem:[#allocation2 + $0x1e8] sm:$0xff]
    %v1772 = vld [vmem:[#allocation2 + $0x1f0] sm:$0xff]
    %v1773 = vld [vmem:[#allocation2 + $0x1f8] sm:$0xff]
    %v1774 = vadd.f32 %v1710, %v1712
    %v1775 = vadd.f32 %v1774, %v1714
    %v1776 = vadd.f32 %v1775, %v1716
    %v1777 = vadd.f32 %v1776, %v1718
    %v1778 = vadd.f32 %v1777, %v1720
    %v1779 = vadd.f32 %v1778, %v1722
    %v1780 = vadd.f32 %v1779, %v1724
    %v1781 = vadd.f32 %v1780, %v1726
    %v1782 = vadd.f32 %v1781, %v1728
    %v1783 = vadd.f32 %v1782, %v1730
    %v1784 = vadd.f32 %v1783, %v1732
    %v1785 = vadd.f32 %v1784, %v1734
    %v1786 = vadd.f32 %v1785, %v1736
    %v1787 = vadd.f32 %v1786, %v1738
    %v1788 = vadd.f32 %v1787, %v1740
    %v1789 = vadd.f32 %v1788, %v1742
    %v1790 = vadd.f32 %v1789, %v1744
    %v1791 = vadd.f32 %v1790, %v1746
    %v1792 = vadd.f32 %v1791, %v1748
    %v1793 = vadd.f32 %v1792, %v1750
    %v1794 = vadd.f32 %v1793, %v1752
    %v1795 = vadd.f32 %v1794, %v1754
    %v1796 = vadd.f32 %v1795, %v1756
    %v1797 = vadd.f32 %v1796, %v1758
    %v1798 = vadd.f32 %v1797, %v1760
    %v1799 = vadd.f32 %v1798, %v1762
    %v1800 = vadd.f32 %v1799, %v1764
    %v1801 = vadd.f32 %v1800, %v1766
    %v1802 = vadd.f32 %v1801, %v1768
    %v1803 = vadd.f32 %v1802, %v1770
    %v1804 = vadd.f32 %v1803, %v1772
    %v1805 = vrot.slane %v1804, 4
    %v1806 = vadd.f32 %v1804, %v1805
    %v1807 = vrot.slane %v1806, 2
    %v1808 = vadd.f32 %v1806, %v1807
    %v1809 = vrot.slane %v1808, 1
    %v1810 = vadd.f32 %v1808, %v1809
    %v1811 = vadd.f32 %v1711, %v1713
    %v1812 = vadd.f32 %v1811, %v1715
    %v1813 = vadd.f32 %v1812, %v1717
    %v1814 = vadd.f32 %v1813, %v1719
    %v1815 = vadd.f32 %v1814, %v1721
    %v1816 = vadd.f32 %v1815, %v1723
    %v1817 = vadd.f32 %v1816, %v1725
    %v1818 = vadd.f32 %v1817, %v1727
    %v1819 = vadd.f32 %v1818, %v1729
    %v1820 = vadd.f32 %v1819, %v1731
    %v1821 = vadd.f32 %v1820, %v1733
    %v1822 = vadd.f32 %v1821, %v1735
    %v1823 = vadd.f32 %v1822, %v1737
    %v1824 = vadd.f32 %v1823, %v1739
    %v1825 = vadd.f32 %v1824, %v1741
    %v1826 = vadd.f32 %v1825, %v1743
    %v1827 = vadd.f32 %v1826, %v1745
    %v1828 = vadd.f32 %v1827, %v1747
    %v1829 = vadd.f32 %v1828, %v1749
    %v1830 = vadd.f32 %v1829, %v1751
    %v1831 = vadd.f32 %v1830, %v1753
    %v1832 = vadd.f32 %v1831, %v1755
    %v1833 = vadd.f32 %v1832, %v1757
    %v1834 = vadd.f32 %v1833, %v1759
    %v1835 = vadd.f32 %v1834, %v1761
    %v1836 = vadd.f32 %v1835, %v1763
    %v1837 = vadd.f32 %v1836, %v1765
    %v1838 = vadd.f32 %v1837, %v1767
    %v1839 = vadd.f32 %v1838, %v1769
    %v1840 = vadd.f32 %v1839, %v1771
    %v1841 = vadd.f32 %v1840, %v1773
    %v1842 = vrot.slane %v1841, 4
    %v1843 = vadd.f32 %v1841, %v1842
    %v1844 = vrot.slane %v1843, 2
    %v1845 = vadd.f32 %v1843, %v1844
    %v1846 = vrot.slane %v1845, 1
    %v1847 = vadd.f32 %v1845, %v1846
    %vm1848 = vcmp.gt.f32.partialorder %v1810, 0.0
    %vm1849 = vcmp.gt.f32.partialorder %v1847, 0.0
    %v1850 = vrcp.pop %v1810
    %v1851 = vmul.f32 %v1810, %v1850
    %v1852 = vsub.f32 1.0, %v1851
    %v1853 = vmul.f32 %v1850, %v1852
    %v1854 = vadd.f32 %v1850, %v1853
    %vm1855 = vweird.f32 %v1810
    %vm1856 = vweird.f32 %v1850
    %vm1857 = vmor %vm1855, %vm1856
    %v1858 = vsel %vm1857, %v1850, %v1854
    %v1859 = vand.u32 2147483647, %v1810
    %vm1860 = vcmp.eq.f32.partialorder %v1859, 8.507059e+37
    %v1861 = vand.u32 %v1810, 2147483648
    %v1862 = vor.u32 1.1754944e-38, %v1861
    %v1863 = vsel %vm1860, %v1862, %v1858
    %v1864 = vmul.f32 1.0, %v1863
    %v1865 = vrcp.pop %v1847
    %v1866 = vmul.f32 %v1847, %v1865
    %v1867 = vsub.f32 1.0, %v1866
    %v1868 = vmul.f32 %v1865, %v1867
    %v1869 = vadd.f32 %v1865, %v1868
    %vm1870 = vweird.f32 %v1847
    %vm1871 = vweird.f32 %v1865
    %vm1872 = vmor %vm1870, %vm1871
    %v1873 = vsel %vm1872, %v1865, %v1869
    %v1874 = vand.u32 2147483647, %v1847
    %vm1875 = vcmp.eq.f32.partialorder %v1874, 8.507059e+37
    %v1876 = vand.u32 %v1847, 2147483648
    %v1877 = vor.u32 1.1754944e-38, %v1876
    %v1878 = vsel %vm1875, %v1877, %v1873
    %v1879 = vmul.f32 1.0, %v1878
    %v1880 = vsel %vm1848, %v1864, 0.0
    %v1881 = vsel %vm1849, %v1879, 0.0
    %v1882 = vmul.f32 %v1710, %v1880
    %v1883 = vmul.f32 %v1711, %v1881
    %v1884 = vmul.f32 %v1712, %v1880
    %v1885 = vmul.f32 %v1713, %v1881
    %v1886 = vmul.f32 %v1714, %v1880
    %v1887 = vmul.f32 %v1715, %v1881
    %v1888 = vmul.f32 %v1716, %v1880
    %v1889 = vmul.f32 %v1717, %v1881
    %v1890 = vmul.f32 %v1718, %v1880
    %v1891 = vmul.f32 %v1719, %v1881
    %v1892 = vmul.f32 %v1720, %v1880
    %v1893 = vmul.f32 %v1721, %v1881
    %v1894 = vmul.f32 %v1722, %v1880
    %v1895 = vmul.f32 %v1723, %v1881
    %v1896 = vmul.f32 %v1724, %v1880
    %v1897 = vmul.f32 %v1725, %v1881
    %v1898 = vmul.f32 %v1726, %v1880
    %v1899 = vmul.f32 %v1727, %v1881
    %v1900 = vmul.f32 %v1728, %v1880
    %v1901 = vmul.f32 %v1729, %v1881
    %v1902 = vmul.f32 %v1730, %v1880
    %v1903 = vmul.f32 %v1731, %v1881
    %v1904 = vmul.f32 %v1732, %v1880
    %v1905 = vmul.f32 %v1733, %v1881
    %v1906 = vmul.f32 %v1734, %v1880
    %v1907 = vmul.f32 %v1735, %v1881
    %v1908 = vmul.f32 %v1736, %v1880
    %v1909 = vmul.f32 %v1737, %v1881
    %v1910 = vmul.f32 %v1738, %v1880
    %v1911 = vmul.f32 %v1739, %v1881
    %v1912 = vmul.f32 %v1740, %v1880
    %v1913 = vmul.f32 %v1741, %v1881
    %v1914 = vmul.f32 %v1742, %v1880
    %v1915 = vmul.f32 %v1743, %v1881
    %v1916 = vmul.f32 %v1744, %v1880
    %v1917 = vmul.f32 %v1745, %v1881
    %v1918 = vmul.f32 %v1746, %v1880
    %v1919 = vmul.f32 %v1747, %v1881
    %v1920 = vmul.f32 %v1748, %v1880
    %v1921 = vmul.f32 %v1749, %v1881
    %v1922 = vmul.f32 %v1750, %v1880
    %v1923 = vmul.f32 %v1751, %v1881
    %v1924 = vmul.f32 %v1752, %v1880
    %v1925 = vmul.f32 %v1753, %v1881
    %v1926 = vmul.f32 %v1754, %v1880
    %v1927 = vmul.f32 %v1755, %v1881
    %v1928 = vmul.f32 %v1756, %v1880
    %v1929 = vmul.f32 %v1757, %v1881
    %v1930 = vmul.f32 %v1758, %v1880
    %v1931 = vmul.f32 %v1759, %v1881
    %v1932 = vmul.f32 %v1760, %v1880
    %v1933 = vmul.f32 %v1761, %v1881
    %v1934 = vmul.f32 %v1762, %v1880
    %v1935 = vmul.f32 %v1763, %v1881
    %v1936 = vmul.f32 %v1764, %v1880
    %v1937 = vmul.f32 %v1765, %v1881
    %v1938 = vmul.f32 %v1766, %v1880
    %v1939 = vmul.f32 %v1767, %v1881
    %v1940 = vmul.f32 %v1768, %v1880
    %v1941 = vmul.f32 %v1769, %v1881
    %v1942 = vmul.f32 %v1770, %v1880
    %v1943 = vmul.f32 %v1771, %v1881
    %v1944 = vmul.f32 %v1772, %v1880
    %v1945 = vmul.f32 %v1773, %v1881
    %1946 = vst [vmem:[#allocation2] sm:$0xff] %v1882
    %1947 = vst [vmem:[#allocation2 + $0x8] sm:$0xff] %v1883
    %1948 = vst [vmem:[#allocation2 + $0x10] sm:$0xff] %v1884
    %1949 = vst [vmem:[#allocation2 + $0x18] sm:$0xff] %v1885
    %1950 = vst [vmem:[#allocation2 + $0x20] sm:$0xff] %v1886
    %1951 = vst [vmem:[#allocation2 + $0x28] sm:$0xff] %v1887
    %1952 = vst [vmem:[#allocation2 + $0x30] sm:$0xff] %v1888
    %1953 = vst [vmem:[#allocation2 + $0x38] sm:$0xff] %v1889
    %1954 = vst [vmem:[#allocation2 + $0x40] sm:$0xff] %v1890
    %1955 = vst [vmem:[#allocation2 + $0x48] sm:$0xff] %v1891
    %1956 = vst [vmem:[#allocation2 + $0x50] sm:$0xff] %v1892
    %1957 = vst [vmem:[#allocation2 + $0x58] sm:$0xff] %v1893
    %1958 = vst [vmem:[#allocation2 + $0x60] sm:$0xff] %v1894
    %1959 = vst [vmem:[#allocation2 + $0x68] sm:$0xff] %v1895
    %1960 = vst [vmem:[#allocation2 + $0x70] sm:$0xff] %v1896
    %1961 = vst [vmem:[#allocation2 + $0x78] sm:$0xff] %v1897
    %1962 = vst [vmem:[#allocation2 + $0x80] sm:$0xff] %v1898
    %1963 = vst [vmem:[#allocation2 + $0x88] sm:$0xff] %v1899
    %1964 = vst [vmem:[#allocation2 + $0x90] sm:$0xff] %v1900
    %1965 = vst [vmem:[#allocation2 + $0x98] sm:$0xff] %v1901
    %1966 = vst [vmem:[#allocation2 + $0xa0] sm:$0xff] %v1902
    %1967 = vst [vmem:[#allocation2 + $0xa8] sm:$0xff] %v1903
    %1968 = vst [vmem:[#allocation2 + $0xb0] sm:$0xff] %v1904
    %1969 = vst [vmem:[#allocation2 + $0xb8] sm:$0xff] %v1905
    %1970 = vst [vmem:[#allocation2 + $0xc0] sm:$0xff] %v1906
    %1971 = vst [vmem:[#allocation2 + $0xc8] sm:$0xff] %v1907
    %1972 = vst [vmem:[#allocation2 + $0xd0] sm:$0xff] %v1908
    %1973 = vst [vmem:[#allocation2 + $0xd8] sm:$0xff] %v1909
    %1974 = vst [vmem:[#allocation2 + $0xe0] sm:$0xff] %v1910
    %1975 = vst [vmem:[#allocation2 + $0xe8] sm:$0xff] %v1911
    %1976 = vst [vmem:[#allocation2 + $0xf0] sm:$0xff] %v1912
    %1977 = vst [vmem:[#allocation2 + $0xf8] sm:$0xff] %v1913
    %1978 = vst [vmem:[#allocation2 + $0x100] sm:$0xff] %v1914
    %1979 = vst [vmem:[#allocation2 + $0x108] sm:$0xff] %v1915
    %1980 = vst [vmem:[#allocation2 + $0x110] sm:$0xff] %v1916
    %1981 = vst [vmem:[#allocation2 + $0x118] sm:$0xff] %v1917
    %1982 = vst [vmem:[#allocation2 + $0x120] sm:$0xff] %v1918
    %1983 = vst [vmem:[#allocation2 + $0x128] sm:$0xff] %v1919
    %1984 = vst [vmem:[#allocation2 + $0x130] sm:$0xff] %v1920
    %1985 = vst [vmem:[#allocation2 + $0x138] sm:$0xff] %v1921
    %1986 = vst [vmem:[#allocation2 + $0x140] sm:$0xff] %v1922
    %1987 = vst [vmem:[#allocation2 + $0x148] sm:$0xff] %v1923
    %1988 = vst [vmem:[#allocation2 + $0x150] sm:$0xff] %v1924
    %1989 = vst [vmem:[#allocation2 + $0x158] sm:$0xff] %v1925
    %1990 = vst [vmem:[#allocation2 + $0x160] sm:$0xff] %v1926
    %1991 = vst [vmem:[#allocation2 + $0x168] sm:$0xff] %v1927
    %1992 = vst [vmem:[#allocation2 + $0x170] sm:$0xff] %v1928
    %1993 = vst [vmem:[#allocation2 + $0x178] sm:$0xff] %v1929
    %1994 = vst [vmem:[#allocation2 + $0x180] sm:$0xff] %v1930
    %1995 = vst [vmem:[#allocation2 + $0x188] sm:$0xff] %v1931
    %1996 = vst [vmem:[#allocation2 + $0x190] sm:$0xff] %v1932
    %1997 = vst [vmem:[#allocation2 + $0x198] sm:$0xff] %v1933
    %1998 = vst [vmem:[#allocation2 + $0x1a0] sm:$0xff] %v1934
    %1999 = vst [vmem:[#allocation2 + $0x1a8] sm:$0xff] %v1935
    %2000 = vst [vmem:[#allocation2 + $0x1b0] sm:$0xff] %v1936
    %2001 = vst [vmem:[#allocation2 + $0x1b8] sm:$0xff] %v1937
    %2002 = vst [vmem:[#allocation2 + $0x1c0] sm:$0xff] %v1938
    %2003 = vst [vmem:[#allocation2 + $0x1c8] sm:$0xff] %v1939
    %2004 = vst [vmem:[#allocation2 + $0x1d0] sm:$0xff] %v1940
    %2005 = vst [vmem:[#allocation2 + $0x1d8] sm:$0xff] %v1941
    %2006 = vst [vmem:[#allocation2 + $0x1e0] sm:$0xff] %v1942
    %2007 = vst [vmem:[#allocation2 + $0x1e8] sm:$0xff] %v1943
    %2008 = vst [vmem:[#allocation2 + $0x1f0] sm:$0xff] %v1944
    %2009 = vst [vmem:[#allocation2 + $0x1f8] sm:$0xff] %v1945
    %s2010 = scalar_lea.vmem %s0, 16
    %v2011 = vld [vmem:[%s2010] sm:$0xff]
    %v2012 = vld [vmem:[%s2010 + $0x8] sm:$0xff]
    %2013 = vxpose.xlu0.b32.start [1/16] %v2011, 128
    %2014 = vxpose.xlu0.b32.cont [2/16] 0.0, 128
    %2015 = vxpose.xlu0.b32.cont [3/16] 0.0, 128
    %2016 = vxpose.xlu0.b32.cont [4/16] 0.0, 128
    %2017 = vxpose.xlu0.b32.cont [5/16] 0.0, 128
    %2018 = vxpose.xlu0.b32.cont [6/16] 0.0, 128
    %2019 = vxpose.xlu0.b32.cont [7/16] 0.0, 128
    %2020 = vxpose.xlu0.b32.cont [8/16] 0.0, 128
    %2021 = vxpose.xlu0.b32.cont [9/16] 0.0, 128
    %2022 = vxpose.xlu0.b32.cont [10/16] 0.0, 128
    %2023 = vxpose.xlu0.b32.cont [11/16] 0.0, 128
    %2024 = vxpose.xlu0.b32.cont [12/16] 0.0, 128
    %2025 = vxpose.xlu0.b32.cont [13/16] 0.0, 128
    %2026 = vxpose.xlu0.b32.cont [14/16] 0.0, 128
    %2027 = vxpose.xlu0.b32.cont [15/16] 0.0, 128
    %2028 = vxpose.xlu0.b32.end [16/16] 0.0, 128
    %v2029 = vpop.trf.xlu0
    %v2030 = vpop.trf.xlu0
    %v2031 = vpop.trf.xlu0
    %v2032 = vpop.trf.xlu0
    %v2033 = vpop.trf.xlu0
    %v2034 = vpop.trf.xlu0
    %v2035 = vpop.trf.xlu0
    %v2036 = vpop.trf.xlu0
    %v2037 = vpop.trf.xlu0
    %v2038 = vpop.trf.xlu0
    %v2039 = vpop.trf.xlu0
    %v2040 = vpop.trf.xlu0
    %v2041 = vpop.trf.xlu0
    %v2042 = vpop.trf.xlu0
    %v2043 = vpop.trf.xlu0
    %v2044 = vpop.trf.xlu0
    %2045 = vxpose.xlu0.b32.start [1/16] %v2012, 128
    %2046 = vxpose.xlu0.b32.cont [2/16] 0.0, 128
    %2047 = vxpose.xlu0.b32.cont [3/16] 0.0, 128
    %2048 = vxpose.xlu0.b32.cont [4/16] 0.0, 128
    %2049 = vxpose.xlu0.b32.cont [5/16] 0.0, 128
    %2050 = vxpose.xlu0.b32.cont [6/16] 0.0, 128
    %2051 = vxpose.xlu0.b32.cont [7/16] 0.0, 128
    %2052 = vxpose.xlu0.b32.cont [8/16] 0.0, 128
    %2053 = vxpose.xlu0.b32.cont [9/16] 0.0, 128
    %2054 = vxpose.xlu0.b32.cont [10/16] 0.0, 128
    %2055 = vxpose.xlu0.b32.cont [11/16] 0.0, 128
    %2056 = vxpose.xlu0.b32.cont [12/16] 0.0, 128
    %2057 = vxpose.xlu0.b32.cont [13/16] 0.0, 128
    %2058 = vxpose.xlu0.b32.cont [14/16] 0.0, 128
    %2059 = vxpose.xlu0.b32.cont [15/16] 0.0, 128
    %2060 = vxpose.xlu0.b32.end [16/16] 0.0, 128
    %v2061 = vpop.trf.xlu0
    %v2062 = vpop.trf.xlu0
    %v2063 = vpop.trf.xlu0
    %v2064 = vpop.trf.xlu0
    %v2065 = vpop.trf.xlu0
    %v2066 = vpop.trf.xlu0
    %v2067 = vpop.trf.xlu0
    %v2068 = vpop.trf.xlu0
    %v2069 = vpop.trf.xlu0
    %v2070 = vpop.trf.xlu0
    %v2071 = vpop.trf.xlu0
    %v2072 = vpop.trf.xlu0
    %v2073 = vpop.trf.xlu0
    %v2074 = vpop.trf.xlu0
    %v2075 = vpop.trf.xlu0
    %v2076 = vpop.trf.xlu0
    %v2078 = vsel %vm157, %v2029, 0
    %v2081 = vsel %vm157, %v2030, 0
    %v2084 = vsel %vm157, %v2031, 0
    %v2087 = vsel %vm157, %v2032, 0
    %v2090 = vsel %vm157, %v2033, 0
    %v2093 = vsel %vm157, %v2034, 0
    %v2096 = vsel %vm157, %v2035, 0
    %v2099 = vsel %vm157, %v2036, 0
    %v2102 = vsel %vm157, %v2037, 0
    %v2105 = vsel %vm157, %v2038, 0
    %v2108 = vsel %vm157, %v2039, 0
    %v2111 = vsel %vm157, %v2040, 0
    %v2114 = vsel %vm157, %v2041, 0
    %v2117 = vsel %vm157, %v2042, 0
    %v2120 = vsel %vm157, %v2043, 0
    %v2123 = vsel %vm157, %v2044, 0
    %v2126 = vsel %vm157, %v2061, 0
    %v2129 = vsel %vm157, %v2062, 0
    %v2132 = vsel %vm157, %v2063, 0
    %v2135 = vsel %vm157, %v2064, 0
    %v2138 = vsel %vm157, %v2065, 0
    %v2141 = vsel %vm157, %v2066, 0
    %v2144 = vsel %vm157, %v2067, 0
    %v2147 = vsel %vm157, %v2068, 0
    %v2150 = vsel %vm157, %v2069, 0
    %v2153 = vsel %vm157, %v2070, 0
    %v2156 = vsel %vm157, %v2071, 0
    %v2159 = vsel %vm157, %v2072, 0
    %v2162 = vsel %vm157, %v2073, 0
    %v2165 = vsel %vm157, %v2074, 0
    %v2168 = vsel %vm157, %v2075, 0
    %v2171 = vsel %vm157, %v2076, 0
    %2173 = vmatpush.msra.mxu0 0.0
    %2174 = vmatpush.msra.mxu0 0.0
    %2175 = vmatpush.msra.mxu0 0.0
    %2176 = vmatpush.msra.mxu0 0.0
    %2177 = vmatpush.msra.mxu0 0.0
    %2178 = vmatpush.msra.mxu0 0.0
    %2179 = vmatpush.msra.mxu0 0.0
    %2180 = vmatpush.msra.mxu0 0.0
    %2181 = vmatpush.msra.mxu0 0.0
    %2182 = vmatpush.msra.mxu0 0.0
    %2183 = vmatpush.msra.mxu0 0.0
    %2184 = vmatpush.msra.mxu0 0.0
    %2185 = vmatpush.msra.mxu0 0.0
    %2186 = vmatpush.msra.mxu0 0.0
    %2187 = vmatpush.msra.mxu0 0.0
    %2188 = vmatpush.msra.mxu0 %v2011
    %2189 = vmatmul.f32.gmra.mxu0 %v2078
    %v2190 = vpop.f32.mrf.mxu0
    %v2191 = vadd.f32 0.0, %v2190
    %2192 = vmatmul.f32.gmra.mxu0 %v2081
    %v2193 = vpop.f32.mrf.mxu0
    %v2194 = vadd.f32 0.0, %v2193
    %2195 = vmatmul.f32.gmra.mxu0 %v2084
    %v2196 = vpop.f32.mrf.mxu0
    %v2197 = vadd.f32 0.0, %v2196
    %2198 = vmatmul.f32.gmra.mxu0 %v2087
    %v2199 = vpop.f32.mrf.mxu0
    %v2200 = vadd.f32 0.0, %v2199
    %2201 = vmatmul.f32.gmra.mxu0 %v2090
    %v2202 = vpop.f32.mrf.mxu0
    %v2203 = vadd.f32 0.0, %v2202
    %2204 = vmatmul.f32.gmra.mxu0 %v2093
    %v2205 = vpop.f32.mrf.mxu0
    %v2206 = vadd.f32 0.0, %v2205
    %2207 = vmatmul.f32.gmra.mxu0 %v2096
    %v2208 = vpop.f32.mrf.mxu0
    %v2209 = vadd.f32 0.0, %v2208
    %2210 = vmatmul.f32.gmra.mxu0 %v2099
    %v2211 = vpop.f32.mrf.mxu0
    %v2212 = vadd.f32 0.0, %v2211
    %2213 = vmatmul.f32.gmra.mxu0 %v2102
    %v2214 = vpop.f32.mrf.mxu0
    %v2215 = vadd.f32 0.0, %v2214
    %2216 = vmatmul.f32.gmra.mxu0 %v2105
    %v2217 = vpop.f32.mrf.mxu0
    %v2218 = vadd.f32 0.0, %v2217
    %2219 = vmatmul.f32.gmra.mxu0 %v2108
    %v2220 = vpop.f32.mrf.mxu0
    %v2221 = vadd.f32 0.0, %v2220
    %2222 = vmatmul.f32.gmra.mxu0 %v2111
    %v2223 = vpop.f32.mrf.mxu0
    %v2224 = vadd.f32 0.0, %v2223
    %2225 = vmatmul.f32.gmra.mxu0 %v2114
    %v2226 = vpop.f32.mrf.mxu0
    %v2227 = vadd.f32 0.0, %v2226
    %2228 = vmatmul.f32.gmra.mxu0 %v2117
    %v2229 = vpop.f32.mrf.mxu0
    %v2230 = vadd.f32 0.0, %v2229
    %2231 = vmatmul.f32.gmra.mxu0 %v2120
    %v2232 = vpop.f32.mrf.mxu0
    %v2233 = vadd.f32 0.0, %v2232
    %2234 = vmatmul.f32.gmra.mxu0 %v2123
    %v2235 = vpop.f32.mrf.mxu0
    %v2236 = vadd.f32 0.0, %v2235
    %2237 = vmatmul.f32.gmra.mxu0 %v2126
    %v2238 = vpop.f32.mrf.mxu0
    %v2239 = vadd.f32 0.0, %v2238
    %2240 = vmatmul.f32.gmra.mxu0 %v2129
    %v2241 = vpop.f32.mrf.mxu0
    %v2242 = vadd.f32 0.0, %v2241
    %2243 = vmatmul.f32.gmra.mxu0 %v2132
    %v2244 = vpop.f32.mrf.mxu0
    %v2245 = vadd.f32 0.0, %v2244
    %2246 = vmatmul.f32.gmra.mxu0 %v2135
    %v2247 = vpop.f32.mrf.mxu0
    %v2248 = vadd.f32 0.0, %v2247
    %2249 = vmatmul.f32.gmra.mxu0 %v2138
    %v2250 = vpop.f32.mrf.mxu0
    %v2251 = vadd.f32 0.0, %v2250
    %2252 = vmatmul.f32.gmra.mxu0 %v2141
    %v2253 = vpop.f32.mrf.mxu0
    %v2254 = vadd.f32 0.0, %v2253
    %2255 = vmatmul.f32.gmra.mxu0 %v2144
    %v2256 = vpop.f32.mrf.mxu0
    %v2257 = vadd.f32 0.0, %v2256
    %2258 = vmatmul.f32.gmra.mxu0 %v2147
    %v2259 = vpop.f32.mrf.mxu0
    %v2260 = vadd.f32 0.0, %v2259
    %2261 = vmatmul.f32.gmra.mxu0 %v2150
    %v2262 = vpop.f32.mrf.mxu0
    %v2263 = vadd.f32 0.0, %v2262
    %2264 = vmatmul.f32.gmra.mxu0 %v2153
    %v2265 = vpop.f32.mrf.mxu0
    %v2266 = vadd.f32 0.0, %v2265
    %2267 = vmatmul.f32.gmra.mxu0 %v2156
    %v2268 = vpop.f32.mrf.mxu0
    %v2269 = vadd.f32 0.0, %v2268
    %2270 = vmatmul.f32.gmra.mxu0 %v2159
    %v2271 = vpop.f32.mrf.mxu0
    %v2272 = vadd.f32 0.0, %v2271
    %2273 = vmatmul.f32.gmra.mxu0 %v2162
    %v2274 = vpop.f32.mrf.mxu0
    %v2275 = vadd.f32 0.0, %v2274
    %2276 = vmatmul.f32.gmra.mxu0 %v2165
    %v2277 = vpop.f32.mrf.mxu0
    %v2278 = vadd.f32 0.0, %v2277
    %2279 = vmatmul.f32.gmra.mxu0 %v2168
    %v2280 = vpop.f32.mrf.mxu0
    %v2281 = vadd.f32 0.0, %v2280
    %2282 = vmatmul.f32.gmra.mxu0 %v2171
    %v2283 = vpop.f32.mrf.mxu0
    %v2284 = vadd.f32 0.0, %v2283
    %2285 = vdwg.mxu0
    %2286 = vmatpush.msra.mxu0 0.0
    %2287 = vmatpush.msra.mxu0 0.0
    %2288 = vmatpush.msra.mxu0 0.0
    %2289 = vmatpush.msra.mxu0 0.0
    %2290 = vmatpush.msra.mxu0 0.0
    %2291 = vmatpush.msra.mxu0 0.0
    %2292 = vmatpush.msra.mxu0 0.0
    %2293 = vmatpush.msra.mxu0 0.0
    %2294 = vmatpush.msra.mxu0 0.0
    %2295 = vmatpush.msra.mxu0 0.0
    %2296 = vmatpush.msra.mxu0 0.0
    %2297 = vmatpush.msra.mxu0 0.0
    %2298 = vmatpush.msra.mxu0 0.0
    %2299 = vmatpush.msra.mxu0 0.0
    %2300 = vmatpush.msra.mxu0 0.0
    %2301 = vmatpush.msra.mxu0 %v2012
    %2302 = vmatmul.f32.gmra.mxu0 %v2078
    %v2303 = vpop.f32.mrf.mxu0
    %v2304 = vadd.f32 0.0, %v2303
    %2305 = vmatmul.f32.gmra.mxu0 %v2081
    %v2306 = vpop.f32.mrf.mxu0
    %v2307 = vadd.f32 0.0, %v2306
    %2308 = vmatmul.f32.gmra.mxu0 %v2084
    %v2309 = vpop.f32.mrf.mxu0
    %v2310 = vadd.f32 0.0, %v2309
    %2311 = vmatmul.f32.gmra.mxu0 %v2087
    %v2312 = vpop.f32.mrf.mxu0
    %v2313 = vadd.f32 0.0, %v2312
    %2314 = vmatmul.f32.gmra.mxu0 %v2090
    %v2315 = vpop.f32.mrf.mxu0
    %v2316 = vadd.f32 0.0, %v2315
    %2317 = vmatmul.f32.gmra.mxu0 %v2093
    %v2318 = vpop.f32.mrf.mxu0
    %v2319 = vadd.f32 0.0, %v2318
    %2320 = vmatmul.f32.gmra.mxu0 %v2096
    %v2321 = vpop.f32.mrf.mxu0
    %v2322 = vadd.f32 0.0, %v2321
    %2323 = vmatmul.f32.gmra.mxu0 %v2099
    %v2324 = vpop.f32.mrf.mxu0
    %v2325 = vadd.f32 0.0, %v2324
    %2326 = vmatmul.f32.gmra.mxu0 %v2102
    %v2327 = vpop.f32.mrf.mxu0
    %v2328 = vadd.f32 0.0, %v2327
    %2329 = vmatmul.f32.gmra.mxu0 %v2105
    %v2330 = vpop.f32.mrf.mxu0
    %v2331 = vadd.f32 0.0, %v2330
    %2332 = vmatmul.f32.gmra.mxu0 %v2108
    %v2333 = vpop.f32.mrf.mxu0
    %v2334 = vadd.f32 0.0, %v2333
    %2335 = vmatmul.f32.gmra.mxu0 %v2111
    %v2336 = vpop.f32.mrf.mxu0
    %v2337 = vadd.f32 0.0, %v2336
    %2338 = vmatmul.f32.gmra.mxu0 %v2114
    %v2339 = vpop.f32.mrf.mxu0
    %v2340 = vadd.f32 0.0, %v2339
    %2341 = vmatmul.f32.gmra.mxu0 %v2117
    %v2342 = vpop.f32.mrf.mxu0
    %v2343 = vadd.f32 0.0, %v2342
    %2344 = vmatmul.f32.gmra.mxu0 %v2120
    %v2345 = vpop.f32.mrf.mxu0
    %v2346 = vadd.f32 0.0, %v2345
    %2347 = vmatmul.f32.gmra.mxu0 %v2123
    %v2348 = vpop.f32.mrf.mxu0
    %v2349 = vadd.f32 0.0, %v2348
    %2350 = vmatmul.f32.gmra.mxu0 %v2126
    %v2351 = vpop.f32.mrf.mxu0
    %v2352 = vadd.f32 0.0, %v2351
    %2353 = vmatmul.f32.gmra.mxu0 %v2129
    %v2354 = vpop.f32.mrf.mxu0
    %v2355 = vadd.f32 0.0, %v2354
    %2356 = vmatmul.f32.gmra.mxu0 %v2132
    %v2357 = vpop.f32.mrf.mxu0
    %v2358 = vadd.f32 0.0, %v2357
    %2359 = vmatmul.f32.gmra.mxu0 %v2135
    %v2360 = vpop.f32.mrf.mxu0
    %v2361 = vadd.f32 0.0, %v2360
    %2362 = vmatmul.f32.gmra.mxu0 %v2138
    %v2363 = vpop.f32.mrf.mxu0
    %v2364 = vadd.f32 0.0, %v2363
    %2365 = vmatmul.f32.gmra.mxu0 %v2141
    %v2366 = vpop.f32.mrf.mxu0
    %v2367 = vadd.f32 0.0, %v2366
    %2368 = vmatmul.f32.gmra.mxu0 %v2144
    %v2369 = vpop.f32.mrf.mxu0
    %v2370 = vadd.f32 0.0, %v2369
    %2371 = vmatmul.f32.gmra.mxu0 %v2147
    %v2372 = vpop.f32.mrf.mxu0
    %v2373 = vadd.f32 0.0, %v2372
    %2374 = vmatmul.f32.gmra.mxu0 %v2150
    %v2375 = vpop.f32.mrf.mxu0
    %v2376 = vadd.f32 0.0, %v2375
    %2377 = vmatmul.f32.gmra.mxu0 %v2153
    %v2378 = vpop.f32.mrf.mxu0
    %v2379 = vadd.f32 0.0, %v2378
    %2380 = vmatmul.f32.gmra.mxu0 %v2156
    %v2381 = vpop.f32.mrf.mxu0
    %v2382 = vadd.f32 0.0, %v2381
    %2383 = vmatmul.f32.gmra.mxu0 %v2159
    %v2384 = vpop.f32.mrf.mxu0
    %v2385 = vadd.f32 0.0, %v2384
    %2386 = vmatmul.f32.gmra.mxu0 %v2162
    %v2387 = vpop.f32.mrf.mxu0
    %v2388 = vadd.f32 0.0, %v2387
    %2389 = vmatmul.f32.gmra.mxu0 %v2165
    %v2390 = vpop.f32.mrf.mxu0
    %v2391 = vadd.f32 0.0, %v2390
    %2392 = vmatmul.f32.gmra.mxu0 %v2168
    %v2393 = vpop.f32.mrf.mxu0
    %v2394 = vadd.f32 0.0, %v2393
    %2395 = vmatmul.f32.gmra.mxu0 %v2171
    %v2396 = vpop.f32.mrf.mxu0
    %v2397 = vadd.f32 0.0, %v2396
    %2398 = vdwg.mxu0
    %v2399 = vmul.f32 %v2011, %v2011
    %v2400 = vmul.f32 %v2012, %v2012
    %v2401 = vrot.slane %v2399, 4
    %v2402 = vadd.f32 %v2399, %v2401
    %v2403 = vrot.slane %v2402, 2
    %v2404 = vadd.f32 %v2402, %v2403
    %v2405 = vrot.slane %v2404, 1
    %v2406 = vadd.f32 %v2404, %v2405
    %v2407 = vrot.slane %v2400, 4
    %v2408 = vadd.f32 %v2400, %v2407
    %v2409 = vrot.slane %v2408, 2
    %v2410 = vadd.f32 %v2408, %v2409
    %v2411 = vrot.slane %v2410, 1
    %v2412 = vadd.f32 %v2410, %v2411
    %v2413 = vsub.f32 %v2406, %v2191
    %v2414 = vsub.f32 %v2412, %v2304
    %v2415 = vsub.f32 %v2406, %v2194
    %v2416 = vsub.f32 %v2412, %v2307
    %v2417 = vsub.f32 %v2406, %v2197
    %v2418 = vsub.f32 %v2412, %v2310
    %v2419 = vsub.f32 %v2406, %v2200
    %v2420 = vsub.f32 %v2412, %v2313
    %v2421 = vsub.f32 %v2406, %v2203
    %v2422 = vsub.f32 %v2412, %v2316
    %v2423 = vsub.f32 %v2406, %v2206
    %v2424 = vsub.f32 %v2412, %v2319
    %v2425 = vsub.f32 %v2406, %v2209
    %v2426 = vsub.f32 %v2412, %v2322
    %v2427 = vsub.f32 %v2406, %v2212
    %v2428 = vsub.f32 %v2412, %v2325
    %v2429 = vsub.f32 %v2406, %v2215
    %v2430 = vsub.f32 %v2412, %v2328
    %v2431 = vsub.f32 %v2406, %v2218
    %v2432 = vsub.f32 %v2412, %v2331
    %v2433 = vsub.f32 %v2406, %v2221
    %v2434 = vsub.f32 %v2412, %v2334
    %v2435 = vsub.f32 %v2406, %v2224
    %v2436 = vsub.f32 %v2412, %v2337
    %v2437 = vsub.f32 %v2406, %v2227
    %v2438 = vsub.f32 %v2412, %v2340
    %v2439 = vsub.f32 %v2406, %v2230
    %v2440 = vsub.f32 %v2412, %v2343
    %v2441 = vsub.f32 %v2406, %v2233
    %v2442 = vsub.f32 %v2412, %v2346
    %v2443 = vsub.f32 %v2406, %v2236
    %v2444 = vsub.f32 %v2412, %v2349
    %v2445 = vsub.f32 %v2406, %v2239
    %v2446 = vsub.f32 %v2412, %v2352
    %v2447 = vsub.f32 %v2406, %v2242
    %v2448 = vsub.f32 %v2412, %v2355
    %v2449 = vsub.f32 %v2406, %v2245
    %v2450 = vsub.f32 %v2412, %v2358
    %v2451 = vsub.f32 %v2406, %v2248
    %v2452 = vsub.f32 %v2412, %v2361
    %v2453 = vsub.f32 %v2406, %v2251
    %v2454 = vsub.f32 %v2412, %v2364
    %v2455 = vsub.f32 %v2406, %v2254
    %v2456 = vsub.f32 %v2412, %v2367
    %v2457 = vsub.f32 %v2406, %v2257
    %v2458 = vsub.f32 %v2412, %v2370
    %v2459 = vsub.f32 %v2406, %v2260
    %v2460 = vsub.f32 %v2412, %v2373
    %v2461 = vsub.f32 %v2406, %v2263
    %v2462 = vsub.f32 %v2412, %v2376
    %v2463 = vsub.f32 %v2406, %v2266
    %v2464 = vsub.f32 %v2412, %v2379
    %v2465 = vsub.f32 %v2406, %v2269
    %v2466 = vsub.f32 %v2412, %v2382
    %v2467 = vsub.f32 %v2406, %v2272
    %v2468 = vsub.f32 %v2412, %v2385
    %v2469 = vsub.f32 %v2406, %v2275
    %v2470 = vsub.f32 %v2412, %v2388
    %v2471 = vsub.f32 %v2406, %v2278
    %v2472 = vsub.f32 %v2412, %v2391
    %v2473 = vsub.f32 %v2406, %v2281
    %v2474 = vsub.f32 %v2412, %v2394
    %v2475 = vsub.f32 %v2406, %v2284
    %v2476 = vsub.f32 %v2412, %v2397
    %2477 = vxpose.xlu0.b32.start [1/16] %v2413, 128
    %2478 = vxpose.xlu0.b32.cont [2/16] %v2415, 128
    %2479 = vxpose.xlu0.b32.cont [3/16] %v2417, 128
    %2480 = vxpose.xlu0.b32.cont [4/16] %v2419, 128
    %2481 = vxpose.xlu0.b32.cont [5/16] %v2421, 128
    %2482 = vxpose.xlu0.b32.cont [6/16] %v2423, 128
    %2483 = vxpose.xlu0.b32.cont [7/16] %v2425, 128
    %2484 = vxpose.xlu0.b32.cont [8/16] %v2427, 128
    %2485 = vxpose.xlu0.b32.cont [9/16] %v2429, 128
    %2486 = vxpose.xlu0.b32.cont [10/16] %v2431, 128
    %2487 = vxpose.xlu0.b32.cont [11/16] %v2433, 128
    %2488 = vxpose.xlu0.b32.cont [12/16] %v2435, 128
    %2489 = vxpose.xlu0.b32.cont [13/16] %v2437, 128
    %2490 = vxpose.xlu0.b32.cont [14/16] %v2439, 128
    %2491 = vxpose.xlu0.b32.cont [15/16] %v2441, 128
    %2492 = vxpose.xlu0.b32.end [16/16] %v2443, 128
    %v2493 = vpop.trf.xlu0
    %v2494 = vpop.trf.xlu0
    %v2495 = vpop.trf.xlu0
    %v2496 = vpop.trf.xlu0
    %v2497 = vpop.trf.xlu0
    %v2498 = vpop.trf.xlu0
    %v2499 = vpop.trf.xlu0
    %v2500 = vpop.trf.xlu0
    %v2501 = vpop.trf.xlu0
    %v2502 = vpop.trf.xlu0
    %v2503 = vpop.trf.xlu0
    %v2504 = vpop.trf.xlu0
    %v2505 = vpop.trf.xlu0
    %v2506 = vpop.trf.xlu0
    %v2507 = vpop.trf.xlu0
    %v2508 = vpop.trf.xlu0
    %2509 = vxpose.xlu0.b32.start [1/16] %v2414, 128
    %2510 = vxpose.xlu0.b32.cont [2/16] %v2416, 128
    %2511 = vxpose.xlu0.b32.cont [3/16] %v2418, 128
    %2512 = vxpose.xlu0.b32.cont [4/16] %v2420, 128
    %2513 = vxpose.xlu0.b32.cont [5/16] %v2422, 128
    %2514 = vxpose.xlu0.b32.cont [6/16] %v2424, 128
    %2515 = vxpose.xlu0.b32.cont [7/16] %v2426, 128
    %2516 = vxpose.xlu0.b32.cont [8/16] %v2428, 128
    %2517 = vxpose.xlu0.b32.cont [9/16] %v2430, 128
    %2518 = vxpose.xlu0.b32.cont [10/16] %v2432, 128
    %2519 = vxpose.xlu0.b32.cont [11/16] %v2434, 128
    %2520 = vxpose.xlu0.b32.cont [12/16] %v2436, 128
    %2521 = vxpose.xlu0.b32.cont [13/16] %v2438, 128
    %2522 = vxpose.xlu0.b32.cont [14/16] %v2440, 128
    %2523 = vxpose.xlu0.b32.cont [15/16] %v2442, 128
    %2524 = vxpose.xlu0.b32.end [16/16] %v2444, 128
    %v2525 = vpop.trf.xlu0
    %v2526 = vpop.trf.xlu0
    %v2527 = vpop.trf.xlu0
    %v2528 = vpop.trf.xlu0
    %v2529 = vpop.trf.xlu0
    %v2530 = vpop.trf.xlu0
    %v2531 = vpop.trf.xlu0
    %v2532 = vpop.trf.xlu0
    %v2533 = vpop.trf.xlu0
    %v2534 = vpop.trf.xlu0
    %v2535 = vpop.trf.xlu0
    %v2536 = vpop.trf.xlu0
    %v2537 = vpop.trf.xlu0
    %v2538 = vpop.trf.xlu0
    %v2539 = vpop.trf.xlu0
    %v2540 = vpop.trf.xlu0
    %2541 = vxpose.xlu0.b32.start [1/16] %v2445, 128
    %2542 = vxpose.xlu0.b32.cont [2/16] %v2447, 128
    %2543 = vxpose.xlu0.b32.cont [3/16] %v2449, 128
    %2544 = vxpose.xlu0.b32.cont [4/16] %v2451, 128
    %2545 = vxpose.xlu0.b32.cont [5/16] %v2453, 128
    %2546 = vxpose.xlu0.b32.cont [6/16] %v2455, 128
    %2547 = vxpose.xlu0.b32.cont [7/16] %v2457, 128
    %2548 = vxpose.xlu0.b32.cont [8/16] %v2459, 128
    %2549 = vxpose.xlu0.b32.cont [9/16] %v2461, 128
    %2550 = vxpose.xlu0.b32.cont [10/16] %v2463, 128
    %2551 = vxpose.xlu0.b32.cont [11/16] %v2465, 128
    %2552 = vxpose.xlu0.b32.cont [12/16] %v2467, 128
    %2553 = vxpose.xlu0.b32.cont [13/16] %v2469, 128
    %2554 = vxpose.xlu0.b32.cont [14/16] %v2471, 128
    %2555 = vxpose.xlu0.b32.cont [15/16] %v2473, 128
    %2556 = vxpose.xlu0.b32.end [16/16] %v2475, 128
    %v2557 = vpop.trf.xlu0
    %v2558 = vpop.trf.xlu0
    %v2559 = vpop.trf.xlu0
    %v2560 = vpop.trf.xlu0
    %v2561 = vpop.trf.xlu0
    %v2562 = vpop.trf.xlu0
    %v2563 = vpop.trf.xlu0
    %v2564 = vpop.trf.xlu0
    %v2565 = vpop.trf.xlu0
    %v2566 = vpop.trf.xlu0
    %v2567 = vpop.trf.xlu0
    %v2568 = vpop.trf.xlu0
    %v2569 = vpop.trf.xlu0
    %v2570 = vpop.trf.xlu0
    %v2571 = vpop.trf.xlu0
    %v2572 = vpop.trf.xlu0
    %2573 = vxpose.xlu0.b32.start [1/16] %v2446, 128
    %2574 = vxpose.xlu0.b32.cont [2/16] %v2448, 128
    %2575 = vxpose.xlu0.b32.cont [3/16] %v2450, 128
    %2576 = vxpose.xlu0.b32.cont [4/16] %v2452, 128
    %2577 = vxpose.xlu0.b32.cont [5/16] %v2454, 128
    %2578 = vxpose.xlu0.b32.cont [6/16] %v2456, 128
    %2579 = vxpose.xlu0.b32.cont [7/16] %v2458, 128
    %2580 = vxpose.xlu0.b32.cont [8/16] %v2460, 128
    %2581 = vxpose.xlu0.b32.cont [9/16] %v2462, 128
    %2582 = vxpose.xlu0.b32.cont [10/16] %v2464, 128
    %2583 = vxpose.xlu0.b32.cont [11/16] %v2466, 128
    %2584 = vxpose.xlu0.b32.cont [12/16] %v2468, 128
    %2585 = vxpose.xlu0.b32.cont [13/16] %v2470, 128
    %2586 = vxpose.xlu0.b32.cont [14/16] %v2472, 128
    %2587 = vxpose.xlu0.b32.cont [15/16] %v2474, 128
    %2588 = vxpose.xlu0.b32.end [16/16] %v2476, 128
    %v2589 = vpop.trf.xlu0
    %v2590 = vpop.trf.xlu0
    %v2591 = vpop.trf.xlu0
    %v2592 = vpop.trf.xlu0
    %v2593 = vpop.trf.xlu0
    %v2594 = vpop.trf.xlu0
    %v2595 = vpop.trf.xlu0
    %v2596 = vpop.trf.xlu0
    %v2597 = vpop.trf.xlu0
    %v2598 = vpop.trf.xlu0
    %v2599 = vpop.trf.xlu0
    %v2600 = vpop.trf.xlu0
    %v2601 = vpop.trf.xlu0
    %v2602 = vpop.trf.xlu0
    %v2603 = vpop.trf.xlu0
    %v2604 = vpop.trf.xlu0
    %v2605 = vadd.f32 %v2413, %v2493
    %v2606 = vadd.f32 %v2414, %v2557
    %v2607 = vadd.f32 %v2415, %v2494
    %v2608 = vadd.f32 %v2416, %v2558
    %v2609 = vadd.f32 %v2417, %v2495
    %v2610 = vadd.f32 %v2418, %v2559
    %v2611 = vadd.f32 %v2419, %v2496
    %v2612 = vadd.f32 %v2420, %v2560
    %v2613 = vadd.f32 %v2421, %v2497
    %v2614 = vadd.f32 %v2422, %v2561
    %v2615 = vadd.f32 %v2423, %v2498
    %v2616 = vadd.f32 %v2424, %v2562
    %v2617 = vadd.f32 %v2425, %v2499
    %v2618 = vadd.f32 %v2426, %v2563
    %v2619 = vadd.f32 %v2427, %v2500
    %v2620 = vadd.f32 %v2428, %v2564
    %v2621 = vadd.f32 %v2429, %v2501
    %v2622 = vadd.f32 %v2430, %v2565
    %v2623 = vadd.f32 %v2431, %v2502
    %v2624 = vadd.f32 %v2432, %v2566
    %v2625 = vadd.f32 %v2433, %v2503
    %v2626 = vadd.f32 %v2434, %v2567
    %v2627 = vadd.f32 %v2435, %v2504
    %v2628 = vadd.f32 %v2436, %v2568
    %v2629 = vadd.f32 %v2437, %v2505
    %v2630 = vadd.f32 %v2438, %v2569
    %v2631 = vadd.f32 %v2439, %v2506
    %v2632 = vadd.f32 %v2440, %v2570
    %v2633 = vadd.f32 %v2441, %v2507
    %v2634 = vadd.f32 %v2442, %v2571
    %v2635 = vadd.f32 %v2443, %v2508
    %v2636 = vadd.f32 %v2444, %v2572
    %v2637 = vadd.f32 %v2445, %v2525
    %v2638 = vadd.f32 %v2446, %v2589
    %v2639 = vadd.f32 %v2447, %v2526
    %v2640 = vadd.f32 %v2448, %v2590
    %v2641 = vadd.f32 %v2449, %v2527
    %v2642 = vadd.f32 %v2450, %v2591
    %v2643 = vadd.f32 %v2451, %v2528
    %v2644 = vadd.f32 %v2452, %v2592
    %v2645 = vadd.f32 %v2453, %v2529
    %v2646 = vadd.f32 %v2454, %v2593
    %v2647 = vadd.f32 %v2455, %v2530
    %v2648 = vadd.f32 %v2456, %v2594
    %v2649 = vadd.f32 %v2457, %v2531
    %v2650 = vadd.f32 %v2458, %v2595
    %v2651 = vadd.f32 %v2459, %v2532
    %v2652 = vadd.f32 %v2460, %v2596
    %v2653 = vadd.f32 %v2461, %v2533
    %v2654 = vadd.f32 %v2462, %v2597
    %v2655 = vadd.f32 %v2463, %v2534
    %v2656 = vadd.f32 %v2464, %v2598
    %v2657 = vadd.f32 %v2465, %v2535
    %v2658 = vadd.f32 %v2466, %v2599
    %v2659 = vadd.f32 %v2467, %v2536
    %v2660 = vadd.f32 %v2468, %v2600
    %v2661 = vadd.f32 %v2469, %v2537
    %v2662 = vadd.f32 %v2470, %v2601
    %v2663 = vadd.f32 %v2471, %v2538
    %v2664 = vadd.f32 %v2472, %v2602
    %v2665 = vadd.f32 %v2473, %v2539
    %v2666 = vadd.f32 %v2474, %v2603
    %v2667 = vadd.f32 %v2475, %v2540
    %v2668 = vadd.f32 %v2476, %v2604
    %v2669 = vmax.f32 %v2605, 0.0
    %v2670 = vmax.f32 %v2606, 0.0
    %v2671 = vmax.f32 %v2607, 0.0
    %v2672 = vmax.f32 %v2608, 0.0
    %v2673 = vmax.f32 %v2609, 0.0
    %v2674 = vmax.f32 %v2610, 0.0
    %v2675 = vmax.f32 %v2611, 0.0
    %v2676 = vmax.f32 %v2612, 0.0
    %v2677 = vmax.f32 %v2613, 0.0
    %v2678 = vmax.f32 %v2614, 0.0
    %v2679 = vmax.f32 %v2615, 0.0
    %v2680 = vmax.f32 %v2616, 0.0
    %v2681 = vmax.f32 %v2617, 0.0
    %v2682 = vmax.f32 %v2618, 0.0
    %v2683 = vmax.f32 %v2619, 0.0
    %v2684 = vmax.f32 %v2620, 0.0
    %v2685 = vmax.f32 %v2621, 0.0
    %v2686 = vmax.f32 %v2622, 0.0
    %v2687 = vmax.f32 %v2623, 0.0
    %v2688 = vmax.f32 %v2624, 0.0
    %v2689 = vmax.f32 %v2625, 0.0
    %v2690 = vmax.f32 %v2626, 0.0
    %v2691 = vmax.f32 %v2627, 0.0
    %v2692 = vmax.f32 %v2628, 0.0
    %v2693 = vmax.f32 %v2629, 0.0
    %v2694 = vmax.f32 %v2630, 0.0
    %v2695 = vmax.f32 %v2631, 0.0
    %v2696 = vmax.f32 %v2632, 0.0
    %v2697 = vmax.f32 %v2633, 0.0
    %v2698 = vmax.f32 %v2634, 0.0
    %v2699 = vmax.f32 %v2635, 0.0
    %v2700 = vmax.f32 %v2636, 0.0
    %v2701 = vmax.f32 %v2637, 0.0
    %v2702 = vmax.f32 %v2638, 0.0
    %v2703 = vmax.f32 %v2639, 0.0
    %v2704 = vmax.f32 %v2640, 0.0
    %v2705 = vmax.f32 %v2641, 0.0
    %v2706 = vmax.f32 %v2642, 0.0
    %v2707 = vmax.f32 %v2643, 0.0
    %v2708 = vmax.f32 %v2644, 0.0
    %v2709 = vmax.f32 %v2645, 0.0
    %v2710 = vmax.f32 %v2646, 0.0
    %v2711 = vmax.f32 %v2647, 0.0
    %v2712 = vmax.f32 %v2648, 0.0
    %v2713 = vmax.f32 %v2649, 0.0
    %v2714 = vmax.f32 %v2650, 0.0
    %v2715 = vmax.f32 %v2651, 0.0
    %v2716 = vmax.f32 %v2652, 0.0
    %v2717 = vmax.f32 %v2653, 0.0
    %v2718 = vmax.f32 %v2654, 0.0
    %v2719 = vmax.f32 %v2655, 0.0
    %v2720 = vmax.f32 %v2656, 0.0
    %v2721 = vmax.f32 %v2657, 0.0
    %v2722 = vmax.f32 %v2658, 0.0
    %v2723 = vmax.f32 %v2659, 0.0
    %v2724 = vmax.f32 %v2660, 0.0
    %v2725 = vmax.f32 %v2661, 0.0
    %v2726 = vmax.f32 %v2662, 0.0
    %v2727 = vmax.f32 %v2663, 0.0
    %v2728 = vmax.f32 %v2664, 0.0
    %v2729 = vmax.f32 %v2665, 0.0
    %v2730 = vmax.f32 %v2666, 0.0
    %v2731 = vmax.f32 %v2667, 0.0
    %v2732 = vmax.f32 %v2668, 0.0
    %v2733 = vrsqrt.pop %v2669
    %v2734 = vmul.f32 %v2733, %v2669
    %v2735 = vmul.f32 %v2734, %v2733
    %v2736 = vmul.f32 0.5, %v2735
    %v2737 = vsub.f32 1.5, %v2736
    %v2738 = vmul.f32 %v2733, %v2737
    %v2739 = vmul.f32 %v2669, %v2738
    %vm2740 = vcmp.eq.f32.partialorder %v2669, inf
    %v2741 = vsel %vm2740, %v2669, %v2739
    %vm2742 = vcmp.eq.f32.partialorder %v2669, 0.0
    %v2743 = vand.u32 %v2669, 2147483648
    %v2744 = vsel %vm2742, %v2743, %v2741
    %v2745 = vrsqrt.pop %v2670
    %v2746 = vmul.f32 %v2745, %v2670
    %v2747 = vmul.f32 %v2746, %v2745
    %v2748 = vmul.f32 0.5, %v2747
    %v2749 = vsub.f32 1.5, %v2748
    %v2750 = vmul.f32 %v2745, %v2749
    %v2751 = vmul.f32 %v2670, %v2750
    %vm2752 = vcmp.eq.f32.partialorder %v2670, inf
    %v2753 = vsel %vm2752, %v2670, %v2751
    %vm2754 = vcmp.eq.f32.partialorder %v2670, 0.0
    %v2755 = vand.u32 %v2670, 2147483648
    %v2756 = vsel %vm2754, %v2755, %v2753
    %v2757 = vrsqrt.pop %v2671
    %v2758 = vmul.f32 %v2757, %v2671
    %v2759 = vmul.f32 %v2758, %v2757
    %v2760 = vmul.f32 0.5, %v2759
    %v2761 = vsub.f32 1.5, %v2760
    %v2762 = vmul.f32 %v2757, %v2761
    %v2763 = vmul.f32 %v2671, %v2762
    %vm2764 = vcmp.eq.f32.partialorder %v2671, inf
    %v2765 = vsel %vm2764, %v2671, %v2763
    %vm2766 = vcmp.eq.f32.partialorder %v2671, 0.0
    %v2767 = vand.u32 %v2671, 2147483648
    %v2768 = vsel %vm2766, %v2767, %v2765
    %v2769 = vrsqrt.pop %v2672
    %v2770 = vmul.f32 %v2769, %v2672
    %v2771 = vmul.f32 %v2770, %v2769
    %v2772 = vmul.f32 0.5, %v2771
    %v2773 = vsub.f32 1.5, %v2772
    %v2774 = vmul.f32 %v2769, %v2773
    %v2775 = vmul.f32 %v2672, %v2774
    %vm2776 = vcmp.eq.f32.partialorder %v2672, inf
    %v2777 = vsel %vm2776, %v2672, %v2775
    %vm2778 = vcmp.eq.f32.partialorder %v2672, 0.0
    %v2779 = vand.u32 %v2672, 2147483648
    %v2780 = vsel %vm2778, %v2779, %v2777
    %v2781 = vrsqrt.pop %v2673
    %v2782 = vmul.f32 %v2781, %v2673
    %v2783 = vmul.f32 %v2782, %v2781
    %v2784 = vmul.f32 0.5, %v2783
    %v2785 = vsub.f32 1.5, %v2784
    %v2786 = vmul.f32 %v2781, %v2785
    %v2787 = vmul.f32 %v2673, %v2786
    %vm2788 = vcmp.eq.f32.partialorder %v2673, inf
    %v2789 = vsel %vm2788, %v2673, %v2787
    %vm2790 = vcmp.eq.f32.partialorder %v2673, 0.0
    %v2791 = vand.u32 %v2673, 2147483648
    %v2792 = vsel %vm2790, %v2791, %v2789
    %v2793 = vrsqrt.pop %v2674
    %v2794 = vmul.f32 %v2793, %v2674
    %v2795 = vmul.f32 %v2794, %v2793
    %v2796 = vmul.f32 0.5, %v2795
    %v2797 = vsub.f32 1.5, %v2796
    %v2798 = vmul.f32 %v2793, %v2797
    %v2799 = vmul.f32 %v2674, %v2798
    %vm2800 = vcmp.eq.f32.partialorder %v2674, inf
    %v2801 = vsel %vm2800, %v2674, %v2799
    %vm2802 = vcmp.eq.f32.partialorder %v2674, 0.0
    %v2803 = vand.u32 %v2674, 2147483648
    %v2804 = vsel %vm2802, %v2803, %v2801
    %v2805 = vrsqrt.pop %v2675
    %v2806 = vmul.f32 %v2805, %v2675
    %v2807 = vmul.f32 %v2806, %v2805
    %v2808 = vmul.f32 0.5, %v2807
    %v2809 = vsub.f32 1.5, %v2808
    %v2810 = vmul.f32 %v2805, %v2809
    %v2811 = vmul.f32 %v2675, %v2810
    %vm2812 = vcmp.eq.f32.partialorder %v2675, inf
    %v2813 = vsel %vm2812, %v2675, %v2811
    %vm2814 = vcmp.eq.f32.partialorder %v2675, 0.0
    %v2815 = vand.u32 %v2675, 2147483648
    %v2816 = vsel %vm2814, %v2815, %v2813
    %v2817 = vrsqrt.pop %v2676
    %v2818 = vmul.f32 %v2817, %v2676
    %v2819 = vmul.f32 %v2818, %v2817
    %v2820 = vmul.f32 0.5, %v2819
    %v2821 = vsub.f32 1.5, %v2820
    %v2822 = vmul.f32 %v2817, %v2821
    %v2823 = vmul.f32 %v2676, %v2822
    %vm2824 = vcmp.eq.f32.partialorder %v2676, inf
    %v2825 = vsel %vm2824, %v2676, %v2823
    %vm2826 = vcmp.eq.f32.partialorder %v2676, 0.0
    %v2827 = vand.u32 %v2676, 2147483648
    %v2828 = vsel %vm2826, %v2827, %v2825
    %v2829 = vrsqrt.pop %v2677
    %v2830 = vmul.f32 %v2829, %v2677
    %v2831 = vmul.f32 %v2830, %v2829
    %v2832 = vmul.f32 0.5, %v2831
    %v2833 = vsub.f32 1.5, %v2832
    %v2834 = vmul.f32 %v2829, %v2833
    %v2835 = vmul.f32 %v2677, %v2834
    %vm2836 = vcmp.eq.f32.partialorder %v2677, inf
    %v2837 = vsel %vm2836, %v2677, %v2835
    %vm2838 = vcmp.eq.f32.partialorder %v2677, 0.0
    %v2839 = vand.u32 %v2677, 2147483648
    %v2840 = vsel %vm2838, %v2839, %v2837
    %v2841 = vrsqrt.pop %v2678
    %v2842 = vmul.f32 %v2841, %v2678
    %v2843 = vmul.f32 %v2842, %v2841
    %v2844 = vmul.f32 0.5, %v2843
    %v2845 = vsub.f32 1.5, %v2844
    %v2846 = vmul.f32 %v2841, %v2845
    %v2847 = vmul.f32 %v2678, %v2846
    %vm2848 = vcmp.eq.f32.partialorder %v2678, inf
    %v2849 = vsel %vm2848, %v2678, %v2847
    %vm2850 = vcmp.eq.f32.partialorder %v2678, 0.0
    %v2851 = vand.u32 %v2678, 2147483648
    %v2852 = vsel %vm2850, %v2851, %v2849
    %v2853 = vrsqrt.pop %v2679
    %v2854 = vmul.f32 %v2853, %v2679
    %v2855 = vmul.f32 %v2854, %v2853
    %v2856 = vmul.f32 0.5, %v2855
    %v2857 = vsub.f32 1.5, %v2856
    %v2858 = vmul.f32 %v2853, %v2857
    %v2859 = vmul.f32 %v2679, %v2858
    %vm2860 = vcmp.eq.f32.partialorder %v2679, inf
    %v2861 = vsel %vm2860, %v2679, %v2859
    %vm2862 = vcmp.eq.f32.partialorder %v2679, 0.0
    %v2863 = vand.u32 %v2679, 2147483648
    %v2864 = vsel %vm2862, %v2863, %v2861
    %v2865 = vrsqrt.pop %v2680
    %v2866 = vmul.f32 %v2865, %v2680
    %v2867 = vmul.f32 %v2866, %v2865
    %v2868 = vmul.f32 0.5, %v2867
    %v2869 = vsub.f32 1.5, %v2868
    %v2870 = vmul.f32 %v2865, %v2869
    %v2871 = vmul.f32 %v2680, %v2870
    %vm2872 = vcmp.eq.f32.partialorder %v2680, inf
    %v2873 = vsel %vm2872, %v2680, %v2871
    %vm2874 = vcmp.eq.f32.partialorder %v2680, 0.0
    %v2875 = vand.u32 %v2680, 2147483648
    %v2876 = vsel %vm2874, %v2875, %v2873
    %v2877 = vrsqrt.pop %v2681
    %v2878 = vmul.f32 %v2877, %v2681
    %v2879 = vmul.f32 %v2878, %v2877
    %v2880 = vmul.f32 0.5, %v2879
    %v2881 = vsub.f32 1.5, %v2880
    %v2882 = vmul.f32 %v2877, %v2881
    %v2883 = vmul.f32 %v2681, %v2882
    %vm2884 = vcmp.eq.f32.partialorder %v2681, inf
    %v2885 = vsel %vm2884, %v2681, %v2883
    %vm2886 = vcmp.eq.f32.partialorder %v2681, 0.0
    %v2887 = vand.u32 %v2681, 2147483648
    %v2888 = vsel %vm2886, %v2887, %v2885
    %v2889 = vrsqrt.pop %v2682
    %v2890 = vmul.f32 %v2889, %v2682
    %v2891 = vmul.f32 %v2890, %v2889
    %v2892 = vmul.f32 0.5, %v2891
    %v2893 = vsub.f32 1.5, %v2892
    %v2894 = vmul.f32 %v2889, %v2893
    %v2895 = vmul.f32 %v2682, %v2894
    %vm2896 = vcmp.eq.f32.partialorder %v2682, inf
    %v2897 = vsel %vm2896, %v2682, %v2895
    %vm2898 = vcmp.eq.f32.partialorder %v2682, 0.0
    %v2899 = vand.u32 %v2682, 2147483648
    %v2900 = vsel %vm2898, %v2899, %v2897
    %v2901 = vrsqrt.pop %v2683
    %v2902 = vmul.f32 %v2901, %v2683
    %v2903 = vmul.f32 %v2902, %v2901
    %v2904 = vmul.f32 0.5, %v2903
    %v2905 = vsub.f32 1.5, %v2904
    %v2906 = vmul.f32 %v2901, %v2905
    %v2907 = vmul.f32 %v2683, %v2906
    %vm2908 = vcmp.eq.f32.partialorder %v2683, inf
    %v2909 = vsel %vm2908, %v2683, %v2907
    %vm2910 = vcmp.eq.f32.partialorder %v2683, 0.0
    %v2911 = vand.u32 %v2683, 2147483648
    %v2912 = vsel %vm2910, %v2911, %v2909
    %v2913 = vrsqrt.pop %v2684
    %v2914 = vmul.f32 %v2913, %v2684
    %v2915 = vmul.f32 %v2914, %v2913
    %v2916 = vmul.f32 0.5, %v2915
    %v2917 = vsub.f32 1.5, %v2916
    %v2918 = vmul.f32 %v2913, %v2917
    %v2919 = vmul.f32 %v2684, %v2918
    %vm2920 = vcmp.eq.f32.partialorder %v2684, inf
    %v2921 = vsel %vm2920, %v2684, %v2919
    %vm2922 = vcmp.eq.f32.partialorder %v2684, 0.0
    %v2923 = vand.u32 %v2684, 2147483648
    %v2924 = vsel %vm2922, %v2923, %v2921
    %v2925 = vrsqrt.pop %v2685
    %v2926 = vmul.f32 %v2925, %v2685
    %v2927 = vmul.f32 %v2926, %v2925
    %v2928 = vmul.f32 0.5, %v2927
    %v2929 = vsub.f32 1.5, %v2928
    %v2930 = vmul.f32 %v2925, %v2929
    %v2931 = vmul.f32 %v2685, %v2930
    %vm2932 = vcmp.eq.f32.partialorder %v2685, inf
    %v2933 = vsel %vm2932, %v2685, %v2931
    %vm2934 = vcmp.eq.f32.partialorder %v2685, 0.0
    %v2935 = vand.u32 %v2685, 2147483648
    %v2936 = vsel %vm2934, %v2935, %v2933
    %v2937 = vrsqrt.pop %v2686
    %v2938 = vmul.f32 %v2937, %v2686
    %v2939 = vmul.f32 %v2938, %v2937
    %v2940 = vmul.f32 0.5, %v2939
    %v2941 = vsub.f32 1.5, %v2940
    %v2942 = vmul.f32 %v2937, %v2941
    %v2943 = vmul.f32 %v2686, %v2942
    %vm2944 = vcmp.eq.f32.partialorder %v2686, inf
    %v2945 = vsel %vm2944, %v2686, %v2943
    %vm2946 = vcmp.eq.f32.partialorder %v2686, 0.0
    %v2947 = vand.u32 %v2686, 2147483648
    %v2948 = vsel %vm2946, %v2947, %v2945
    %v2949 = vrsqrt.pop %v2687
    %v2950 = vmul.f32 %v2949, %v2687
    %v2951 = vmul.f32 %v2950, %v2949
    %v2952 = vmul.f32 0.5, %v2951
    %v2953 = vsub.f32 1.5, %v2952
    %v2954 = vmul.f32 %v2949, %v2953
    %v2955 = vmul.f32 %v2687, %v2954
    %vm2956 = vcmp.eq.f32.partialorder %v2687, inf
    %v2957 = vsel %vm2956, %v2687, %v2955
    %vm2958 = vcmp.eq.f32.partialorder %v2687, 0.0
    %v2959 = vand.u32 %v2687, 2147483648
    %v2960 = vsel %vm2958, %v2959, %v2957
    %v2961 = vrsqrt.pop %v2688
    %v2962 = vmul.f32 %v2961, %v2688
    %v2963 = vmul.f32 %v2962, %v2961
    %v2964 = vmul.f32 0.5, %v2963
    %v2965 = vsub.f32 1.5, %v2964
    %v2966 = vmul.f32 %v2961, %v2965
    %v2967 = vmul.f32 %v2688, %v2966
    %vm2968 = vcmp.eq.f32.partialorder %v2688, inf
    %v2969 = vsel %vm2968, %v2688, %v2967
    %vm2970 = vcmp.eq.f32.partialorder %v2688, 0.0
    %v2971 = vand.u32 %v2688, 2147483648
    %v2972 = vsel %vm2970, %v2971, %v2969
    %v2973 = vrsqrt.pop %v2689
    %v2974 = vmul.f32 %v2973, %v2689
    %v2975 = vmul.f32 %v2974, %v2973
    %v2976 = vmul.f32 0.5, %v2975
    %v2977 = vsub.f32 1.5, %v2976
    %v2978 = vmul.f32 %v2973, %v2977
    %v2979 = vmul.f32 %v2689, %v2978
    %vm2980 = vcmp.eq.f32.partialorder %v2689, inf
    %v2981 = vsel %vm2980, %v2689, %v2979
    %vm2982 = vcmp.eq.f32.partialorder %v2689, 0.0
    %v2983 = vand.u32 %v2689, 2147483648
    %v2984 = vsel %vm2982, %v2983, %v2981
    %v2985 = vrsqrt.pop %v2690
    %v2986 = vmul.f32 %v2985, %v2690
    %v2987 = vmul.f32 %v2986, %v2985
    %v2988 = vmul.f32 0.5, %v2987
    %v2989 = vsub.f32 1.5, %v2988
    %v2990 = vmul.f32 %v2985, %v2989
    %v2991 = vmul.f32 %v2690, %v2990
    %vm2992 = vcmp.eq.f32.partialorder %v2690, inf
    %v2993 = vsel %vm2992, %v2690, %v2991
    %vm2994 = vcmp.eq.f32.partialorder %v2690, 0.0
    %v2995 = vand.u32 %v2690, 2147483648
    %v2996 = vsel %vm2994, %v2995, %v2993
    %v2997 = vrsqrt.pop %v2691
    %v2998 = vmul.f32 %v2997, %v2691
    %v2999 = vmul.f32 %v2998, %v2997
    %v3000 = vmul.f32 0.5, %v2999
    %v3001 = vsub.f32 1.5, %v3000
    %v3002 = vmul.f32 %v2997, %v3001
    %v3003 = vmul.f32 %v2691, %v3002
    %vm3004 = vcmp.eq.f32.partialorder %v2691, inf
    %v3005 = vsel %vm3004, %v2691, %v3003
    %vm3006 = vcmp.eq.f32.partialorder %v2691, 0.0
    %v3007 = vand.u32 %v2691, 2147483648
    %v3008 = vsel %vm3006, %v3007, %v3005
    %v3009 = vrsqrt.pop %v2692
    %v3010 = vmul.f32 %v3009, %v2692
    %v3011 = vmul.f32 %v3010, %v3009
    %v3012 = vmul.f32 0.5, %v3011
    %v3013 = vsub.f32 1.5, %v3012
    %v3014 = vmul.f32 %v3009, %v3013
    %v3015 = vmul.f32 %v2692, %v3014
    %vm3016 = vcmp.eq.f32.partialorder %v2692, inf
    %v3017 = vsel %vm3016, %v2692, %v3015
    %vm3018 = vcmp.eq.f32.partialorder %v2692, 0.0
    %v3019 = vand.u32 %v2692, 2147483648
    %v3020 = vsel %vm3018, %v3019, %v3017
    %v3021 = vrsqrt.pop %v2693
    %v3022 = vmul.f32 %v3021, %v2693
    %v3023 = vmul.f32 %v3022, %v3021
    %v3024 = vmul.f32 0.5, %v3023
    %v3025 = vsub.f32 1.5, %v3024
    %v3026 = vmul.f32 %v3021, %v3025
    %v3027 = vmul.f32 %v2693, %v3026
    %vm3028 = vcmp.eq.f32.partialorder %v2693, inf
    %v3029 = vsel %vm3028, %v2693, %v3027
    %vm3030 = vcmp.eq.f32.partialorder %v2693, 0.0
    %v3031 = vand.u32 %v2693, 2147483648
    %v3032 = vsel %vm3030, %v3031, %v3029
    %v3033 = vrsqrt.pop %v2694
    %v3034 = vmul.f32 %v3033, %v2694
    %v3035 = vmul.f32 %v3034, %v3033
    %v3036 = vmul.f32 0.5, %v3035
    %v3037 = vsub.f32 1.5, %v3036
    %v3038 = vmul.f32 %v3033, %v3037
    %v3039 = vmul.f32 %v2694, %v3038
    %vm3040 = vcmp.eq.f32.partialorder %v2694, inf
    %v3041 = vsel %vm3040, %v2694, %v3039
    %vm3042 = vcmp.eq.f32.partialorder %v2694, 0.0
    %v3043 = vand.u32 %v2694, 2147483648
    %v3044 = vsel %vm3042, %v3043, %v3041
    %v3045 = vrsqrt.pop %v2695
    %v3046 = vmul.f32 %v3045, %v2695
    %v3047 = vmul.f32 %v3046, %v3045
    %v3048 = vmul.f32 0.5, %v3047
    %v3049 = vsub.f32 1.5, %v3048
    %v3050 = vmul.f32 %v3045, %v3049
    %v3051 = vmul.f32 %v2695, %v3050
    %vm3052 = vcmp.eq.f32.partialorder %v2695, inf
    %v3053 = vsel %vm3052, %v2695, %v3051
    %vm3054 = vcmp.eq.f32.partialorder %v2695, 0.0
    %v3055 = vand.u32 %v2695, 2147483648
    %v3056 = vsel %vm3054, %v3055, %v3053
    %v3057 = vrsqrt.pop %v2696
    %v3058 = vmul.f32 %v3057, %v2696
    %v3059 = vmul.f32 %v3058, %v3057
    %v3060 = vmul.f32 0.5, %v3059
    %v3061 = vsub.f32 1.5, %v3060
    %v3062 = vmul.f32 %v3057, %v3061
    %v3063 = vmul.f32 %v2696, %v3062
    %vm3064 = vcmp.eq.f32.partialorder %v2696, inf
    %v3065 = vsel %vm3064, %v2696, %v3063
    %vm3066 = vcmp.eq.f32.partialorder %v2696, 0.0
    %v3067 = vand.u32 %v2696, 2147483648
    %v3068 = vsel %vm3066, %v3067, %v3065
    %v3069 = vrsqrt.pop %v2697
    %v3070 = vmul.f32 %v3069, %v2697
    %v3071 = vmul.f32 %v3070, %v3069
    %v3072 = vmul.f32 0.5, %v3071
    %v3073 = vsub.f32 1.5, %v3072
    %v3074 = vmul.f32 %v3069, %v3073
    %v3075 = vmul.f32 %v2697, %v3074
    %vm3076 = vcmp.eq.f32.partialorder %v2697, inf
    %v3077 = vsel %vm3076, %v2697, %v3075
    %vm3078 = vcmp.eq.f32.partialorder %v2697, 0.0
    %v3079 = vand.u32 %v2697, 2147483648
    %v3080 = vsel %vm3078, %v3079, %v3077
    %v3081 = vrsqrt.pop %v2698
    %v3082 = vmul.f32 %v3081, %v2698
    %v3083 = vmul.f32 %v3082, %v3081
    %v3084 = vmul.f32 0.5, %v3083
    %v3085 = vsub.f32 1.5, %v3084
    %v3086 = vmul.f32 %v3081, %v3085
    %v3087 = vmul.f32 %v2698, %v3086
    %vm3088 = vcmp.eq.f32.partialorder %v2698, inf
    %v3089 = vsel %vm3088, %v2698, %v3087
    %vm3090 = vcmp.eq.f32.partialorder %v2698, 0.0
    %v3091 = vand.u32 %v2698, 2147483648
    %v3092 = vsel %vm3090, %v3091, %v3089
    %v3093 = vrsqrt.pop %v2699
    %v3094 = vmul.f32 %v3093, %v2699
    %v3095 = vmul.f32 %v3094, %v3093
    %v3096 = vmul.f32 0.5, %v3095
    %v3097 = vsub.f32 1.5, %v3096
    %v3098 = vmul.f32 %v3093, %v3097
    %v3099 = vmul.f32 %v2699, %v3098
    %vm3100 = vcmp.eq.f32.partialorder %v2699, inf
    %v3101 = vsel %vm3100, %v2699, %v3099
    %vm3102 = vcmp.eq.f32.partialorder %v2699, 0.0
    %v3103 = vand.u32 %v2699, 2147483648
    %v3104 = vsel %vm3102, %v3103, %v3101
    %v3105 = vrsqrt.pop %v2700
    %v3106 = vmul.f32 %v3105, %v2700
    %v3107 = vmul.f32 %v3106, %v3105
    %v3108 = vmul.f32 0.5, %v3107
    %v3109 = vsub.f32 1.5, %v3108
    %v3110 = vmul.f32 %v3105, %v3109
    %v3111 = vmul.f32 %v2700, %v3110
    %vm3112 = vcmp.eq.f32.partialorder %v2700, inf
    %v3113 = vsel %vm3112, %v2700, %v3111
    %vm3114 = vcmp.eq.f32.partialorder %v2700, 0.0
    %v3115 = vand.u32 %v2700, 2147483648
    %v3116 = vsel %vm3114, %v3115, %v3113
    %v3117 = vrsqrt.pop %v2701
    %v3118 = vmul.f32 %v3117, %v2701
    %v3119 = vmul.f32 %v3118, %v3117
    %v3120 = vmul.f32 0.5, %v3119
    %v3121 = vsub.f32 1.5, %v3120
    %v3122 = vmul.f32 %v3117, %v3121
    %v3123 = vmul.f32 %v2701, %v3122
    %vm3124 = vcmp.eq.f32.partialorder %v2701, inf
    %v3125 = vsel %vm3124, %v2701, %v3123
    %vm3126 = vcmp.eq.f32.partialorder %v2701, 0.0
    %v3127 = vand.u32 %v2701, 2147483648
    %v3128 = vsel %vm3126, %v3127, %v3125
    %v3129 = vrsqrt.pop %v2702
    %v3130 = vmul.f32 %v3129, %v2702
    %v3131 = vmul.f32 %v3130, %v3129
    %v3132 = vmul.f32 0.5, %v3131
    %v3133 = vsub.f32 1.5, %v3132
    %v3134 = vmul.f32 %v3129, %v3133
    %v3135 = vmul.f32 %v2702, %v3134
    %vm3136 = vcmp.eq.f32.partialorder %v2702, inf
    %v3137 = vsel %vm3136, %v2702, %v3135
    %vm3138 = vcmp.eq.f32.partialorder %v2702, 0.0
    %v3139 = vand.u32 %v2702, 2147483648
    %v3140 = vsel %vm3138, %v3139, %v3137
    %v3141 = vrsqrt.pop %v2703
    %v3142 = vmul.f32 %v3141, %v2703
    %v3143 = vmul.f32 %v3142, %v3141
    %v3144 = vmul.f32 0.5, %v3143
    %v3145 = vsub.f32 1.5, %v3144
    %v3146 = vmul.f32 %v3141, %v3145
    %v3147 = vmul.f32 %v2703, %v3146
    %vm3148 = vcmp.eq.f32.partialorder %v2703, inf
    %v3149 = vsel %vm3148, %v2703, %v3147
    %vm3150 = vcmp.eq.f32.partialorder %v2703, 0.0
    %v3151 = vand.u32 %v2703, 2147483648
    %v3152 = vsel %vm3150, %v3151, %v3149
    %v3153 = vrsqrt.pop %v2704
    %v3154 = vmul.f32 %v3153, %v2704
    %v3155 = vmul.f32 %v3154, %v3153
    %v3156 = vmul.f32 0.5, %v3155
    %v3157 = vsub.f32 1.5, %v3156
    %v3158 = vmul.f32 %v3153, %v3157
    %v3159 = vmul.f32 %v2704, %v3158
    %vm3160 = vcmp.eq.f32.partialorder %v2704, inf
    %v3161 = vsel %vm3160, %v2704, %v3159
    %vm3162 = vcmp.eq.f32.partialorder %v2704, 0.0
    %v3163 = vand.u32 %v2704, 2147483648
    %v3164 = vsel %vm3162, %v3163, %v3161
    %v3165 = vrsqrt.pop %v2705
    %v3166 = vmul.f32 %v3165, %v2705
    %v3167 = vmul.f32 %v3166, %v3165
    %v3168 = vmul.f32 0.5, %v3167
    %v3169 = vsub.f32 1.5, %v3168
    %v3170 = vmul.f32 %v3165, %v3169
    %v3171 = vmul.f32 %v2705, %v3170
    %vm3172 = vcmp.eq.f32.partialorder %v2705, inf
    %v3173 = vsel %vm3172, %v2705, %v3171
    %vm3174 = vcmp.eq.f32.partialorder %v2705, 0.0
    %v3175 = vand.u32 %v2705, 2147483648
    %v3176 = vsel %vm3174, %v3175, %v3173
    %v3177 = vrsqrt.pop %v2706
    %v3178 = vmul.f32 %v3177, %v2706
    %v3179 = vmul.f32 %v3178, %v3177
    %v3180 = vmul.f32 0.5, %v3179
    %v3181 = vsub.f32 1.5, %v3180
    %v3182 = vmul.f32 %v3177, %v3181
    %v3183 = vmul.f32 %v2706, %v3182
    %vm3184 = vcmp.eq.f32.partialorder %v2706, inf
    %v3185 = vsel %vm3184, %v2706, %v3183
    %vm3186 = vcmp.eq.f32.partialorder %v2706, 0.0
    %v3187 = vand.u32 %v2706, 2147483648
    %v3188 = vsel %vm3186, %v3187, %v3185
    %v3189 = vrsqrt.pop %v2707
    %v3190 = vmul.f32 %v3189, %v2707
    %v3191 = vmul.f32 %v3190, %v3189
    %v3192 = vmul.f32 0.5, %v3191
    %v3193 = vsub.f32 1.5, %v3192
    %v3194 = vmul.f32 %v3189, %v3193
    %v3195 = vmul.f32 %v2707, %v3194
    %vm3196 = vcmp.eq.f32.partialorder %v2707, inf
    %v3197 = vsel %vm3196, %v2707, %v3195
    %vm3198 = vcmp.eq.f32.partialorder %v2707, 0.0
    %v3199 = vand.u32 %v2707, 2147483648
    %v3200 = vsel %vm3198, %v3199, %v3197
    %v3201 = vrsqrt.pop %v2708
    %v3202 = vmul.f32 %v3201, %v2708
    %v3203 = vmul.f32 %v3202, %v3201
    %v3204 = vmul.f32 0.5, %v3203
    %v3205 = vsub.f32 1.5, %v3204
    %v3206 = vmul.f32 %v3201, %v3205
    %v3207 = vmul.f32 %v2708, %v3206
    %vm3208 = vcmp.eq.f32.partialorder %v2708, inf
    %v3209 = vsel %vm3208, %v2708, %v3207
    %vm3210 = vcmp.eq.f32.partialorder %v2708, 0.0
    %v3211 = vand.u32 %v2708, 2147483648
    %v3212 = vsel %vm3210, %v3211, %v3209
    %v3213 = vrsqrt.pop %v2709
    %v3214 = vmul.f32 %v3213, %v2709
    %v3215 = vmul.f32 %v3214, %v3213
    %v3216 = vmul.f32 0.5, %v3215
    %v3217 = vsub.f32 1.5, %v3216
    %v3218 = vmul.f32 %v3213, %v3217
    %v3219 = vmul.f32 %v2709, %v3218
    %vm3220 = vcmp.eq.f32.partialorder %v2709, inf
    %v3221 = vsel %vm3220, %v2709, %v3219
    %vm3222 = vcmp.eq.f32.partialorder %v2709, 0.0
    %v3223 = vand.u32 %v2709, 2147483648
    %v3224 = vsel %vm3222, %v3223, %v3221
    %v3225 = vrsqrt.pop %v2710
    %v3226 = vmul.f32 %v3225, %v2710
    %v3227 = vmul.f32 %v3226, %v3225
    %v3228 = vmul.f32 0.5, %v3227
    %v3229 = vsub.f32 1.5, %v3228
    %v3230 = vmul.f32 %v3225, %v3229
    %v3231 = vmul.f32 %v2710, %v3230
    %vm3232 = vcmp.eq.f32.partialorder %v2710, inf
    %v3233 = vsel %vm3232, %v2710, %v3231
    %vm3234 = vcmp.eq.f32.partialorder %v2710, 0.0
    %v3235 = vand.u32 %v2710, 2147483648
    %v3236 = vsel %vm3234, %v3235, %v3233
    %v3237 = vrsqrt.pop %v2711
    %v3238 = vmul.f32 %v3237, %v2711
    %v3239 = vmul.f32 %v3238, %v3237
    %v3240 = vmul.f32 0.5, %v3239
    %v3241 = vsub.f32 1.5, %v3240
    %v3242 = vmul.f32 %v3237, %v3241
    %v3243 = vmul.f32 %v2711, %v3242
    %vm3244 = vcmp.eq.f32.partialorder %v2711, inf
    %v3245 = vsel %vm3244, %v2711, %v3243
    %vm3246 = vcmp.eq.f32.partialorder %v2711, 0.0
    %v3247 = vand.u32 %v2711, 2147483648
    %v3248 = vsel %vm3246, %v3247, %v3245
    %v3249 = vrsqrt.pop %v2712
    %v3250 = vmul.f32 %v3249, %v2712
    %v3251 = vmul.f32 %v3250, %v3249
    %v3252 = vmul.f32 0.5, %v3251
    %v3253 = vsub.f32 1.5, %v3252
    %v3254 = vmul.f32 %v3249, %v3253
    %v3255 = vmul.f32 %v2712, %v3254
    %vm3256 = vcmp.eq.f32.partialorder %v2712, inf
    %v3257 = vsel %vm3256, %v2712, %v3255
    %vm3258 = vcmp.eq.f32.partialorder %v2712, 0.0
    %v3259 = vand.u32 %v2712, 2147483648
    %v3260 = vsel %vm3258, %v3259, %v3257
    %v3261 = vrsqrt.pop %v2713
    %v3262 = vmul.f32 %v3261, %v2713
    %v3263 = vmul.f32 %v3262, %v3261
    %v3264 = vmul.f32 0.5, %v3263
    %v3265 = vsub.f32 1.5, %v3264
    %v3266 = vmul.f32 %v3261, %v3265
    %v3267 = vmul.f32 %v2713, %v3266
    %vm3268 = vcmp.eq.f32.partialorder %v2713, inf
    %v3269 = vsel %vm3268, %v2713, %v3267
    %vm3270 = vcmp.eq.f32.partialorder %v2713, 0.0
    %v3271 = vand.u32 %v2713, 2147483648
    %v3272 = vsel %vm3270, %v3271, %v3269
    %v3273 = vrsqrt.pop %v2714
    %v3274 = vmul.f32 %v3273, %v2714
    %v3275 = vmul.f32 %v3274, %v3273
    %v3276 = vmul.f32 0.5, %v3275
    %v3277 = vsub.f32 1.5, %v3276
    %v3278 = vmul.f32 %v3273, %v3277
    %v3279 = vmul.f32 %v2714, %v3278
    %vm3280 = vcmp.eq.f32.partialorder %v2714, inf
    %v3281 = vsel %vm3280, %v2714, %v3279
    %vm3282 = vcmp.eq.f32.partialorder %v2714, 0.0
    %v3283 = vand.u32 %v2714, 2147483648
    %v3284 = vsel %vm3282, %v3283, %v3281
    %v3285 = vrsqrt.pop %v2715
    %v3286 = vmul.f32 %v3285, %v2715
    %v3287 = vmul.f32 %v3286, %v3285
    %v3288 = vmul.f32 0.5, %v3287
    %v3289 = vsub.f32 1.5, %v3288
    %v3290 = vmul.f32 %v3285, %v3289
    %v3291 = vmul.f32 %v2715, %v3290
    %vm3292 = vcmp.eq.f32.partialorder %v2715, inf
    %v3293 = vsel %vm3292, %v2715, %v3291
    %vm3294 = vcmp.eq.f32.partialorder %v2715, 0.0
    %v3295 = vand.u32 %v2715, 2147483648
    %v3296 = vsel %vm3294, %v3295, %v3293
    %v3297 = vrsqrt.pop %v2716
    %v3298 = vmul.f32 %v3297, %v2716
    %v3299 = vmul.f32 %v3298, %v3297
    %v3300 = vmul.f32 0.5, %v3299
    %v3301 = vsub.f32 1.5, %v3300
    %v3302 = vmul.f32 %v3297, %v3301
    %v3303 = vmul.f32 %v2716, %v3302
    %vm3304 = vcmp.eq.f32.partialorder %v2716, inf
    %v3305 = vsel %vm3304, %v2716, %v3303
    %vm3306 = vcmp.eq.f32.partialorder %v2716, 0.0
    %v3307 = vand.u32 %v2716, 2147483648
    %v3308 = vsel %vm3306, %v3307, %v3305
    %v3309 = vrsqrt.pop %v2717
    %v3310 = vmul.f32 %v3309, %v2717
    %v3311 = vmul.f32 %v3310, %v3309
    %v3312 = vmul.f32 0.5, %v3311
    %v3313 = vsub.f32 1.5, %v3312
    %v3314 = vmul.f32 %v3309, %v3313
    %v3315 = vmul.f32 %v2717, %v3314
    %vm3316 = vcmp.eq.f32.partialorder %v2717, inf
    %v3317 = vsel %vm3316, %v2717, %v3315
    %vm3318 = vcmp.eq.f32.partialorder %v2717, 0.0
    %v3319 = vand.u32 %v2717, 2147483648
    %v3320 = vsel %vm3318, %v3319, %v3317
    %v3321 = vrsqrt.pop %v2718
    %v3322 = vmul.f32 %v3321, %v2718
    %v3323 = vmul.f32 %v3322, %v3321
    %v3324 = vmul.f32 0.5, %v3323
    %v3325 = vsub.f32 1.5, %v3324
    %v3326 = vmul.f32 %v3321, %v3325
    %v3327 = vmul.f32 %v2718, %v3326
    %vm3328 = vcmp.eq.f32.partialorder %v2718, inf
    %v3329 = vsel %vm3328, %v2718, %v3327
    %vm3330 = vcmp.eq.f32.partialorder %v2718, 0.0
    %v3331 = vand.u32 %v2718, 2147483648
    %v3332 = vsel %vm3330, %v3331, %v3329
    %v3333 = vrsqrt.pop %v2719
    %v3334 = vmul.f32 %v3333, %v2719
    %v3335 = vmul.f32 %v3334, %v3333
    %v3336 = vmul.f32 0.5, %v3335
    %v3337 = vsub.f32 1.5, %v3336
    %v3338 = vmul.f32 %v3333, %v3337
    %v3339 = vmul.f32 %v2719, %v3338
    %vm3340 = vcmp.eq.f32.partialorder %v2719, inf
    %v3341 = vsel %vm3340, %v2719, %v3339
    %vm3342 = vcmp.eq.f32.partialorder %v2719, 0.0
    %v3343 = vand.u32 %v2719, 2147483648
    %v3344 = vsel %vm3342, %v3343, %v3341
    %v3345 = vrsqrt.pop %v2720
    %v3346 = vmul.f32 %v3345, %v2720
    %v3347 = vmul.f32 %v3346, %v3345
    %v3348 = vmul.f32 0.5, %v3347
    %v3349 = vsub.f32 1.5, %v3348
    %v3350 = vmul.f32 %v3345, %v3349
    %v3351 = vmul.f32 %v2720, %v3350
    %vm3352 = vcmp.eq.f32.partialorder %v2720, inf
    %v3353 = vsel %vm3352, %v2720, %v3351
    %vm3354 = vcmp.eq.f32.partialorder %v2720, 0.0
    %v3355 = vand.u32 %v2720, 2147483648
    %v3356 = vsel %vm3354, %v3355, %v3353
    %v3357 = vrsqrt.pop %v2721
    %v3358 = vmul.f32 %v3357, %v2721
    %v3359 = vmul.f32 %v3358, %v3357
    %v3360 = vmul.f32 0.5, %v3359
    %v3361 = vsub.f32 1.5, %v3360
    %v3362 = vmul.f32 %v3357, %v3361
    %v3363 = vmul.f32 %v2721, %v3362
    %vm3364 = vcmp.eq.f32.partialorder %v2721, inf
    %v3365 = vsel %vm3364, %v2721, %v3363
    %vm3366 = vcmp.eq.f32.partialorder %v2721, 0.0
    %v3367 = vand.u32 %v2721, 2147483648
    %v3368 = vsel %vm3366, %v3367, %v3365
    %v3369 = vrsqrt.pop %v2722
    %v3370 = vmul.f32 %v3369, %v2722
    %v3371 = vmul.f32 %v3370, %v3369
    %v3372 = vmul.f32 0.5, %v3371
    %v3373 = vsub.f32 1.5, %v3372
    %v3374 = vmul.f32 %v3369, %v3373
    %v3375 = vmul.f32 %v2722, %v3374
    %vm3376 = vcmp.eq.f32.partialorder %v2722, inf
    %v3377 = vsel %vm3376, %v2722, %v3375
    %vm3378 = vcmp.eq.f32.partialorder %v2722, 0.0
    %v3379 = vand.u32 %v2722, 2147483648
    %v3380 = vsel %vm3378, %v3379, %v3377
    %v3381 = vrsqrt.pop %v2723
    %v3382 = vmul.f32 %v3381, %v2723
    %v3383 = vmul.f32 %v3382, %v3381
    %v3384 = vmul.f32 0.5, %v3383
    %v3385 = vsub.f32 1.5, %v3384
    %v3386 = vmul.f32 %v3381, %v3385
    %v3387 = vmul.f32 %v2723, %v3386
    %vm3388 = vcmp.eq.f32.partialorder %v2723, inf
    %v3389 = vsel %vm3388, %v2723, %v3387
    %vm3390 = vcmp.eq.f32.partialorder %v2723, 0.0
    %v3391 = vand.u32 %v2723, 2147483648
    %v3392 = vsel %vm3390, %v3391, %v3389
    %v3393 = vrsqrt.pop %v2724
    %v3394 = vmul.f32 %v3393, %v2724
    %v3395 = vmul.f32 %v3394, %v3393
    %v3396 = vmul.f32 0.5, %v3395
    %v3397 = vsub.f32 1.5, %v3396
    %v3398 = vmul.f32 %v3393, %v3397
    %v3399 = vmul.f32 %v2724, %v3398
    %vm3400 = vcmp.eq.f32.partialorder %v2724, inf
    %v3401 = vsel %vm3400, %v2724, %v3399
    %vm3402 = vcmp.eq.f32.partialorder %v2724, 0.0
    %v3403 = vand.u32 %v2724, 2147483648
    %v3404 = vsel %vm3402, %v3403, %v3401
    %v3405 = vrsqrt.pop %v2725
    %v3406 = vmul.f32 %v3405, %v2725
    %v3407 = vmul.f32 %v3406, %v3405
    %v3408 = vmul.f32 0.5, %v3407
    %v3409 = vsub.f32 1.5, %v3408
    %v3410 = vmul.f32 %v3405, %v3409
    %v3411 = vmul.f32 %v2725, %v3410
    %vm3412 = vcmp.eq.f32.partialorder %v2725, inf
    %v3413 = vsel %vm3412, %v2725, %v3411
    %vm3414 = vcmp.eq.f32.partialorder %v2725, 0.0
    %v3415 = vand.u32 %v2725, 2147483648
    %v3416 = vsel %vm3414, %v3415, %v3413
    %v3417 = vrsqrt.pop %v2726
    %v3418 = vmul.f32 %v3417, %v2726
    %v3419 = vmul.f32 %v3418, %v3417
    %v3420 = vmul.f32 0.5, %v3419
    %v3421 = vsub.f32 1.5, %v3420
    %v3422 = vmul.f32 %v3417, %v3421
    %v3423 = vmul.f32 %v2726, %v3422
    %vm3424 = vcmp.eq.f32.partialorder %v2726, inf
    %v3425 = vsel %vm3424, %v2726, %v3423
    %vm3426 = vcmp.eq.f32.partialorder %v2726, 0.0
    %v3427 = vand.u32 %v2726, 2147483648
    %v3428 = vsel %vm3426, %v3427, %v3425
    %v3429 = vrsqrt.pop %v2727
    %v3430 = vmul.f32 %v3429, %v2727
    %v3431 = vmul.f32 %v3430, %v3429
    %v3432 = vmul.f32 0.5, %v3431
    %v3433 = vsub.f32 1.5, %v3432
    %v3434 = vmul.f32 %v3429, %v3433
    %v3435 = vmul.f32 %v2727, %v3434
    %vm3436 = vcmp.eq.f32.partialorder %v2727, inf
    %v3437 = vsel %vm3436, %v2727, %v3435
    %vm3438 = vcmp.eq.f32.partialorder %v2727, 0.0
    %v3439 = vand.u32 %v2727, 2147483648
    %v3440 = vsel %vm3438, %v3439, %v3437
    %v3441 = vrsqrt.pop %v2728
    %v3442 = vmul.f32 %v3441, %v2728
    %v3443 = vmul.f32 %v3442, %v3441
    %v3444 = vmul.f32 0.5, %v3443
    %v3445 = vsub.f32 1.5, %v3444
    %v3446 = vmul.f32 %v3441, %v3445
    %v3447 = vmul.f32 %v2728, %v3446
    %vm3448 = vcmp.eq.f32.partialorder %v2728, inf
    %v3449 = vsel %vm3448, %v2728, %v3447
    %vm3450 = vcmp.eq.f32.partialorder %v2728, 0.0
    %v3451 = vand.u32 %v2728, 2147483648
    %v3452 = vsel %vm3450, %v3451, %v3449
    %v3453 = vrsqrt.pop %v2729
    %v3454 = vmul.f32 %v3453, %v2729
    %v3455 = vmul.f32 %v3454, %v3453
    %v3456 = vmul.f32 0.5, %v3455
    %v3457 = vsub.f32 1.5, %v3456
    %v3458 = vmul.f32 %v3453, %v3457
    %v3459 = vmul.f32 %v2729, %v3458
    %vm3460 = vcmp.eq.f32.partialorder %v2729, inf
    %v3461 = vsel %vm3460, %v2729, %v3459
    %vm3462 = vcmp.eq.f32.partialorder %v2729, 0.0
    %v3463 = vand.u32 %v2729, 2147483648
    %v3464 = vsel %vm3462, %v3463, %v3461
    %v3465 = vrsqrt.pop %v2730
    %v3466 = vmul.f32 %v3465, %v2730
    %v3467 = vmul.f32 %v3466, %v3465
    %v3468 = vmul.f32 0.5, %v3467
    %v3469 = vsub.f32 1.5, %v3468
    %v3470 = vmul.f32 %v3465, %v3469
    %v3471 = vmul.f32 %v2730, %v3470
    %vm3472 = vcmp.eq.f32.partialorder %v2730, inf
    %v3473 = vsel %vm3472, %v2730, %v3471
    %vm3474 = vcmp.eq.f32.partialorder %v2730, 0.0
    %v3475 = vand.u32 %v2730, 2147483648
    %v3476 = vsel %vm3474, %v3475, %v3473
    %v3477 = vrsqrt.pop %v2731
    %v3478 = vmul.f32 %v3477, %v2731
    %v3479 = vmul.f32 %v3478, %v3477
    %v3480 = vmul.f32 0.5, %v3479
    %v3481 = vsub.f32 1.5, %v3480
    %v3482 = vmul.f32 %v3477, %v3481
    %v3483 = vmul.f32 %v2731, %v3482
    %vm3484 = vcmp.eq.f32.partialorder %v2731, inf
    %v3485 = vsel %vm3484, %v2731, %v3483
    %vm3486 = vcmp.eq.f32.partialorder %v2731, 0.0
    %v3487 = vand.u32 %v2731, 2147483648
    %v3488 = vsel %vm3486, %v3487, %v3485
    %v3489 = vrsqrt.pop %v2732
    %v3490 = vmul.f32 %v3489, %v2732
    %v3491 = vmul.f32 %v3490, %v3489
    %v3492 = vmul.f32 0.5, %v3491
    %v3493 = vsub.f32 1.5, %v3492
    %v3494 = vmul.f32 %v3489, %v3493
    %v3495 = vmul.f32 %v2732, %v3494
    %vm3496 = vcmp.eq.f32.partialorder %v2732, inf
    %v3497 = vsel %vm3496, %v2732, %v3495
    %vm3498 = vcmp.eq.f32.partialorder %v2732, 0.0
    %v3499 = vand.u32 %v2732, 2147483648
    %v3500 = vsel %vm3498, %v3499, %v3497
    %v3501 = vmul.f32 %v2744, %v27
    %v3502 = vmul.f32 %v2756, %v28
    %v3503 = vmul.f32 %v2768, %v29
    %v3504 = vmul.f32 %v2780, %v30
    %v3505 = vmul.f32 %v2792, %v31
    %v3506 = vmul.f32 %v2804, %v32
    %v3507 = vmul.f32 %v2816, %v33
    %v3508 = vmul.f32 %v2828, %v34
    %v3509 = vmul.f32 %v2840, %v35
    %v3510 = vmul.f32 %v2852, %v36
    %v3511 = vmul.f32 %v2864, %v37
    %v3512 = vmul.f32 %v2876, %v38
    %v3513 = vmul.f32 %v2888, %v39
    %v3514 = vmul.f32 %v2900, %v40
    %v3515 = vmul.f32 %v2912, %v41
    %v3516 = vmul.f32 %v2924, %v42
    %v3517 = vmul.f32 %v2936, %v43
    %v3518 = vmul.f32 %v2948, %v44
    %v3519 = vmul.f32 %v2960, %v45
    %v3520 = vmul.f32 %v2972, %v46
    %v3521 = vmul.f32 %v2984, %v47
    %v3522 = vmul.f32 %v2996, %v48
    %v3523 = vmul.f32 %v3008, %v49
    %v3524 = vmul.f32 %v3020, %v50
    %v3525 = vmul.f32 %v3032, %v51
    %v3526 = vmul.f32 %v3044, %v52
    %v3527 = vmul.f32 %v3056, %v53
    %v3528 = vmul.f32 %v3068, %v54
    %v3529 = vmul.f32 %v3080, %v55
    %v3530 = vmul.f32 %v3092, %v56
    %v3531 = vmul.f32 %v3104, %v57
    %v3532 = vmul.f32 %v3116, %v58
    %v3533 = vmul.f32 %v3128, %v59
    %v3534 = vmul.f32 %v3140, %v60
    %v3535 = vmul.f32 %v3152, %v61
    %v3536 = vmul.f32 %v3164, %v62
    %v3537 = vmul.f32 %v3176, %v63
    %v3538 = vmul.f32 %v3188, %v64
    %v3539 = vmul.f32 %v3200, %v65
    %v3540 = vmul.f32 %v3212, %v66
    %v3541 = vmul.f32 %v3224, %v67
    %v3542 = vmul.f32 %v3236, %v68
    %v3543 = vmul.f32 %v3248, %v69
    %v3544 = vmul.f32 %v3260, %v70
    %v3545 = vmul.f32 %v3272, %v71
    %v3546 = vmul.f32 %v3284, %v72
    %v3547 = vmul.f32 %v3296, %v73
    %v3548 = vmul.f32 %v3308, %v74
    %v3549 = vmul.f32 %v3320, %v75
    %v3550 = vmul.f32 %v3332, %v76
    %v3551 = vmul.f32 %v3344, %v77
    %v3552 = vmul.f32 %v3356, %v78
    %v3553 = vmul.f32 %v3368, %v79
    %v3554 = vmul.f32 %v3380, %v80
    %v3555 = vmul.f32 %v3392, %v81
    %v3556 = vmul.f32 %v3404, %v82
    %v3557 = vmul.f32 %v3416, %v83
    %v3558 = vmul.f32 %v3428, %v84
    %v3559 = vmul.f32 %v3440, %v85
    %v3560 = vmul.f32 %v3452, %v86
    %v3561 = vmul.f32 %v3464, %v87
    %v3562 = vmul.f32 %v3476, %v88
    %v3563 = vmul.f32 %v3488, %v89
    %v3564 = vmul.f32 %v3500, %v90
    %s3565 = scalar_lea.vmem [#allocation2], 512
    %3566 = vst [vmem:[%s3565] sm:$0xff] %v3501
    %3567 = vst [vmem:[%s3565 + $0x8] sm:$0xff] %v3502
    %3568 = vst [vmem:[%s3565 + $0x10] sm:$0xff] %v3503
    %3569 = vst [vmem:[%s3565 + $0x18] sm:$0xff] %v3504
    %3570 = vst [vmem:[%s3565 + $0x20] sm:$0xff] %v3505
    %3571 = vst [vmem:[%s3565 + $0x28] sm:$0xff] %v3506
    %3572 = vst [vmem:[%s3565 + $0x30] sm:$0xff] %v3507
    %3573 = vst [vmem:[%s3565 + $0x38] sm:$0xff] %v3508
    %3574 = vst [vmem:[%s3565 + $0x40] sm:$0xff] %v3509
    %3575 = vst [vmem:[%s3565 + $0x48] sm:$0xff] %v3510
    %3576 = vst [vmem:[%s3565 + $0x50] sm:$0xff] %v3511
    %3577 = vst [vmem:[%s3565 + $0x58] sm:$0xff] %v3512
    %3578 = vst [vmem:[%s3565 + $0x60] sm:$0xff] %v3513
    %3579 = vst [vmem:[%s3565 + $0x68] sm:$0xff] %v3514
    %3580 = vst [vmem:[%s3565 + $0x70] sm:$0xff] %v3515
    %3581 = vst [vmem:[%s3565 + $0x78] sm:$0xff] %v3516
    %3582 = vst [vmem:[%s3565 + $0x80] sm:$0xff] %v3517
    %3583 = vst [vmem:[%s3565 + $0x88] sm:$0xff] %v3518
    %3584 = vst [vmem:[%s3565 + $0x90] sm:$0xff] %v3519
    %3585 = vst [vmem:[%s3565 + $0x98] sm:$0xff] %v3520
    %3586 = vst [vmem:[%s3565 + $0xa0] sm:$0xff] %v3521
    %3587 = vst [vmem:[%s3565 + $0xa8] sm:$0xff] %v3522
    %3588 = vst [vmem:[%s3565 + $0xb0] sm:$0xff] %v3523
    %3589 = vst [vmem:[%s3565 + $0xb8] sm:$0xff] %v3524
    %3590 = vst [vmem:[%s3565 + $0xc0] sm:$0xff] %v3525
    %3591 = vst [vmem:[%s3565 + $0xc8] sm:$0xff] %v3526
    %3592 = vst [vmem:[%s3565 + $0xd0] sm:$0xff] %v3527
    %3593 = vst [vmem:[%s3565 + $0xd8] sm:$0xff] %v3528
    %3594 = vst [vmem:[%s3565 + $0xe0] sm:$0xff] %v3529
    %3595 = vst [vmem:[%s3565 + $0xe8] sm:$0xff] %v3530
    %3596 = vst [vmem:[%s3565 + $0xf0] sm:$0xff] %v3531
    %3597 = vst [vmem:[%s3565 + $0xf8] sm:$0xff] %v3532
    %3598 = vst [vmem:[%s3565 + $0x100] sm:$0xff] %v3533
    %3599 = vst [vmem:[%s3565 + $0x108] sm:$0xff] %v3534
    %3600 = vst [vmem:[%s3565 + $0x110] sm:$0xff] %v3535
    %3601 = vst [vmem:[%s3565 + $0x118] sm:$0xff] %v3536
    %3602 = vst [vmem:[%s3565 + $0x120] sm:$0xff] %v3537
    %3603 = vst [vmem:[%s3565 + $0x128] sm:$0xff] %v3538
    %3604 = vst [vmem:[%s3565 + $0x130] sm:$0xff] %v3539
    %3605 = vst [vmem:[%s3565 + $0x138] sm:$0xff] %v3540
    %3606 = vst [vmem:[%s3565 + $0x140] sm:$0xff] %v3541
    %3607 = vst [vmem:[%s3565 + $0x148] sm:$0xff] %v3542
    %3608 = vst [vmem:[%s3565 + $0x150] sm:$0xff] %v3543
    %3609 = vst [vmem:[%s3565 + $0x158] sm:$0xff] %v3544
    %3610 = vst [vmem:[%s3565 + $0x160] sm:$0xff] %v3545
    %3611 = vst [vmem:[%s3565 + $0x168] sm:$0xff] %v3546
    %3612 = vst [vmem:[%s3565 + $0x170] sm:$0xff] %v3547
    %3613 = vst [vmem:[%s3565 + $0x178] sm:$0xff] %v3548
    %3614 = vst [vmem:[%s3565 + $0x180] sm:$0xff] %v3549
    %3615 = vst [vmem:[%s3565 + $0x188] sm:$0xff] %v3550
    %3616 = vst [vmem:[%s3565 + $0x190] sm:$0xff] %v3551
    %3617 = vst [vmem:[%s3565 + $0x198] sm:$0xff] %v3552
    %3618 = vst [vmem:[%s3565 + $0x1a0] sm:$0xff] %v3553
    %3619 = vst [vmem:[%s3565 + $0x1a8] sm:$0xff] %v3554
    %3620 = vst [vmem:[%s3565 + $0x1b0] sm:$0xff] %v3555
    %3621 = vst [vmem:[%s3565 + $0x1b8] sm:$0xff] %v3556
    %3622 = vst [vmem:[%s3565 + $0x1c0] sm:$0xff] %v3557
    %3623 = vst [vmem:[%s3565 + $0x1c8] sm:$0xff] %v3558
    %3624 = vst [vmem:[%s3565 + $0x1d0] sm:$0xff] %v3559
    %3625 = vst [vmem:[%s3565 + $0x1d8] sm:$0xff] %v3560
    %3626 = vst [vmem:[%s3565 + $0x1e0] sm:$0xff] %v3561
    %3627 = vst [vmem:[%s3565 + $0x1e8] sm:$0xff] %v3562
    %3628 = vst [vmem:[%s3565 + $0x1f0] sm:$0xff] %v3563
    %3629 = vst [vmem:[%s3565 + $0x1f8] sm:$0xff] %v3564
    %v3630 = vld [vmem:[%s3565] sm:$0xff]
    %v3631 = vld [vmem:[%s3565 + $0x8] sm:$0xff]
    %v3632 = vld [vmem:[%s3565 + $0x10] sm:$0xff]
    %v3633 = vld [vmem:[%s3565 + $0x18] sm:$0xff]
    %v3634 = vld [vmem:[%s3565 + $0x20] sm:$0xff]
    %v3635 = vld [vmem:[%s3565 + $0x28] sm:$0xff]
    %v3636 = vld [vmem:[%s3565 + $0x30] sm:$0xff]
    %v3637 = vld [vmem:[%s3565 + $0x38] sm:$0xff]
    %v3638 = vld [vmem:[%s3565 + $0x40] sm:$0xff]
    %v3639 = vld [vmem:[%s3565 + $0x48] sm:$0xff]
    %v3640 = vld [vmem:[%s3565 + $0x50] sm:$0xff]
    %v3641 = vld [vmem:[%s3565 + $0x58] sm:$0xff]
    %v3642 = vld [vmem:[%s3565 + $0x60] sm:$0xff]
    %v3643 = vld [vmem:[%s3565 + $0x68] sm:$0xff]
    %v3644 = vld [vmem:[%s3565 + $0x70] sm:$0xff]
    %v3645 = vld [vmem:[%s3565 + $0x78] sm:$0xff]
    %v3646 = vld [vmem:[%s3565 + $0x80] sm:$0xff]
    %v3647 = vld [vmem:[%s3565 + $0x88] sm:$0xff]
    %v3648 = vld [vmem:[%s3565 + $0x90] sm:$0xff]
    %v3649 = vld [vmem:[%s3565 + $0x98] sm:$0xff]
    %v3650 = vld [vmem:[%s3565 + $0xa0] sm:$0xff]
    %v3651 = vld [vmem:[%s3565 + $0xa8] sm:$0xff]
    %v3652 = vld [vmem:[%s3565 + $0xb0] sm:$0xff]
    %v3653 = vld [vmem:[%s3565 + $0xb8] sm:$0xff]
    %v3654 = vld [vmem:[%s3565 + $0xc0] sm:$0xff]
    %v3655 = vld [vmem:[%s3565 + $0xc8] sm:$0xff]
    %v3656 = vld [vmem:[%s3565 + $0xd0] sm:$0xff]
    %v3657 = vld [vmem:[%s3565 + $0xd8] sm:$0xff]
    %v3658 = vld [vmem:[%s3565 + $0xe0] sm:$0xff]
    %v3659 = vld [vmem:[%s3565 + $0xe8] sm:$0xff]
    %v3660 = vld [vmem:[%s3565 + $0xf0] sm:$0xff]
    %v3661 = vld [vmem:[%s3565 + $0xf8] sm:$0xff]
    %v3662 = vld [vmem:[%s3565 + $0x100] sm:$0xff]
    %v3663 = vld [vmem:[%s3565 + $0x108] sm:$0xff]
    %v3664 = vld [vmem:[%s3565 + $0x110] sm:$0xff]
    %v3665 = vld [vmem:[%s3565 + $0x118] sm:$0xff]
    %v3666 = vld [vmem:[%s3565 + $0x120] sm:$0xff]
    %v3667 = vld [vmem:[%s3565 + $0x128] sm:$0xff]
    %v3668 = vld [vmem:[%s3565 + $0x130] sm:$0xff]
    %v3669 = vld [vmem:[%s3565 + $0x138] sm:$0xff]
    %v3670 = vld [vmem:[%s3565 + $0x140] sm:$0xff]
    %v3671 = vld [vmem:[%s3565 + $0x148] sm:$0xff]
    %v3672 = vld [vmem:[%s3565 + $0x150] sm:$0xff]
    %v3673 = vld [vmem:[%s3565 + $0x158] sm:$0xff]
    %v3674 = vld [vmem:[%s3565 + $0x160] sm:$0xff]
    %v3675 = vld [vmem:[%s3565 + $0x168] sm:$0xff]
    %v3676 = vld [vmem:[%s3565 + $0x170] sm:$0xff]
    %v3677 = vld [vmem:[%s3565 + $0x178] sm:$0xff]
    %v3678 = vld [vmem:[%s3565 + $0x180] sm:$0xff]
    %v3679 = vld [vmem:[%s3565 + $0x188] sm:$0xff]
    %v3680 = vld [vmem:[%s3565 + $0x190] sm:$0xff]
    %v3681 = vld [vmem:[%s3565 + $0x198] sm:$0xff]
    %v3682 = vld [vmem:[%s3565 + $0x1a0] sm:$0xff]
    %v3683 = vld [vmem:[%s3565 + $0x1a8] sm:$0xff]
    %v3684 = vld [vmem:[%s3565 + $0x1b0] sm:$0xff]
    %v3685 = vld [vmem:[%s3565 + $0x1b8] sm:$0xff]
    %v3686 = vld [vmem:[%s3565 + $0x1c0] sm:$0xff]
    %v3687 = vld [vmem:[%s3565 + $0x1c8] sm:$0xff]
    %v3688 = vld [vmem:[%s3565 + $0x1d0] sm:$0xff]
    %v3689 = vld [vmem:[%s3565 + $0x1d8] sm:$0xff]
    %v3690 = vld [vmem:[%s3565 + $0x1e0] sm:$0xff]
    %v3691 = vld [vmem:[%s3565 + $0x1e8] sm:$0xff]
    %v3692 = vld [vmem:[%s3565 + $0x1f0] sm:$0xff]
    %v3693 = vld [vmem:[%s3565 + $0x1f8] sm:$0xff]
    %v3694 = vadd.f32 %v3630, %v3632
    %v3695 = vadd.f32 %v3694, %v3634
    %v3696 = vadd.f32 %v3695, %v3636
    %v3697 = vadd.f32 %v3696, %v3638
    %v3698 = vadd.f32 %v3697, %v3640
    %v3699 = vadd.f32 %v3698, %v3642
    %v3700 = vadd.f32 %v3699, %v3644
    %v3701 = vadd.f32 %v3700, %v3646
    %v3702 = vadd.f32 %v3701, %v3648
    %v3703 = vadd.f32 %v3702, %v3650
    %v3704 = vadd.f32 %v3703, %v3652
    %v3705 = vadd.f32 %v3704, %v3654
    %v3706 = vadd.f32 %v3705, %v3656
    %v3707 = vadd.f32 %v3706, %v3658
    %v3708 = vadd.f32 %v3707, %v3660
    %v3709 = vadd.f32 %v3708, %v3662
    %v3710 = vadd.f32 %v3709, %v3664
    %v3711 = vadd.f32 %v3710, %v3666
    %v3712 = vadd.f32 %v3711, %v3668
    %v3713 = vadd.f32 %v3712, %v3670
    %v3714 = vadd.f32 %v3713, %v3672
    %v3715 = vadd.f32 %v3714, %v3674
    %v3716 = vadd.f32 %v3715, %v3676
    %v3717 = vadd.f32 %v3716, %v3678
    %v3718 = vadd.f32 %v3717, %v3680
    %v3719 = vadd.f32 %v3718, %v3682
    %v3720 = vadd.f32 %v3719, %v3684
    %v3721 = vadd.f32 %v3720, %v3686
    %v3722 = vadd.f32 %v3721, %v3688
    %v3723 = vadd.f32 %v3722, %v3690
    %v3724 = vadd.f32 %v3723, %v3692
    %v3725 = vrot.slane %v3724, 4
    %v3726 = vadd.f32 %v3724, %v3725
    %v3727 = vrot.slane %v3726, 2
    %v3728 = vadd.f32 %v3726, %v3727
    %v3729 = vrot.slane %v3728, 1
    %v3730 = vadd.f32 %v3728, %v3729
    %v3731 = vadd.f32 %v3631, %v3633
    %v3732 = vadd.f32 %v3731, %v3635
    %v3733 = vadd.f32 %v3732, %v3637
    %v3734 = vadd.f32 %v3733, %v3639
    %v3735 = vadd.f32 %v3734, %v3641
    %v3736 = vadd.f32 %v3735, %v3643
    %v3737 = vadd.f32 %v3736, %v3645
    %v3738 = vadd.f32 %v3737, %v3647
    %v3739 = vadd.f32 %v3738, %v3649
    %v3740 = vadd.f32 %v3739, %v3651
    %v3741 = vadd.f32 %v3740, %v3653
    %v3742 = vadd.f32 %v3741, %v3655
    %v3743 = vadd.f32 %v3742, %v3657
    %v3744 = vadd.f32 %v3743, %v3659
    %v3745 = vadd.f32 %v3744, %v3661
    %v3746 = vadd.f32 %v3745, %v3663
    %v3747 = vadd.f32 %v3746, %v3665
    %v3748 = vadd.f32 %v3747, %v3667
    %v3749 = vadd.f32 %v3748, %v3669
    %v3750 = vadd.f32 %v3749, %v3671
    %v3751 = vadd.f32 %v3750, %v3673
    %v3752 = vadd.f32 %v3751, %v3675
    %v3753 = vadd.f32 %v3752, %v3677
    %v3754 = vadd.f32 %v3753, %v3679
    %v3755 = vadd.f32 %v3754, %v3681
    %v3756 = vadd.f32 %v3755, %v3683
    %v3757 = vadd.f32 %v3756, %v3685
    %v3758 = vadd.f32 %v3757, %v3687
    %v3759 = vadd.f32 %v3758, %v3689
    %v3760 = vadd.f32 %v3759, %v3691
    %v3761 = vadd.f32 %v3760, %v3693
    %v3762 = vrot.slane %v3761, 4
    %v3763 = vadd.f32 %v3761, %v3762
    %v3764 = vrot.slane %v3763, 2
    %v3765 = vadd.f32 %v3763, %v3764
    %v3766 = vrot.slane %v3765, 1
    %v3767 = vadd.f32 %v3765, %v3766
    %vm3768 = vcmp.gt.f32.partialorder %v3730, 0.0
    %vm3769 = vcmp.gt.f32.partialorder %v3767, 0.0
    %v3770 = vrcp.pop %v3730
    %v3771 = vmul.f32 %v3730, %v3770
    %v3772 = vsub.f32 1.0, %v3771
    %v3773 = vmul.f32 %v3770, %v3772
    %v3774 = vadd.f32 %v3770, %v3773
    %vm3775 = vweird.f32 %v3730
    %vm3776 = vweird.f32 %v3770
    %vm3777 = vmor %vm3775, %vm3776
    %v3778 = vsel %vm3777, %v3770, %v3774
    %v3779 = vand.u32 2147483647, %v3730
    %vm3780 = vcmp.eq.f32.partialorder %v3779, 8.507059e+37
    %v3781 = vand.u32 %v3730, 2147483648
    %v3782 = vor.u32 1.1754944e-38, %v3781
    %v3783 = vsel %vm3780, %v3782, %v3778
    %v3784 = vmul.f32 1.0, %v3783
    %v3785 = vrcp.pop %v3767
    %v3786 = vmul.f32 %v3767, %v3785
    %v3787 = vsub.f32 1.0, %v3786
    %v3788 = vmul.f32 %v3785, %v3787
    %v3789 = vadd.f32 %v3785, %v3788
    %vm3790 = vweird.f32 %v3767
    %vm3791 = vweird.f32 %v3785
    %vm3792 = vmor %vm3790, %vm3791
    %v3793 = vsel %vm3792, %v3785, %v3789
    %v3794 = vand.u32 2147483647, %v3767
    %vm3795 = vcmp.eq.f32.partialorder %v3794, 8.507059e+37
    %v3796 = vand.u32 %v3767, 2147483648
    %v3797 = vor.u32 1.1754944e-38, %v3796
    %v3798 = vsel %vm3795, %v3797, %v3793
    %v3799 = vmul.f32 1.0, %v3798
    %v3800 = vsel %vm3768, %v3784, 0.0
    %v3801 = vsel %vm3769, %v3799, 0.0
    %v3802 = vmul.f32 %v3630, %v3800
    %v3803 = vmul.f32 %v3631, %v3801
    %v3804 = vmul.f32 %v3632, %v3800
    %v3805 = vmul.f32 %v3633, %v3801
    %v3806 = vmul.f32 %v3634, %v3800
    %v3807 = vmul.f32 %v3635, %v3801
    %v3808 = vmul.f32 %v3636, %v3800
    %v3809 = vmul.f32 %v3637, %v3801
    %v3810 = vmul.f32 %v3638, %v3800
    %v3811 = vmul.f32 %v3639, %v3801
    %v3812 = vmul.f32 %v3640, %v3800
    %v3813 = vmul.f32 %v3641, %v3801
    %v3814 = vmul.f32 %v3642, %v3800
    %v3815 = vmul.f32 %v3643, %v3801
    %v3816 = vmul.f32 %v3644, %v3800
    %v3817 = vmul.f32 %v3645, %v3801
    %v3818 = vmul.f32 %v3646, %v3800
    %v3819 = vmul.f32 %v3647, %v3801
    %v3820 = vmul.f32 %v3648, %v3800
    %v3821 = vmul.f32 %v3649, %v3801
    %v3822 = vmul.f32 %v3650, %v3800
    %v3823 = vmul.f32 %v3651, %v3801
    %v3824 = vmul.f32 %v3652, %v3800
    %v3825 = vmul.f32 %v3653, %v3801
    %v3826 = vmul.f32 %v3654, %v3800
    %v3827 = vmul.f32 %v3655, %v3801
    %v3828 = vmul.f32 %v3656, %v3800
    %v3829 = vmul.f32 %v3657, %v3801
    %v3830 = vmul.f32 %v3658, %v3800
    %v3831 = vmul.f32 %v3659, %v3801
    %v3832 = vmul.f32 %v3660, %v3800
    %v3833 = vmul.f32 %v3661, %v3801
    %v3834 = vmul.f32 %v3662, %v3800
    %v3835 = vmul.f32 %v3663, %v3801
    %v3836 = vmul.f32 %v3664, %v3800
    %v3837 = vmul.f32 %v3665, %v3801
    %v3838 = vmul.f32 %v3666, %v3800
    %v3839 = vmul.f32 %v3667, %v3801
    %v3840 = vmul.f32 %v3668, %v3800
    %v3841 = vmul.f32 %v3669, %v3801
    %v3842 = vmul.f32 %v3670, %v3800
    %v3843 = vmul.f32 %v3671, %v3801
    %v3844 = vmul.f32 %v3672, %v3800
    %v3845 = vmul.f32 %v3673, %v3801
    %v3846 = vmul.f32 %v3674, %v3800
    %v3847 = vmul.f32 %v3675, %v3801
    %v3848 = vmul.f32 %v3676, %v3800
    %v3849 = vmul.f32 %v3677, %v3801
    %v3850 = vmul.f32 %v3678, %v3800
    %v3851 = vmul.f32 %v3679, %v3801
    %v3852 = vmul.f32 %v3680, %v3800
    %v3853 = vmul.f32 %v3681, %v3801
    %v3854 = vmul.f32 %v3682, %v3800
    %v3855 = vmul.f32 %v3683, %v3801
    %v3856 = vmul.f32 %v3684, %v3800
    %v3857 = vmul.f32 %v3685, %v3801
    %v3858 = vmul.f32 %v3686, %v3800
    %v3859 = vmul.f32 %v3687, %v3801
    %v3860 = vmul.f32 %v3688, %v3800
    %v3861 = vmul.f32 %v3689, %v3801
    %v3862 = vmul.f32 %v3690, %v3800
    %v3863 = vmul.f32 %v3691, %v3801
    %v3864 = vmul.f32 %v3692, %v3800
    %v3865 = vmul.f32 %v3693, %v3801
    %3866 = vst [vmem:[%s3565] sm:$0xff] %v3802
    %3867 = vst [vmem:[%s3565 + $0x8] sm:$0xff] %v3803
    %3868 = vst [vmem:[%s3565 + $0x10] sm:$0xff] %v3804
    %3869 = vst [vmem:[%s3565 + $0x18] sm:$0xff] %v3805
    %3870 = vst [vmem:[%s3565 + $0x20] sm:$0xff] %v3806
    %3871 = vst [vmem:[%s3565 + $0x28] sm:$0xff] %v3807
    %3872 = vst [vmem:[%s3565 + $0x30] sm:$0xff] %v3808
    %3873 = vst [vmem:[%s3565 + $0x38] sm:$0xff] %v3809
    %3874 = vst [vmem:[%s3565 + $0x40] sm:$0xff] %v3810
    %3875 = vst [vmem:[%s3565 + $0x48] sm:$0xff] %v3811
    %3876 = vst [vmem:[%s3565 + $0x50] sm:$0xff] %v3812
    %3877 = vst [vmem:[%s3565 + $0x58] sm:$0xff] %v3813
    %3878 = vst [vmem:[%s3565 + $0x60] sm:$0xff] %v3814
    %3879 = vst [vmem:[%s3565 + $0x68] sm:$0xff] %v3815
    %3880 = vst [vmem:[%s3565 + $0x70] sm:$0xff] %v3816
    %3881 = vst [vmem:[%s3565 + $0x78] sm:$0xff] %v3817
    %3882 = vst [vmem:[%s3565 + $0x80] sm:$0xff] %v3818
    %3883 = vst [vmem:[%s3565 + $0x88] sm:$0xff] %v3819
    %3884 = vst [vmem:[%s3565 + $0x90] sm:$0xff] %v3820
    %3885 = vst [vmem:[%s3565 + $0x98] sm:$0xff] %v3821
    %3886 = vst [vmem:[%s3565 + $0xa0] sm:$0xff] %v3822
    %3887 = vst [vmem:[%s3565 + $0xa8] sm:$0xff] %v3823
    %3888 = vst [vmem:[%s3565 + $0xb0] sm:$0xff] %v3824
    %3889 = vst [vmem:[%s3565 + $0xb8] sm:$0xff] %v3825
    %3890 = vst [vmem:[%s3565 + $0xc0] sm:$0xff] %v3826
    %3891 = vst [vmem:[%s3565 + $0xc8] sm:$0xff] %v3827
    %3892 = vst [vmem:[%s3565 + $0xd0] sm:$0xff] %v3828
    %3893 = vst [vmem:[%s3565 + $0xd8] sm:$0xff] %v3829
    %3894 = vst [vmem:[%s3565 + $0xe0] sm:$0xff] %v3830
    %3895 = vst [vmem:[%s3565 + $0xe8] sm:$0xff] %v3831
    %3896 = vst [vmem:[%s3565 + $0xf0] sm:$0xff] %v3832
    %3897 = vst [vmem:[%s3565 + $0xf8] sm:$0xff] %v3833
    %3898 = vst [vmem:[%s3565 + $0x100] sm:$0xff] %v3834
    %3899 = vst [vmem:[%s3565 + $0x108] sm:$0xff] %v3835
    %3900 = vst [vmem:[%s3565 + $0x110] sm:$0xff] %v3836
    %3901 = vst [vmem:[%s3565 + $0x118] sm:$0xff] %v3837
    %3902 = vst [vmem:[%s3565 + $0x120] sm:$0xff] %v3838
    %3903 = vst [vmem:[%s3565 + $0x128] sm:$0xff] %v3839
    %3904 = vst [vmem:[%s3565 + $0x130] sm:$0xff] %v3840
    %3905 = vst [vmem:[%s3565 + $0x138] sm:$0xff] %v3841
    %3906 = vst [vmem:[%s3565 + $0x140] sm:$0xff] %v3842
    %3907 = vst [vmem:[%s3565 + $0x148] sm:$0xff] %v3843
    %3908 = vst [vmem:[%s3565 + $0x150] sm:$0xff] %v3844
    %3909 = vst [vmem:[%s3565 + $0x158] sm:$0xff] %v3845
    %3910 = vst [vmem:[%s3565 + $0x160] sm:$0xff] %v3846
    %3911 = vst [vmem:[%s3565 + $0x168] sm:$0xff] %v3847
    %3912 = vst [vmem:[%s3565 + $0x170] sm:$0xff] %v3848
    %3913 = vst [vmem:[%s3565 + $0x178] sm:$0xff] %v3849
    %3914 = vst [vmem:[%s3565 + $0x180] sm:$0xff] %v3850
    %3915 = vst [vmem:[%s3565 + $0x188] sm:$0xff] %v3851
    %3916 = vst [vmem:[%s3565 + $0x190] sm:$0xff] %v3852
    %3917 = vst [vmem:[%s3565 + $0x198] sm:$0xff] %v3853
    %3918 = vst [vmem:[%s3565 + $0x1a0] sm:$0xff] %v3854
    %3919 = vst [vmem:[%s3565 + $0x1a8] sm:$0xff] %v3855
    %3920 = vst [vmem:[%s3565 + $0x1b0] sm:$0xff] %v3856
    %3921 = vst [vmem:[%s3565 + $0x1b8] sm:$0xff] %v3857
    %3922 = vst [vmem:[%s3565 + $0x1c0] sm:$0xff] %v3858
    %3923 = vst [vmem:[%s3565 + $0x1c8] sm:$0xff] %v3859
    %3924 = vst [vmem:[%s3565 + $0x1d0] sm:$0xff] %v3860
    %3925 = vst [vmem:[%s3565 + $0x1d8] sm:$0xff] %v3861
    %3926 = vst [vmem:[%s3565 + $0x1e0] sm:$0xff] %v3862
    %3927 = vst [vmem:[%s3565 + $0x1e8] sm:$0xff] %v3863
    %3928 = vst [vmem:[%s3565 + $0x1f0] sm:$0xff] %v3864
    %3929 = vst [vmem:[%s3565 + $0x1f8] sm:$0xff] %v3865
    %v3930 = vlaneseq
    %vm3931 = vcmp.ge.s32.totalorder %v3930, 0
    %vm3932 = vcmp.lt.s32.totalorder %v3930, 256
    %vm3933 = vmand %vm3931, %vm3932
    %3934 = vst.msk [vmem:[#allocation3] sm:$0x3] %vm3933, 0.00390625
    %3935 = vst.msk [vmem:[#allocation3 + $0x2] sm:$0x3] %vm3933, 0.00390625
    %s3936 = scalar_lea.smem [#allocation4], 0
    %3937 = sst [smem:[%s3936]] 0
    loop: start=0, step=1, limit=20
    $region14: #{soft_proposal.1} parent=1 // loop_pre_header
      _
    $region15: #{soft_proposal.1} parent=1 // loop_header
      %s3939 = sphi 0, %s3943
      %p3940 = scmp.ge.s32.totalorder %s3939, 20
    $region16: #{soft_proposal.1} parent=1 // loop_header_branch
      %3942 = sbr.rel (%p3940) target = $region20
    $region17: #{soft_proposal.1} parent=1 // loop_body
      %s3944 = sld [smem:[#allocation4]]
      %p3945 = scmp.eq.s32.totalorder %s3944, 0
      // Predicated region
      $region21: #{soft_proposal.1} parent=17 // pred_check
        %p3946 = pneg %p3945
      $region22: #{soft_proposal.1} parent=17 // pred_check_branch
        %3948 = sbr.rel (%p3946) target = $region24
      $region23: #{soft_proposal.1} parent=17 // pred_region
        %v3949 = vld [vmem:[#allocation3] sm:$0x3]
        %v3950 = vld [vmem:[#allocation2] sm:$0xff]
        %v3951 = vld [vmem:[#allocation2 + $0x8] sm:$0xff]
        %v3952 = vld [vmem:[#allocation2 + $0x10] sm:$0xff]
        %v3953 = vld [vmem:[#allocation2 + $0x18] sm:$0xff]
        %v3954 = vld [vmem:[#allocation2 + $0x20] sm:$0xff]
        %v3955 = vld [vmem:[#allocation2 + $0x28] sm:$0xff]
        %v3956 = vld [vmem:[#allocation2 + $0x30] sm:$0xff]
        %v3957 = vld [vmem:[#allocation2 + $0x38] sm:$0xff]
        %v3958 = vld [vmem:[#allocation2 + $0x40] sm:$0xff]
        %v3959 = vld [vmem:[#allocation2 + $0x48] sm:$0xff]
        %v3960 = vld [vmem:[#allocation2 + $0x50] sm:$0xff]
        %v3961 = vld [vmem:[#allocation2 + $0x58] sm:$0xff]
        %v3962 = vld [vmem:[#allocation2 + $0x60] sm:$0xff]
        %v3963 = vld [vmem:[#allocation2 + $0x68] sm:$0xff]
        %v3964 = vld [vmem:[#allocation2 + $0x70] sm:$0xff]
        %v3965 = vld [vmem:[#allocation2 + $0x78] sm:$0xff]
        %v3966 = vld [vmem:[#allocation2 + $0x80] sm:$0xff]
        %v3967 = vld [vmem:[#allocation2 + $0x88] sm:$0xff]
        %v3968 = vld [vmem:[#allocation2 + $0x90] sm:$0xff]
        %v3969 = vld [vmem:[#allocation2 + $0x98] sm:$0xff]
        %v3970 = vld [vmem:[#allocation2 + $0xa0] sm:$0xff]
        %v3971 = vld [vmem:[#allocation2 + $0xa8] sm:$0xff]
        %v3972 = vld [vmem:[#allocation2 + $0xb0] sm:$0xff]
        %v3973 = vld [vmem:[#allocation2 + $0xb8] sm:$0xff]
        %v3974 = vld [vmem:[#allocation2 + $0xc0] sm:$0xff]
        %v3975 = vld [vmem:[#allocation2 + $0xc8] sm:$0xff]
        %v3976 = vld [vmem:[#allocation2 + $0xd0] sm:$0xff]
        %v3977 = vld [vmem:[#allocation2 + $0xd8] sm:$0xff]
        %v3978 = vld [vmem:[#allocation2 + $0xe0] sm:$0xff]
        %v3979 = vld [vmem:[#allocation2 + $0xe8] sm:$0xff]
        %v3980 = vld [vmem:[#allocation2 + $0xf0] sm:$0xff]
        %v3981 = vld [vmem:[#allocation2 + $0xf8] sm:$0xff]
        %v3982 = vld [vmem:[#allocation2 + $0x100] sm:$0xff]
        %v3983 = vld [vmem:[#allocation2 + $0x108] sm:$0xff]
        %v3984 = vld [vmem:[#allocation2 + $0x110] sm:$0xff]
        %v3985 = vld [vmem:[#allocation2 + $0x118] sm:$0xff]
        %v3986 = vld [vmem:[#allocation2 + $0x120] sm:$0xff]
        %v3987 = vld [vmem:[#allocation2 + $0x128] sm:$0xff]
        %v3988 = vld [vmem:[#allocation2 + $0x130] sm:$0xff]
        %v3989 = vld [vmem:[#allocation2 + $0x138] sm:$0xff]
        %v3990 = vld [vmem:[#allocation2 + $0x140] sm:$0xff]
        %v3991 = vld [vmem:[#allocation2 + $0x148] sm:$0xff]
        %v3992 = vld [vmem:[#allocation2 + $0x150] sm:$0xff]
        %v3993 = vld [vmem:[#allocation2 + $0x158] sm:$0xff]
        %v3994 = vld [vmem:[#allocation2 + $0x160] sm:$0xff]
        %v3995 = vld [vmem:[#allocation2 + $0x168] sm:$0xff]
        %v3996 = vld [vmem:[#allocation2 + $0x170] sm:$0xff]
        %v3997 = vld [vmem:[#allocation2 + $0x178] sm:$0xff]
        %v3998 = vld [vmem:[#allocation2 + $0x180] sm:$0xff]
        %v3999 = vld [vmem:[#allocation2 + $0x188] sm:$0xff]
        %v4000 = vld [vmem:[#allocation2 + $0x190] sm:$0xff]
        %v4001 = vld [vmem:[#allocation2 + $0x198] sm:$0xff]
        %v4002 = vld [vmem:[#allocation2 + $0x1a0] sm:$0xff]
        %v4003 = vld [vmem:[#allocation2 + $0x1a8] sm:$0xff]
        %v4004 = vld [vmem:[#allocation2 + $0x1b0] sm:$0xff]
        %v4005 = vld [vmem:[#allocation2 + $0x1b8] sm:$0xff]
        %v4006 = vld [vmem:[#allocation2 + $0x1c0] sm:$0xff]
        %v4007 = vld [vmem:[#allocation2 + $0x1c8] sm:$0xff]
        %v4008 = vld [vmem:[#allocation2 + $0x1d0] sm:$0xff]
        %v4009 = vld [vmem:[#allocation2 + $0x1d8] sm:$0xff]
        %v4010 = vld [vmem:[#allocation2 + $0x1e0] sm:$0xff]
        %v4011 = vld [vmem:[#allocation2 + $0x1e8] sm:$0xff]
        %v4012 = vld [vmem:[#allocation2 + $0x1f0] sm:$0xff]
        %v4013 = vld [vmem:[#allocation2 + $0x1f8] sm:$0xff]
        %v4015 = vperm.slane %v3949, 0
        %v4016 = vperm.slane %v3949, 1
        %4019 = vmatpush.msra.mxu0 %v3980
        %4020 = vmatpush.msra.mxu0 %v3978
        %4021 = vmatpush.msra.mxu0 %v3976
        %4022 = vmatpush.msra.mxu0 %v3974
        %4023 = vmatpush.msra.mxu0 %v3972
        %4024 = vmatpush.msra.mxu0 %v3970
        %4025 = vmatpush.msra.mxu0 %v3968
        %4026 = vmatpush.msra.mxu0 %v3966
        %4027 = vmatpush.msra.mxu0 %v3964
        %4028 = vmatpush.msra.mxu0 %v3962
        %4029 = vmatpush.msra.mxu0 %v3960
        %4030 = vmatpush.msra.mxu0 %v3958
        %4031 = vmatpush.msra.mxu0 %v3956
        %4032 = vmatpush.msra.mxu0 %v3954
        %4033 = vmatpush.msra.mxu0 %v3952
        %4034 = vmatpush.msra.mxu0 %v3950
        %4035 = vmatmul.f32.gmra.mxu0 %v4015
        %v4036 = vpop.f32.mrf.mxu0
        %v4037 = vadd.f32 0.0, %v4036
        %4038 = vdwg.mxu0
        %4039 = vmatpush.msra.mxu0 %v4012
        %4040 = vmatpush.msra.mxu0 %v4010
        %4041 = vmatpush.msra.mxu0 %v4008
        %4042 = vmatpush.msra.mxu0 %v4006
        %4043 = vmatpush.msra.mxu0 %v4004
        %4044 = vmatpush.msra.mxu0 %v4002
        %4045 = vmatpush.msra.mxu0 %v4000
        %4046 = vmatpush.msra.mxu0 %v3998
        %4047 = vmatpush.msra.mxu0 %v3996
        %4048 = vmatpush.msra.mxu0 %v3994
        %4049 = vmatpush.msra.mxu0 %v3992
        %4050 = vmatpush.msra.mxu0 %v3990
        %4051 = vmatpush.msra.mxu0 %v3988
        %4052 = vmatpush.msra.mxu0 %v3986
        %4053 = vmatpush.msra.mxu0 %v3984
        %4054 = vmatpush.msra.mxu0 %v3982
        %4055 = vmatmul.f32.gmra.mxu0 %v4016
        %v4056 = vpop.f32.mrf.mxu0
        %v4057 = vadd.f32 %v4037, %v4056
        %4058 = vdwg.mxu0
        %4059 = vmatpush.msra.mxu0 %v3981
        %4060 = vmatpush.msra.mxu0 %v3979
        %4061 = vmatpush.msra.mxu0 %v3977
        %4062 = vmatpush.msra.mxu0 %v3975
        %4063 = vmatpush.msra.mxu0 %v3973
        %4064 = vmatpush.msra.mxu0 %v3971
        %4065 = vmatpush.msra.mxu0 %v3969
        %4066 = vmatpush.msra.mxu0 %v3967
        %4067 = vmatpush.msra.mxu0 %v3965
        %4068 = vmatpush.msra.mxu0 %v3963
        %4069 = vmatpush.msra.mxu0 %v3961
        %4070 = vmatpush.msra.mxu0 %v3959
        %4071 = vmatpush.msra.mxu0 %v3957
        %4072 = vmatpush.msra.mxu0 %v3955
        %4073 = vmatpush.msra.mxu0 %v3953
        %4074 = vmatpush.msra.mxu0 %v3951
        %4075 = vmatmul.f32.gmra.mxu0 %v4015
        %v4076 = vpop.f32.mrf.mxu0
        %v4077 = vadd.f32 0.0, %v4076
        %4078 = vdwg.mxu0
        %4079 = vmatpush.msra.mxu0 %v4013
        %4080 = vmatpush.msra.mxu0 %v4011
        %4081 = vmatpush.msra.mxu0 %v4009
        %4082 = vmatpush.msra.mxu0 %v4007
        %4083 = vmatpush.msra.mxu0 %v4005
        %4084 = vmatpush.msra.mxu0 %v4003
        %4085 = vmatpush.msra.mxu0 %v4001
        %4086 = vmatpush.msra.mxu0 %v3999
        %4087 = vmatpush.msra.mxu0 %v3997
        %4088 = vmatpush.msra.mxu0 %v3995
        %4089 = vmatpush.msra.mxu0 %v3993
        %4090 = vmatpush.msra.mxu0 %v3991
        %4091 = vmatpush.msra.mxu0 %v3989
        %4092 = vmatpush.msra.mxu0 %v3987
        %4093 = vmatpush.msra.mxu0 %v3985
        %4094 = vmatpush.msra.mxu0 %v3983
        %4095 = vmatmul.f32.gmra.mxu0 %v4016
        %v4096 = vpop.f32.mrf.mxu0
        %v4097 = vadd.f32 %v4077, %v4096
        %4098 = vdwg.mxu0
        %v4101 = vrot.slane %v4097, 7
        %vm4102 = vcmask 1040384
        %v4103 = vsel %vm4102, %v4057, %v4101
        %4105 = vst.msk [vmem:[#allocation3] sm:$0x3] %vm3933, %v4103
        %v4106 = vsub.f32 %v4057, %v4015
        %v4107 = vsub.f32 %v4097, %v4016
        %v4108 = vand.u32 2147483647, %v4106
        %v4109 = vand.u32 2147483647, %v4107
        %v4110 = vsel %vm4102, %v4108, 0.0
        %v4111 = vsel %vm4102, %v4109, 0.0
        %v4112 = vadd.f32 %v4110, %v4111
        %4113 = vadd.xlane.f32.xlu0 %v4112
        %v4114 = vpop.xlane.xlu0 %4113
        %v4115 = vrot.slane %v4114, 4
        %v4116 = vadd.f32 %v4114, %v4115
        %v4117 = vrot.slane %v4116, 2
        %v4118 = vadd.f32 %v4116, %v4117
        %v4119 = vrot.slane %v4118, 1
        %v4120 = vadd.f32 %v4118, %v4119
        %s4121 = vtos %v4120
        %s4122 = sadd.f32 %s4121, 0.0
        %s4123 = scalar_lea.vmem [#allocation3], 2
        %v4124 = vld [vmem:[%s4123] sm:$0x3]
        %v4125 = vld [vmem:[%s3565] sm:$0xff]
        %v4126 = vld [vmem:[%s3565 + $0x8] sm:$0xff]
        %v4127 = vld [vmem:[%s3565 + $0x10] sm:$0xff]
        %v4128 = vld [vmem:[%s3565 + $0x18] sm:$0xff]
        %v4129 = vld [vmem:[%s3565 + $0x20] sm:$0xff]
        %v4130 = vld [vmem:[%s3565 + $0x28] sm:$0xff]
        %v4131 = vld [vmem:[%s3565 + $0x30] sm:$0xff]
        %v4132 = vld [vmem:[%s3565 + $0x38] sm:$0xff]
        %v4133 = vld [vmem:[%s3565 + $0x40] sm:$0xff]
        %v4134 = vld [vmem:[%s3565 + $0x48] sm:$0xff]
        %v4135 = vld [vmem:[%s3565 + $0x50] sm:$0xff]
        %v4136 = vld [vmem:[%s3565 + $0x58] sm:$0xff]
        %v4137 = vld [vmem:[%s3565 + $0x60] sm:$0xff]
        %v4138 = vld [vmem:[%s3565 + $0x68] sm:$0xff]
        %v4139 = vld [vmem:[%s3565 + $0x70] sm:$0xff]
        %v4140 = vld [vmem:[%s3565 + $0x78] sm:$0xff]
        %v4141 = vld [vmem:[%s3565 + $0x80] sm:$0xff]
        %v4142 = vld [vmem:[%s3565 + $0x88] sm:$0xff]
        %v4143 = vld [vmem:[%s3565 + $0x90] sm:$0xff]
        %v4144 = vld [vmem:[%s3565 + $0x98] sm:$0xff]
        %v4145 = vld [vmem:[%s3565 + $0xa0] sm:$0xff]
        %v4146 = vld [vmem:[%s3565 + $0xa8] sm:$0xff]
        %v4147 = vld [vmem:[%s3565 + $0xb0] sm:$0xff]
        %v4148 = vld [vmem:[%s3565 + $0xb8] sm:$0xff]
        %v4149 = vld [vmem:[%s3565 + $0xc0] sm:$0xff]
        %v4150 = vld [vmem:[%s3565 + $0xc8] sm:$0xff]
        %v4151 = vld [vmem:[%s3565 + $0xd0] sm:$0xff]
        %v4152 = vld [vmem:[%s3565 + $0xd8] sm:$0xff]
        %v4153 = vld [vmem:[%s3565 + $0xe0] sm:$0xff]
        %v4154 = vld [vmem:[%s3565 + $0xe8] sm:$0xff]
        %v4155 = vld [vmem:[%s3565 + $0xf0] sm:$0xff]
        %v4156 = vld [vmem:[%s3565 + $0xf8] sm:$0xff]
        %v4157 = vld [vmem:[%s3565 + $0x100] sm:$0xff]
        %v4158 = vld [vmem:[%s3565 + $0x108] sm:$0xff]
        %v4159 = vld [vmem:[%s3565 + $0x110] sm:$0xff]
        %v4160 = vld [vmem:[%s3565 + $0x118] sm:$0xff]
        %v4161 = vld [vmem:[%s3565 + $0x120] sm:$0xff]
        %v4162 = vld [vmem:[%s3565 + $0x128] sm:$0xff]
        %v4163 = vld [vmem:[%s3565 + $0x130] sm:$0xff]
        %v4164 = vld [vmem:[%s3565 + $0x138] sm:$0xff]
        %v4165 = vld [vmem:[%s3565 + $0x140] sm:$0xff]
        %v4166 = vld [vmem:[%s3565 + $0x148] sm:$0xff]
        %v4167 = vld [vmem:[%s3565 + $0x150] sm:$0xff]
        %v4168 = vld [vmem:[%s3565 + $0x158] sm:$0xff]
        %v4169 = vld [vmem:[%s3565 + $0x160] sm:$0xff]
        %v4170 = vld [vmem:[%s3565 + $0x168] sm:$0xff]
        %v4171 = vld [vmem:[%s3565 + $0x170] sm:$0xff]
        %v4172 = vld [vmem:[%s3565 + $0x178] sm:$0xff]
        %v4173 = vld [vmem:[%s3565 + $0x180] sm:$0xff]
        %v4174 = vld [vmem:[%s3565 + $0x188] sm:$0xff]
        %v4175 = vld [vmem:[%s3565 + $0x190] sm:$0xff]
        %v4176 = vld [vmem:[%s3565 + $0x198] sm:$0xff]
        %v4177 = vld [vmem:[%s3565 + $0x1a0] sm:$0xff]
        %v4178 = vld [vmem:[%s3565 + $0x1a8] sm:$0xff]
        %v4179 = vld [vmem:[%s3565 + $0x1b0] sm:$0xff]
        %v4180 = vld [vmem:[%s3565 + $0x1b8] sm:$0xff]
        %v4181 = vld [vmem:[%s3565 + $0x1c0] sm:$0xff]
        %v4182 = vld [vmem:[%s3565 + $0x1c8] sm:$0xff]
        %v4183 = vld [vmem:[%s3565 + $0x1d0] sm:$0xff]
        %v4184 = vld [vmem:[%s3565 + $0x1d8] sm:$0xff]
        %v4185 = vld [vmem:[%s3565 + $0x1e0] sm:$0xff]
        %v4186 = vld [vmem:[%s3565 + $0x1e8] sm:$0xff]
        %v4187 = vld [vmem:[%s3565 + $0x1f0] sm:$0xff]
        %v4188 = vld [vmem:[%s3565 + $0x1f8] sm:$0xff]
        %v4190 = vperm.slane %v4124, 0
        %v4191 = vperm.slane %v4124, 1
        %4194 = vmatpush.msra.mxu0 %v4155
        %4195 = vmatpush.msra.mxu0 %v4153
        %4196 = vmatpush.msra.mxu0 %v4151
        %4197 = vmatpush.msra.mxu0 %v4149
        %4198 = vmatpush.msra.mxu0 %v4147
        %4199 = vmatpush.msra.mxu0 %v4145
        %4200 = vmatpush.msra.mxu0 %v4143
        %4201 = vmatpush.msra.mxu0 %v4141
        %4202 = vmatpush.msra.mxu0 %v4139
        %4203 = vmatpush.msra.mxu0 %v4137
        %4204 = vmatpush.msra.mxu0 %v4135
        %4205 = vmatpush.msra.mxu0 %v4133
        %4206 = vmatpush.msra.mxu0 %v4131
        %4207 = vmatpush.msra.mxu0 %v4129
        %4208 = vmatpush.msra.mxu0 %v4127
        %4209 = vmatpush.msra.mxu0 %v4125
        %4210 = vmatmul.f32.gmra.mxu0 %v4190
        %v4211 = vpop.f32.mrf.mxu0
        %v4212 = vadd.f32 0.0, %v4211
        %4213 = vdwg.mxu0
        %4214 = vmatpush.msra.mxu0 %v4187
        %4215 = vmatpush.msra.mxu0 %v4185
        %4216 = vmatpush.msra.mxu0 %v4183
        %4217 = vmatpush.msra.mxu0 %v4181
        %4218 = vmatpush.msra.mxu0 %v4179
        %4219 = vmatpush.msra.mxu0 %v4177
        %4220 = vmatpush.msra.mxu0 %v4175
        %4221 = vmatpush.msra.mxu0 %v4173
        %4222 = vmatpush.msra.mxu0 %v4171
        %4223 = vmatpush.msra.mxu0 %v4169
        %4224 = vmatpush.msra.mxu0 %v4167
        %4225 = vmatpush.msra.mxu0 %v4165
        %4226 = vmatpush.msra.mxu0 %v4163
        %4227 = vmatpush.msra.mxu0 %v4161
        %4228 = vmatpush.msra.mxu0 %v4159
        %4229 = vmatpush.msra.mxu0 %v4157
        %4230 = vmatmul.f32.gmra.mxu0 %v4191
        %v4231 = vpop.f32.mrf.mxu0
        %v4232 = vadd.f32 %v4212, %v4231
        %4233 = vdwg.mxu0
        %4234 = vmatpush.msra.mxu0 %v4156
        %4235 = vmatpush.msra.mxu0 %v4154
        %4236 = vmatpush.msra.mxu0 %v4152
        %4237 = vmatpush.msra.mxu0 %v4150
        %4238 = vmatpush.msra.mxu0 %v4148
        %4239 = vmatpush.msra.mxu0 %v4146
        %4240 = vmatpush.msra.mxu0 %v4144
        %4241 = vmatpush.msra.mxu0 %v4142
        %4242 = vmatpush.msra.mxu0 %v4140
        %4243 = vmatpush.msra.mxu0 %v4138
        %4244 = vmatpush.msra.mxu0 %v4136
        %4245 = vmatpush.msra.mxu0 %v4134
        %4246 = vmatpush.msra.mxu0 %v4132
        %4247 = vmatpush.msra.mxu0 %v4130
        %4248 = vmatpush.msra.mxu0 %v4128
        %4249 = vmatpush.msra.mxu0 %v4126
        %4250 = vmatmul.f32.gmra.mxu0 %v4190
        %v4251 = vpop.f32.mrf.mxu0
        %v4252 = vadd.f32 0.0, %v4251
        %4253 = vdwg.mxu0
        %4254 = vmatpush.msra.mxu0 %v4188
        %4255 = vmatpush.msra.mxu0 %v4186
        %4256 = vmatpush.msra.mxu0 %v4184
        %4257 = vmatpush.msra.mxu0 %v4182
        %4258 = vmatpush.msra.mxu0 %v4180
        %4259 = vmatpush.msra.mxu0 %v4178
        %4260 = vmatpush.msra.mxu0 %v4176
        %4261 = vmatpush.msra.mxu0 %v4174
        %4262 = vmatpush.msra.mxu0 %v4172
        %4263 = vmatpush.msra.mxu0 %v4170
        %4264 = vmatpush.msra.mxu0 %v4168
        %4265 = vmatpush.msra.mxu0 %v4166
        %4266 = vmatpush.msra.mxu0 %v4164
        %4267 = vmatpush.msra.mxu0 %v4162
        %4268 = vmatpush.msra.mxu0 %v4160
        %4269 = vmatpush.msra.mxu0 %v4158
        %4270 = vmatmul.f32.gmra.mxu0 %v4191
        %v4271 = vpop.f32.mrf.mxu0
        %v4272 = vadd.f32 %v4252, %v4271
        %4273 = vdwg.mxu0
        %v4276 = vrot.slane %v4272, 7
        %v4277 = vsel %vm4102, %v4232, %v4276
        %4279 = vst.msk [vmem:[%s4123] sm:$0x3] %vm3933, %v4277
        %v4280 = vsub.f32 %v4232, %v4190
        %v4281 = vsub.f32 %v4272, %v4191
        %v4282 = vand.u32 2147483647, %v4280
        %v4283 = vand.u32 2147483647, %v4281
        %v4284 = vsel %vm4102, %v4282, 0.0
        %v4285 = vsel %vm4102, %v4283, 0.0
        %v4286 = vadd.f32 %v4284, %v4285
        %4287 = vadd.xlane.f32.xlu0 %v4286
        %v4288 = vpop.xlane.xlu0 %4287
        %v4289 = vrot.slane %v4288, 4
        %v4290 = vadd.f32 %v4288, %v4289
        %v4291 = vrot.slane %v4290, 2
        %v4292 = vadd.f32 %v4290, %v4291
        %v4293 = vrot.slane %v4292, 1
        %v4294 = vadd.f32 %v4292, %v4293
        %s4295 = vtos %v4294
        %s4296 = sadd.f32 %s4122, %s4295
        %s4297 = smul.f32 %s4296, 0.001953125
        %p4298 = scmp.lt.f32.partialorder %s4297, 0.0001
        %s4299 = scalar_select %p4298, 1, 0
        %4300 = sst [smem:[%s3936]] %s4299
      $region24: #{soft_proposal.1} parent=17 // pred_fallthru
        _
    $region18: #{soft_proposal.1} parent=1 // loop_footer
      %s3943 = sadd.s32 1, %s3939
    $region19: #{soft_proposal.1} parent=1 // loop_footer_branch
      %3938 = sbr.rel target = $region15
    $region20: #{soft_proposal.1} parent=1 // loop_exit
      _
    %v4301 = vld [vmem:[%s0] sm:$0xff]
    %v4302 = vld [vmem:[%s0 + $0x8] sm:$0xff]
    %v4303 = vld [vmem:[#allocation3] sm:$0x3]
    %v4305 = vperm.slane %v4303, 0
    %v4306 = vperm.slane %v4303, 1
    %v4309 = vmul.f32 %v4301, %v4305
    %v4310 = vmul.f32 %v4302, %v4306
    %4311 = vst [vmem:[%s2] sm:$0xff] %v4309
    %4312 = vst [vmem:[%s2 + $0x8] sm:$0xff] %v4310
    %v4313 = vld [vmem:[%s2010] sm:$0xff]
    %v4314 = vld [vmem:[%s2010 + $0x8] sm:$0xff]
    %s4315 = scalar_lea.vmem [#allocation3], 2
    %v4316 = vld [vmem:[%s4315] sm:$0x3]
    %v4318 = vperm.slane %v4316, 0
    %v4319 = vperm.slane %v4316, 1
    %v4322 = vmul.f32 %v4313, %v4318
    %v4323 = vmul.f32 %v4314, %v4319
    %s4324 = scalar_lea.vmem %s2, 16
    %4325 = vst [vmem:[%s4324] sm:$0xff] %v4322
    %4326 = vst [vmem:[%s4324 + $0x8] sm:$0xff] %v4323
    // Predicated region
    $region25: #{soft_proposal.1} parent=1 // pred_check
      _
    $region26: #{soft_proposal.1} parent=1 // pred_check_branch
      %4328 = sbr.rel (0) target = $region28
    $region27: #{soft_proposal.1} parent=1 // pred_region
      _
    $region28: #{soft_proposal.1} parent=1 // pred_fallthru
      _
    // Predicated region
    $region29: #{soft_proposal.1} parent=1 // pred_check
      _
    $region30: #{soft_proposal.1} parent=1 // pred_check_branch
      %4330 = sbr.rel (0) target = $region32
    $region31: #{soft_proposal.1} parent=1 // pred_region
      _
    $region32: #{soft_proposal.1} parent=1 // pred_fallthru
      _
    %4331 = vsyncpa [#allocation6], 1

</llo_original>
